<compile_context>
chip_gen: v6e
topology: v6e:2x2x1
jax: 0.10.0
libtpu: 0.0.40
codegen_flags: <defaults>
</compile_context>

<pallas_src>
import functools
import jax
import jax.numpy as jnp
from jax.experimental import pallas as pl
from jax.experimental.pallas import tpu as pltpu


def _round_up(x, m):
    return (x + m - 1) // m * m


# ----------------------------------------------------------------------------
# Tiled matmul + bias kernel:  (N, K) @ (K, V) + (1, V) -> (N, V)
# Used for both the hoisted x @ W_ih gate precompute and the vocab projection.
# bf16 operands, f32 MXU accumulation, f32 output.
# ----------------------------------------------------------------------------
def _linear_kernel(x_ref, w_ref, b_ref, o_ref):
    o_ref[...] = (
        jnp.dot(x_ref[...], w_ref[...], preferred_element_type=jnp.float32)
        + b_ref[...]
    ).astype(o_ref.dtype)


def linear_pallas(x, w_t, b):
    """x: (N, K); w_t: (K, V); b: (1, V).  N % 8 == 0, V % 128 == 0.
    Returns (N, V) float32."""
    N, K = x.shape
    V = w_t.shape[1]
    assert N % 8 == 0 and V % 128 == 0

    x = x.astype(jnp.bfloat16)
    w_t = w_t.astype(jnp.bfloat16)
    b = b.astype(jnp.float32)

    # Row tile (multiple of 8) and lane-dense vocab tile (multiple of 128).
    tn = min(N, 256)
    while N % tn:
        tn //= 2
    tv = min(V, 512)
    while V % tv:
        tv -= 128
    grid = (N // tn, V // tv)

    cost = pl.CostEstimate(
        flops=2 * N * K * V,
        transcendentals=0,
        bytes_accessed=N * K * 2 + K * V * 2 + V * 4 + N * V * 4,
    )
    return pl.pallas_call(
        _linear_kernel,
        out_shape=jax.ShapeDtypeStruct((N, V), jnp.float32),
        grid_spec=pltpu.PrefetchScalarGridSpec(
            num_scalar_prefetch=0,
            grid=grid,
            in_specs=[
                pl.BlockSpec((tn, K), lambda i, j: (i, 0)),
                pl.BlockSpec((K, tv), lambda i, j: (0, j)),
                pl.BlockSpec((1, tv), lambda i, j: (0, j)),
            ],
            out_specs=pl.BlockSpec((tn, tv), lambda i, j: (i, j)),
        ),
        compiler_params=pltpu.CompilerParams(
            dimension_semantics=("parallel", "parallel")),
        cost_estimate=cost,
    )(x, w_t, b)


# ----------------------------------------------------------------------------
# Fused LSTM recurrence: one grid step, fully-unrolled in-kernel time loop.
# gates_x already holds x @ W_ih + (b_ih + b_hh); only h @ W_hh remains on the
# serial path.  PyTorch gate order: i, f, g, o; each gate occupies its own
# 128-lane-aligned Hp-wide slab.
# ----------------------------------------------------------------------------
def _lstm_kernel(gx_ref, h0_ref, c0_ref, whh_ref, out_ref, *, hidden_pad, seq_len):
    Hp = hidden_pad
    h = h0_ref[...]                     # (Bp, Hp) f32 state
    c = c0_ref[...]                     # (Bp, Hp) f32 state
    for t in range(seq_len):            # static full unroll (T is small)
        gates = gx_ref[t] + jnp.dot(
            h.astype(jnp.bfloat16), whh_ref[...],
            preferred_element_type=jnp.float32)          # (Bp, 4Hp) f32
        i_g = jax.nn.sigmoid(gates[:, 0 * Hp:1 * Hp])
        f_g = jax.nn.sigmoid(gates[:, 1 * Hp:2 * Hp])
        g_g = jnp.tanh(gates[:, 2 * Hp:3 * Hp])
        o_g = jax.nn.sigmoid(gates[:, 3 * Hp:4 * Hp])
        c = f_g * c + i_g * g_g
        h = o_g * jnp.tanh(c)
        # batch-major output: (Bp, T, Hp), static slice store per step.
        out_ref[:, pl.ds(t, 1), :] = h[:, None, :].astype(out_ref.dtype)


def lstm_pallas(gates_x, h0, c0, w_hh_t):
    """gates_x: (T, Bp, 4Hp) f32; h0/c0: (Bp, Hp) f32; w_hh_t: (Hp, 4Hp) bf16.
    Returns (Bp, T, Hp) bf16 hidden states, batch-major."""
    T, Bp, G = gates_x.shape
    Hp = h0.shape[1]
    assert G == 4 * Hp and Bp % 8 == 0 and Hp % 128 == 0

    kernel = functools.partial(_lstm_kernel, hidden_pad=Hp, seq_len=T)
    cost = pl.CostEstimate(
        flops=T * (2 * Bp * Hp * G + 20 * Bp * Hp),
        transcendentals=5 * T * Bp * Hp,
        bytes_accessed=(T * Bp * G * 4 + Hp * G * 2
                        + 2 * Bp * Hp * 4 + T * Bp * Hp * 2),
    )
    return pl.pallas_call(
        kernel,
        out_shape=jax.ShapeDtypeStruct((Bp, T, Hp), jnp.bfloat16),
        grid_spec=pltpu.PrefetchScalarGridSpec(
            num_scalar_prefetch=0,
            grid=(1,),
            in_specs=[
                pl.BlockSpec((T, Bp, G), lambda i: (0, 0, 0)),
                pl.BlockSpec((Bp, Hp), lambda i: (0, 0)),
                pl.BlockSpec((Bp, Hp), lambda i: (0, 0)),
                pl.BlockSpec((Hp, G), lambda i: (0, 0)),
            ],
            out_specs=pl.BlockSpec((Bp, T, Hp), lambda i: (0, 0, 0)),
        ),
        compiler_params=pltpu.CompilerParams(
            dimension_semantics=("arbitrary",)),   # recurrence: must stay serial
        cost_estimate=cost,
    )(gates_x, h0, c0, w_hh_t)


# ----------------------------------------------------------------------------
# Weight padding helpers (gate blocks individually padded so each gate lands
# in its own 128-lane-aligned slab).
# ----------------------------------------------------------------------------
def _pad_gate_mat(w_t, in_dim_pad, H, Hp):
    """w_t: (In, 4H), gate order [i,f,g,o] in H-wide blocks -> (in_dim_pad, 4*Hp)."""
    in_dim = w_t.shape[0]
    w4 = w_t.reshape(in_dim, 4, H)
    w4 = jnp.pad(w4, ((0, in_dim_pad - in_dim), (0, 0), (0, Hp - H)))
    return w4.reshape(in_dim_pad, 4 * Hp)


def _pad_gate_vec(bvec, H, Hp):
    b4 = bvec.reshape(4, H)
    b4 = jnp.pad(b4, ((0, 0), (0, Hp - H)))
    return b4.reshape(4 * Hp)


# ----------------------------------------------------------------------------
# DecoderRNN forward wrapper (glue in plain JAX, hot paths in Pallas)
# ----------------------------------------------------------------------------
def decoder_rnn_forward(params, features, captions, init_key):
    """features: (B, E) float32; captions: (B, L) int32.  Returns (B, L, V)."""
    B, E = features.shape
    H = params["w_hh"].shape[1]
    V = params["fc_w"].shape[0]

    # captions[:, :-1]
    captions = captions[:, :-1]
    T = captions.shape[1] + 1

    Bp = _round_up(B, 8)      # sublane-aligned batch
    Ep = _round_up(E, 128)    # lane-aligned embed dim
    Hp = _round_up(H, 128)    # lane-aligned hidden dim (gate slices aligned)
    Vp = _round_up(V, 128)    # lane-aligned vocab dim

    # init_hidden: torch.randn((1, B, H)) for h and c (deterministic via key).
    kh, kc = jax.random.split(init_key)
    h0 = jnp.zeros((Bp, Hp), jnp.float32).at[:B, :H].set(
        jax.random.normal(kh, (B, H), jnp.float32))
    c0 = jnp.zeros((Bp, Hp), jnp.float32).at[:B, :H].set(
        jax.random.normal(kc, (B, H), jnp.float32))

    # Embedding lookup (gather) + concat of the image feature — plain JAX glue.
    embeds = params["embedding"][captions]                        # (B, T-1, E)
    full = jnp.concatenate([features[:, None, :], embeds], axis=1)  # (B, T, E)
    x = jnp.zeros((Bp, T, Ep), jnp.bfloat16).at[:B, :, :E].set(
        full.astype(jnp.bfloat16))
    x_tm = jnp.transpose(x, (1, 0, 2)).reshape(T * Bp, Ep)        # tiny transpose

    # Padded, gate-block-aligned LSTM weights; biases folded (b_ih + b_hh).
    w_ih_t = _pad_gate_mat(params["w_ih"].T, Ep, H, Hp)                        # (Ep, 4Hp)
    w_hh_t = _pad_gate_mat(params["w_hh"].T, Hp, H, Hp).astype(jnp.bfloat16)   # (Hp, 4Hp)
    bias = _pad_gate_vec(params["b_ih"] + params["b_hh"], H, Hp)[None, :]      # (1, 4Hp)

    # (1) hoisted input-path matmul: one big (T*Bp, Ep) @ (Ep, 4Hp) + bias.
    gates_x = linear_pallas(x_tm, w_ih_t, bias).reshape(T, Bp, 4 * Hp)

    # (2) fused recurrence: only h @ W_hh inside the time loop.
    h_seq = lstm_pallas(gates_x, h0, c0, w_hh_t)                  # (Bp, T, Hp) bf16

    # (3) vocab projection on batch-major rows -> logits already (B, T, V).
    fc_w_t = jnp.zeros((Hp, Vp), jnp.float32).at[:H, :V].set(params["fc_w"].T)
    fc_b = jnp.zeros((1, Vp), jnp.float32).at[0, :V].set(params["fc_b"])
    logits = linear_pallas(h_seq.reshape(Bp * T, Hp), fc_w_t, fc_b)  # (Bp*T, Vp)
    return logits.reshape(Bp, T, Vp)[:B, :, :V]


def init_params(key, embed_size, hidden_size, vocab_size):
    ks = jax.random.split(key, 7)
    s = 0.1
    return {
        "embedding": s * jax.random.normal(ks[0], (vocab_size, embed_size), jnp.float32),
        "w_ih": s * jax.random.normal(ks[1], (4 * hidden_size, embed_size), jnp.float32),
        "w_hh": s * jax.random.normal(ks[2], (4 * hidden_size, hidden_size), jnp.float32),
        "b_ih": s * jax.random.normal(ks[3], (4 * hidden_size,), jnp.float32),
        "b_hh": s * jax.random.normal(ks[4], (4 * hidden_size,), jnp.float32),
        "fc_w": s * jax.random.normal(ks[5], (vocab_size, hidden_size), jnp.float32),
        "fc_b": s * jax.random.normal(ks[6], (vocab_size,), jnp.float32),
    }


# TODO(synk): sample() greedy-decode loop is not implemented (forward only).

if __name__ == "__main__":
    # Small shapes consistent with the module.
    batch = 2
    embed_size = 32
    hidden_size = 32
    vocab_size = 128
    caption_len = 8          # after [:, :-1] -> 7; with image feature -> T = 8

    root = jax.random.PRNGKey(0)
    k_params, k_feat, k_cap, k_hidden = jax.random.split(root, 4)

    params = init_params(k_params, embed_size, hidden_size, vocab_size)
    features = jax.random.normal(k_feat, (batch, embed_size), jnp.float32)
    captions = jax.random.randint(k_cap, (batch, caption_len), 0, vocab_size, jnp.int32)

    fwd = jax.jit(decoder_rnn_forward)
    out = fwd(params, features, captions, k_hidden)
    out = jax.block_until_ready(out)

    assert out.shape == (batch, caption_len, vocab_size), out.shape
    assert bool(jnp.all(jnp.isfinite(out)))
    print("KERNEL_OK")
</pallas_src>

<mosaic_0001>
module attributes {stable_mosaic.version = 11 : i64} {
  func.func @_linear_kernel(%arg0: i32, %arg1: i32, %arg2: memref<64x128xbf16, #tpu.memory_space<vmem>>, %arg3: memref<128x512xbf16, #tpu.memory_space<vmem>>, %arg4: memref<1x512xf32, #tpu.memory_space<vmem>>, %arg5: memref<64x512xf32, #tpu.memory_space<vmem>>) attributes {dimension_semantics = [#tpu.dimension_semantics<parallel>, #tpu.dimension_semantics<parallel>], iteration_bounds = array<i64: 1, 1>, scalar_prefetch = 0 : i64, scratch_operands = 0 : i64, tpu.core_type = #tpu.core_type<tc>, window_params = [{transform_indices = @transform_0, window_bounds = array<i64: 64, 128>}, {transform_indices = @transform_1, window_bounds = array<i64: 128, 512>}, {transform_indices = @transform_2, window_bounds = array<i64: 1, 512>}, {transform_indices = @transform_3, window_bounds = array<i64: 64, 512>}]} {
    %c0 = arith.constant 0 : index
    %c0_0 = arith.constant 0 : index
    %0 = vector.load %arg2[%c0, %c0_0] : memref<64x128xbf16, #tpu.memory_space<vmem>>, vector<64x128xbf16>
    %c0_1 = arith.constant 0 : index
    %c0_2 = arith.constant 0 : index
    %1 = vector.load %arg3[%c0_1, %c0_2] : memref<128x512xbf16, #tpu.memory_space<vmem>>, vector<128x512xbf16>
    %cst = arith.constant dense<0.000000e+00> : vector<64x512xf32>
    %2 = tpu.matmul %0, %1, %cst {dimension_numbers = #tpu.dot_dimension_numbers<[1], [0], [0], [1], [0, 0, 1, 1], [], []>} : vector<64x128xbf16>, vector<128x512xbf16>, vector<64x512xf32> -> vector<64x512xf32>
    %c0_3 = arith.constant 0 : index
    %c0_4 = arith.constant 0 : index
    %3 = vector.load %arg4[%c0_3, %c0_4] : memref<1x512xf32, #tpu.memory_space<vmem>>, vector<1x512xf32>
    %4 = vector.broadcast %3 : vector<1x512xf32> to vector<64x512xf32>
    %5 = arith.addf %2, %4 : vector<64x512xf32>
    %c0_5 = arith.constant 0 : index
    %c0_6 = arith.constant 0 : index
    %6 = vector.load %arg5[%c0_5, %c0_6] : memref<64x512xf32, #tpu.memory_space<vmem>>, vector<64x512xf32>
    tpu.vector_store %arg5[%c0_5, %c0_6], %5 {strides = array<i32>} : memref<64x512xf32, #tpu.memory_space<vmem>>, vector<64x512xf32>,
    return
  }
  func.func @transform_0(%arg0: i32, %arg1: i32) -> (i32, i32) {
    %c0_i32 = arith.constant 0 : i32
    %c0_i32_0 = arith.constant 0 : i32
    return %arg0, %c0_i32 : i32, i32
  }
  func.func @transform_1(%arg0: i32, %arg1: i32) -> (i32, i32) {
    %c0_i32 = arith.constant 0 : i32
    %c0_i32_0 = arith.constant 0 : i32
    return %c0_i32, %arg1 : i32, i32
  }
  func.func @transform_2(%arg0: i32, %arg1: i32) -> (i32, i32) {
    %c0_i32 = arith.constant 0 : i32
    %c0_i32_0 = arith.constant 0 : i32
    return %c0_i32, %arg1 : i32, i32
  }
  func.func @transform_3(%arg0: i32, %arg1: i32) -> (i32, i32) {
    %c0_i32 = arith.constant 0 : i32
    return %arg0, %arg1 : i32, i32
  }
}

module attributes {stable_mosaic.version = 11 : i64} {
  func.func @_linear_kernel(%arg0: i32, %arg1: i32, %arg2: memref<64x128xbf16, #tpu.memory_space<vmem>>, %arg3: memref<128x128xbf16, #tpu.memory_space<vmem>>, %arg4: memref<1x128xf32, #tpu.memory_space<vmem>>, %arg5: memref<64x128xf32, #tpu.memory_space<vmem>>) attributes {dimension_semantics = [#tpu.dimension_semantics<parallel>, #tpu.dimension_semantics<parallel>], iteration_bounds = array<i64: 1, 1>, scalar_prefetch = 0 : i64, scratch_operands = 0 : i64, tpu.core_type = #tpu.core_type<tc>, window_params = [{transform_indices = @transform_0, window_bounds = array<i64: 64, 128>}, {transform_indices = @transform_1, window_bounds = array<i64: 128, 128>}, {transform_indices = @transform_2, window_bounds = array<i64: 1, 128>}, {transform_indices = @transform_3, window_bounds = array<i64: 64, 128>}]} {
    %c0 = arith.constant 0 : index
    %c0_0 = arith.constant 0 : index
    %0 = vector.load %arg2[%c0, %c0_0] : memref<64x128xbf16, #tpu.memory_space<vmem>>, vector<64x128xbf16>
    %c0_1 = arith.constant 0 : index
    %c0_2 = arith.constant 0 : index
    %1 = vector.load %arg3[%c0_1, %c0_2] : memref<128x128xbf16, #tpu.memory_space<vmem>>, vector<128x128xbf16>
    %cst = arith.constant dense<0.000000e+00> : vector<64x128xf32>
    %2 = tpu.matmul %0, %1, %cst {dimension_numbers = #tpu.dot_dimension_numbers<[1], [0], [0], [1], [0, 0, 1, 1], [], []>} : vector<64x128xbf16>, vector<128x128xbf16>, vector<64x128xf32> -> vector<64x128xf32>
    %c0_3 = arith.constant 0 : index
    %c0_4 = arith.constant 0 : index
    %3 = vector.load %arg4[%c0_3, %c0_4] : memref<1x128xf32, #tpu.memory_space<vmem>>, vector<1x128xf32>
    %4 = vector.broadcast %3 : vector<1x128xf32> to vector<64x128xf32>
    %5 = arith.addf %2, %4 : vector<64x128xf32>
    %c0_5 = arith.constant 0 : index
    %c0_6 = arith.constant 0 : index
    %6 = vector.load %arg5[%c0_5, %c0_6] : memref<64x128xf32, #tpu.memory_space<vmem>>, vector<64x128xf32>
    tpu.vector_store %arg5[%c0_5, %c0_6], %5 {strides = array<i32>} : memref<64x128xf32, #tpu.memory_space<vmem>>, vector<64x128xf32>,
    return
  }
  func.func @transform_0(%arg0: i32, %arg1: i32) -> (i32, i32) {
    %c0_i32 = arith.constant 0 : i32
    %c0_i32_0 = arith.constant 0 : i32
    return %arg0, %c0_i32 : i32, i32
  }
  func.func @transform_1(%arg0: i32, %arg1: i32) -> (i32, i32) {
    %c0_i32 = arith.constant 0 : i32
    %c0_i32_0 = arith.constant 0 : i32
    return %c0_i32, %arg1 : i32, i32
  }
  func.func @transform_2(%arg0: i32, %arg1: i32) -> (i32, i32) {
    %c0_i32 = arith.constant 0 : i32
    %c0_i32_0 = arith.constant 0 : i32
    return %c0_i32, %arg1 : i32, i32
  }
  func.func @transform_3(%arg0: i32, %arg1: i32) -> (i32, i32) {
    %c0_i32 = arith.constant 0 : i32
    return %arg0, %arg1 : i32, i32
  }
}

module attributes {stable_mosaic.version = 11 : i64} {
  func.func @_lstm_kernel(%arg0: i32, %arg1: memref<8x8x512xf32, #tpu.memory_space<vmem>>, %arg2: memref<8x128xf32, #tpu.memory_space<vmem>>, %arg3: memref<8x128xf32, #tpu.memory_space<vmem>>, %arg4: memref<128x512xbf16, #tpu.memory_space<vmem>>, %arg5: memref<8x8x128xbf16, #tpu.memory_space<vmem>>) attributes {dimension_semantics = [#tpu.dimension_semantics<arbitrary>], iteration_bounds = array<i64: 1>, scalar_prefetch = 0 : i64, scratch_operands = 0 : i64, tpu.core_type = #tpu.core_type<tc>, window_params = [{pipeline_mode = #tpu.pipeline_mode<synchronous>, transform_indices = @transform_0, window_bounds = array<i64: 8, 8, 512>}, {pipeline_mode = #tpu.pipeline_mode<synchronous>, transform_indices = @transform_1, window_bounds = array<i64: 8, 128>}, {pipeline_mode = #tpu.pipeline_mode<synchronous>, transform_indices = @transform_2, window_bounds = array<i64: 8, 128>}, {pipeline_mode = #tpu.pipeline_mode<synchronous>, transform_indices = @transform_3, window_bounds = array<i64: 128, 512>}, {pipeline_mode = #tpu.pipeline_mode<synchronous>, transform_indices = @transform_4, window_bounds = array<i64: 8, 8, 128>}]} {
    %c0 = arith.constant 0 : index
    %c0_0 = arith.constant 0 : index
    %0 = vector.load %arg2[%c0, %c0_0] : memref<8x128xf32, #tpu.memory_space<vmem>>, vector<8x128xf32>
    %c0_1 = arith.constant 0 : index
    %c0_2 = arith.constant 0 : index
    %1 = vector.load %arg3[%c0_1, %c0_2] : memref<8x128xf32, #tpu.memory_space<vmem>>, vector<8x128xf32>
    %c0_3 = arith.constant 0 : index
    %c0_4 = arith.constant 0 : index
    %c0_5 = arith.constant 0 : index
    %2 = vector.load %arg1[%c0_3, %c0_4, %c0_5] : memref<8x8x512xf32, #tpu.memory_space<vmem>>, vector<1x8x512xf32>
    %3 = vector.shape_cast %2 : vector<1x8x512xf32> to vector<8x512xf32>
    %4 = arith.truncf %0 : vector<8x128xf32> to vector<8x128xbf16>
    %c0_6 = arith.constant 0 : index
    %c0_7 = arith.constant 0 : index
    %5 = vector.load %arg4[%c0_6, %c0_7] : memref<128x512xbf16, #tpu.memory_space<vmem>>, vector<128x512xbf16>
    %cst = arith.constant dense<0.000000e+00> : vector<8x512xf32>
    %6 = tpu.matmul %4, %5, %cst {dimension_numbers = #tpu.dot_dimension_numbers<[1], [0], [0], [1], [0, 0, 1, 1], [], []>} : vector<8x128xbf16>, vector<128x512xbf16>, vector<8x512xf32> -> vector<8x512xf32>
    %7 = arith.addf %3, %6 : vector<8x512xf32>
    %8 = vector.extract_strided_slice %7 {offsets = [0, 0], sizes = [8, 128], strides = [1, 1]} : vector<8x512xf32> to vector<8x128xf32>
    %9 = arith.negf %8 : vector<8x128xf32>
    %10 = math.exp %9 : vector<8x128xf32>
    %cst_8 = arith.constant 1.000000e+00 : f32
    %11 = vector.broadcast %cst_8 : f32 to vector<8x128xf32>
    %12 = arith.addf %11, %10 : vector<8x128xf32>
    %13 = arith.divf %11, %12 : vector<8x128xf32>
    %14 = vector.extract_strided_slice %7 {offsets = [0, 128], sizes = [8, 128], strides = [1, 1]} : vector<8x512xf32> to vector<8x128xf32>
    %15 = arith.negf %14 : vector<8x128xf32>
    %16 = math.exp %15 : vector<8x128xf32>
    %cst_9 = arith.constant 1.000000e+00 : f32
    %17 = vector.broadcast %cst_9 : f32 to vector<8x128xf32>
    %18 = arith.addf %17, %16 : vector<8x128xf32>
    %19 = arith.divf %17, %18 : vector<8x128xf32>
    %20 = vector.extract_strided_slice %7 {offsets = [0, 256], sizes = [8, 128], strides = [1, 1]} : vector<8x512xf32> to vector<8x128xf32>
    %21 = math.tanh %20 : vector<8x128xf32>
    %22 = vector.extract_strided_slice %7 {offsets = [0, 384], sizes = [8, 128], strides = [1, 1]} : vector<8x512xf32> to vector<8x128xf32>
    %23 = arith.negf %22 : vector<8x128xf32>
    %24 = math.exp %23 : vector<8x128xf32>
    %cst_10 = arith.constant 1.000000e+00 : f32
    %25 = vector.broadcast %cst_10 : f32 to vector<8x128xf32>
    %26 = arith.addf %25, %24 : vector<8x128xf32>
    %27 = arith.divf %25, %26 : vector<8x128xf32>
    %28 = arith.mulf %19, %1 : vector<8x128xf32>
    %29 = arith.mulf %13, %21 : vector<8x128xf32>
    %30 = arith.addf %28, %29 : vector<8x128xf32>
    %31 = math.tanh %30 : vector<8x128xf32>
    %32 = arith.mulf %27, %31 : vector<8x128xf32>
    %33 = vector.shape_cast %32 : vector<8x128xf32> to vector<8x1x128xf32>
    %34 = arith.truncf %33 : vector<8x1x128xf32> to vector<8x1x128xbf16>
    %c0_11 = arith.constant 0 : index
    %c0_12 = arith.constant 0 : index
    %c0_13 = arith.constant 0 : index
    %35 = vector.load %arg5[%c0_11, %c0_12, %c0_13] : memref<8x8x128xbf16, #tpu.memory_space<vmem>>, vector<8x1x128xbf16>
    tpu.vector_store %arg5[%c0_11, %c0_12, %c0_13], %34 {strides = array<i32>} : memref<8x8x128xbf16, #tpu.memory_space<vmem>>, vector<8x1x128xbf16>,
    %c1 = arith.constant 1 : index
    %c0_14 = arith.constant 0 : index
    %c0_15 = arith.constant 0 : index
    %36 = vector.load %arg1[%c1, %c0_14, %c0_15] : memref<8x8x512xf32, #tpu.memory_space<vmem>>, vector<1x8x512xf32>
    %37 = vector.shape_cast %36 : vector<1x8x512xf32> to vector<8x512xf32>
    %38 = arith.truncf %32 : vector<8x128xf32> to vector<8x128xbf16>
    %c0_16 = arith.constant 0 : index
    %c0_17 = arith.constant 0 : index
    %39 = vector.load %arg4[%c0_16, %c0_17] : memref<128x512xbf16, #tpu.memory_space<vmem>>, vector<128x512xbf16>
    %cst_18 = arith.constant dense<0.000000e+00> : vector<8x512xf32>
    %40 = tpu.matmul %38, %39, %cst_18 {dimension_numbers = #tpu.dot_dimension_numbers<[1], [0], [0], [1], [0, 0, 1, 1], [], []>} : vector<8x128xbf16>, vector<128x512xbf16>, vector<8x512xf32> -> vector<8x512xf32>
    %41 = arith.addf %37, %40 : vector<8x512xf32>
    %42 = vector.extract_strided_slice %41 {offsets = [0, 0], sizes = [8, 128], strides = [1, 1]} : vector<8x512xf32> to vector<8x128xf32>
    %43 = arith.negf %42 : vector<8x128xf32>
    %44 = math.exp %43 : vector<8x128xf32>
    %cst_19 = arith.constant 1.000000e+00 : f32
    %45 = vector.broadcast %cst_19 : f32 to vector<8x128xf32>
    %46 = arith.addf %45, %44 : vector<8x128xf32>
    %47 = arith.divf %45, %46 : vector<8x128xf32>
    %48 = vector.extract_strided_slice %41 {offsets = [0, 128], sizes = [8, 128], strides = [1, 1]} : vector<8x512xf32> to vector<8x128xf32>
    %49 = arith.negf %48 : vector<8x128xf32>
    %50 = math.exp %49 : vector<8x128xf32>
    %cst_20 = arith.constant 1.000000e+00 : f32
    %51 = vector.broadcast %cst_20 : f32 to vector<8x128xf32>
    %52 = arith.addf %51, %50 : vector<8x128xf32>
    %53 = arith.divf %51, %52 : vector<8x128xf32>
    %54 = vector.extract_strided_slice %41 {offsets = [0, 256], sizes = [8, 128], strides = [1, 1]} : vector<8x512xf32> to vector<8x128xf32>
    %55 = math.tanh %54 : vector<8x128xf32>
    %56 = vector.extract_strided_slice %41 {offsets = [0, 384], sizes = [8, 128], strides = [1, 1]} : vector<8x512xf32> to vector<8x128xf32>
    %57 = arith.negf %56 : vector<8x128xf32>
    %58 = math.exp %57 : vector<8x128xf32>
    %cst_21 = arith.constant 1.000000e+00 : f32
    %59 = vector.broadcast %cst_21 : f32 to vector<8x128xf32>
    %60 = arith.addf %59, %58 : vector<8x128xf32>
    %61 = arith.divf %59, %60 : vector<8x128xf32>
    %62 = arith.mulf %53, %30 : vector<8x128xf32>
    %63 = arith.mulf %47, %55 : vector<8x128xf32>
    %64 = arith.addf %62, %63 : vector<8x128xf32>
    %65 = math.tanh %64 : vector<8x128xf32>
    %66 = arith.mulf %61, %65 : vector<8x128xf32>
    %67 = vector.shape_cast %66 : vector<8x128xf32> to vector<8x1x128xf32>
    %68 = arith.truncf %67 : vector<8x1x128xf32> to vector<8x1x128xbf16>
    %c0_22 = arith.constant 0 : index
    %c1_23 = arith.constant 1 : index
    %c0_24 = arith.constant 0 : index
    %69 = vector.load %arg5[%c0_22, %c1_23, %c0_24] : memref<8x8x128xbf16, #tpu.memory_space<vmem>>, vector<8x1x128xbf16>
    tpu.vector_store %arg5[%c0_22, %c1_23, %c0_24], %68 {strides = array<i32>} : memref<8x8x128xbf16, #tpu.memory_space<vmem>>, vector<8x1x128xbf16>,
    %c2 = arith.constant 2 : index
    %c0_25 = arith.constant 0 : index
    %c0_26 = arith.constant 0 : index
    %70 = vector.load %arg1[%c2, %c0_25, %c0_26] : memref<8x8x512xf32, #tpu.memory_space<vmem>>, vector<1x8x512xf32>
    %71 = vector.shape_cast %70 : vector<1x8x512xf32> to vector<8x512xf32>
    %72 = arith.truncf %66 : vector<8x128xf32> to vector<8x128xbf16>
    %c0_27 = arith.constant 0 : index
    %c0_28 = arith.constant 0 : index
    %73 = vector.load %arg4[%c0_27, %c0_28] : memref<128x512xbf16, #tpu.memory_space<vmem>>, vector<128x512xbf16>
    %cst_29 = arith.constant dense<0.000000e+00> : vector<8x512xf32>
    %74 = tpu.matmul %72, %73, %cst_29 {dimension_numbers = #tpu.dot_dimension_numbers<[1], [0], [0], [1], [0, 0, 1, 1], [], []>} : vector<8x128xbf16>, vector<128x512xbf16>, vector<8x512xf32> -> vector<8x512xf32>
    %75 = arith.addf %71, %74 : vector<8x512xf32>
    %76 = vector.extract_strided_slice %75 {offsets = [0, 0], sizes = [8, 128], strides = [1, 1]} : vector<8x512xf32> to vector<8x128xf32>
    %77 = arith.negf %76 : vector<8x128xf32>
    %78 = math.exp %77 : vector<8x128xf32>
    %cst_30 = arith.constant 1.000000e+00 : f32
    %79 = vector.broadcast %cst_30 : f32 to vector<8x128xf32>
    %80 = arith.addf %79, %78 : vector<8x128xf32>
    %81 = arith.divf %79, %80 : vector<8x128xf32>
    %82 = vector.extract_strided_slice %75 {offsets = [0, 128], sizes = [8, 128], strides = [1, 1]} : vector<8x512xf32> to vector<8x128xf32>
    %83 = arith.negf %82 : vector<8x128xf32>
    %84 = math.exp %83 : vector<8x128xf32>
    %cst_31 = arith.constant 1.000000e+00 : f32
    %85 = vector.broadcast %cst_31 : f32 to vector<8x128xf32>
    %86 = arith.addf %85, %84 : vector<8x128xf32>
    %87 = arith.divf %85, %86 : vector<8x128xf32>
    %88 = vector.extract_strided_slice %75 {offsets = [0, 256], sizes = [8, 128], strides = [1, 1]} : vector<8x512xf32> to vector<8x128xf32>
    %89 = math.tanh %88 : vector<8x128xf32>
    %90 = vector.extract_strided_slice %75 {offsets = [0, 384], sizes = [8, 128], strides = [1, 1]} : vector<8x512xf32> to vector<8x128xf32>
    %91 = arith.negf %90 : vector<8x128xf32>
    %92 = math.exp %91 : vector<8x128xf32>
    %cst_32 = arith.constant 1.000000e+00 : f32
    %93 = vector.broadcast %cst_32 : f32 to vector<8x128xf32>
    %94 = arith.addf %93, %92 : vector<8x128xf32>
    %95 = arith.divf %93, %94 : vector<8x128xf32>
    %96 = arith.mulf %87, %64 : vector<8x128xf32>
    %97 = arith.mulf %81, %89 : vector<8x128xf32>
    %98 = arith.addf %96, %97 : vector<8x128xf32>
    %99 = math.tanh %98 : vector<8x128xf32>
    %100 = arith.mulf %95, %99 : vector<8x128xf32>
    %101 = vector.shape_cast %100 : vector<8x128xf32> to vector<8x1x128xf32>
    %102 = arith.truncf %101 : vector<8x1x128xf32> to vector<8x1x128xbf16>
    %c0_33 = arith.constant 0 : index
    %c2_34 = arith.constant 2 : index
    %c0_35 = arith.constant 0 : index
    %103 = vector.load %arg5[%c0_33, %c2_34, %c0_35] : memref<8x8x128xbf16, #tpu.memory_space<vmem>>, vector<8x1x128xbf16>
    tpu.vector_store %arg5[%c0_33, %c2_34, %c0_35], %102 {strides = array<i32>} : memref<8x8x128xbf16, #tpu.memory_space<vmem>>, vector<8x1x128xbf16>,
    %c3 = arith.constant 3 : index
    %c0_36 = arith.constant 0 : index
    %c0_37 = arith.constant 0 : index
    %104 = vector.load %arg1[%c3, %c0_36, %c0_37] : memref<8x8x512xf32, #tpu.memory_space<vmem>>, vector<1x8x512xf32>
    %105 = vector.shape_cast %104 : vector<1x8x512xf32> to vector<8x512xf32>
    %106 = arith.truncf %100 : vector<8x128xf32> to vector<8x128xbf16>
    %c0_38 = arith.constant 0 : index
    %c0_39 = arith.constant 0 : index
    %107 = vector.load %arg4[%c0_38, %c0_39] : memref<128x512xbf16, #tpu.memory_space<vmem>>, vector<128x512xbf16>
    %cst_40 = arith.constant dense<0.000000e+00> : vector<8x512xf32>
    %108 = tpu.matmul %106, %107, %cst_40 {dimension_numbers = #tpu.dot_dimension_numbers<[1], [0], [0], [1], [0, 0, 1, 1], [], []>} : vector<8x128xbf16>, vector<128x512xbf16>, vector<8x512xf32> -> vector<8x512xf32>
    %109 = arith.addf %105, %108 : vector<8x512xf32>
    %110 = vector.extract_strided_slice %109 {offsets = [0, 0], sizes = [8, 128], strides = [1, 1]} : vector<8x512xf32> to vector<8x128xf32>
    %111 = arith.negf %110 : vector<8x128xf32>
    %112 = math.exp %111 : vector<8x128xf32>
    %cst_41 = arith.constant 1.000000e+00 : f32
    %113 = vector.broadcast %cst_41 : f32 to vector<8x128xf32>
    %114 = arith.addf %113, %112 : vector<8x128xf32>
    %115 = arith.divf %113, %114 : vector<8x128xf32>
    %116 = vector.extract_strided_slice %109 {offsets = [0, 128], sizes = [8, 128], strides = [1, 1]} : vector<8x512xf32> to vector<8x128xf32>
    %117 = arith.negf %116 : vector<8x128xf32>
    %118 = math.exp %117 : vector<8x128xf32>
    %cst_42 = arith.constant 1.000000e+00 : f32
    %119 = vector.broadcast %cst_42 : f32 to vector<8x128xf32>
    %120 = arith.addf %119, %118 : vector<8x128xf32>
    %121 = arith.divf %119, %120 : vector<8x128xf32>
    %122 = vector.extract_strided_slice %109 {offsets = [0, 256], sizes = [8, 128], strides = [1, 1]} : vector<8x512xf32> to vector<8x128xf32>
    %123 = math.tanh %122 : vector<8x128xf32>
    %124 = vector.extract_strided_slice %109 {offsets = [0, 384], sizes = [8, 128], strides = [1, 1]} : vector<8x512xf32> to vector<8x128xf32>
    %125 = arith.negf %124 : vector<8x128xf32>
    %126 = math.exp %125 : vector<8x128xf32>
    %cst_43 = arith.constant 1.000000e+00 : f32
    %127 = vector.broadcast %cst_43 : f32 to vector<8x128xf32>
    %128 = arith.addf %127, %126 : vector<8x128xf32>
    %129 = arith.divf %127, %128 : vector<8x128xf32>
    %130 = arith.mulf %121, %98 : vector<8x128xf32>
    %131 = arith.mulf %115, %123 : vector<8x128xf32>
    %132 = arith.addf %130, %131 : vector<8x128xf32>
    %133 = math.tanh %132 : vector<8x128xf32>
    %134 = arith.mulf %129, %133 : vector<8x128xf32>
    %135 = vector.shape_cast %134 : vector<8x128xf32> to vector<8x1x128xf32>
    %136 = arith.truncf %135 : vector<8x1x128xf32> to vector<8x1x128xbf16>
    %c0_44 = arith.constant 0 : index
    %c3_45 = arith.constant 3 : index
    %c0_46 = arith.constant 0 : index
    %137 = vector.load %arg5[%c0_44, %c3_45, %c0_46] : memref<8x8x128xbf16, #tpu.memory_space<vmem>>, vector<8x1x128xbf16>
    tpu.vector_store %arg5[%c0_44, %c3_45, %c0_46], %136 {strides = array<i32>} : memref<8x8x128xbf16, #tpu.memory_space<vmem>>, vector<8x1x128xbf16>,
    %c4 = arith.constant 4 : index
    %c0_47 = arith.constant 0 : index
    %c0_48 = arith.constant 0 : index
    %138 = vector.load %arg1[%c4, %c0_47, %c0_48] : memref<8x8x512xf32, #tpu.memory_space<vmem>>, vector<1x8x512xf32>
    %139 = vector.shape_cast %138 : vector<1x8x512xf32> to vector<8x512xf32>
    %140 = arith.truncf %134 : vector<8x128xf32> to vector<8x128xbf16>
    %c0_49 = arith.constant 0 : index
    %c0_50 = arith.constant 0 : index
    %141 = vector.load %arg4[%c0_49, %c0_50] : memref<128x512xbf16, #tpu.memory_space<vmem>>, vector<128x512xbf16>
    %cst_51 = arith.constant dense<0.000000e+00> : vector<8x512xf32>
    %142 = tpu.matmul %140, %141, %cst_51 {dimension_numbers = #tpu.dot_dimension_numbers<[1], [0], [0], [1], [0, 0, 1, 1], [], []>} : vector<8x128xbf16>, vector<128x512xbf16>, vector<8x512xf32> -> vector<8x512xf32>
    %143 = arith.addf %139, %142 : vector<8x512xf32>
    %144 = vector.extract_strided_slice %143 {offsets = [0, 0], sizes = [8, 128], strides = [1, 1]} : vector<8x512xf32> to vector<8x128xf32>
    %145 = arith.negf %144 : vector<8x128xf32>
    %146 = math.exp %145 : vector<8x128xf32>
    %cst_52 = arith.constant 1.000000e+00 : f32
    %147 = vector.broadcast %cst_52 : f32 to vector<8x128xf32>
    %148 = arith.addf %147, %146 : vector<8x128xf32>
    %149 = arith.divf %147, %148 : vector<8x128xf32>
    %150 = vector.extract_strided_slice %143 {offsets = [0, 128], sizes = [8, 128], strides = [1, 1]} : vector<8x512xf32> to vector<8x128xf32>
    %151 = arith.negf %150 : vector<8x128xf32>
    %152 = math.exp %151 : vector<8x128xf32>
    %cst_53 = arith.constant 1.000000e+00 : f32
    %153 = vector.broadcast %cst_53 : f32 to vector<8x128xf32>
    %154 = arith.addf %153, %152 : vector<8x128xf32>
    %155 = arith.divf %153, %154 : vector<8x128xf32>
    %156 = vector.extract_strided_slice %143 {offsets = [0, 256], sizes = [8, 128], strides = [1, 1]} : vector<8x512xf32> to vector<8x128xf32>
    %157 = math.tanh %156 : vector<8x128xf32>
    %158 = vector.extract_strided_slice %143 {offsets = [0, 384], sizes = [8, 128], strides = [1, 1]} : vector<8x512xf32> to vector<8x128xf32>
    %159 = arith.negf %158 : vector<8x128xf32>
    %160 = math.exp %159 : vector<8x128xf32>
    %cst_54 = arith.constant 1.000000e+00 : f32
    %161 = vector.broadcast %cst_54 : f32 to vector<8x128xf32>
    %162 = arith.addf %161, %160 : vector<8x128xf32>
    %163 = arith.divf %161, %162 : vector<8x128xf32>
    %164 = arith.mulf %155, %132 : vector<8x128xf32>
    %165 = arith.mulf %149, %157 : vector<8x128xf32>
    %166 = arith.addf %164, %165 : vector<8x128xf32>
    %167 = math.tanh %166 : vector<8x128xf32>
    %168 = arith.mulf %163, %167 : vector<8x128xf32>
    %169 = vector.shape_cast %168 : vector<8x128xf32> to vector<8x1x128xf32>
    %170 = arith.truncf %169 : vector<8x1x128xf32> to vector<8x1x128xbf16>
    %c0_55 = arith.constant 0 : index
    %c4_56 = arith.constant 4 : index
    %c0_57 = arith.constant 0 : index
    %171 = vector.load %arg5[%c0_55, %c4_56, %c0_57] : memref<8x8x128xbf16, #tpu.memory_space<vmem>>, vector<8x1x128xbf16>
    tpu.vector_store %arg5[%c0_55, %c4_56, %c0_57], %170 {strides = array<i32>} : memref<8x8x128xbf16, #tpu.memory_space<vmem>>, vector<8x1x128xbf16>,
    %c5 = arith.constant 5 : index
    %c0_58 = arith.constant 0 : index
    %c0_59 = arith.constant 0 : index
    %172 = vector.load %arg1[%c5, %c0_58, %c0_59] : memref<8x8x512xf32, #tpu.memory_space<vmem>>, vector<1x8x512xf32>
    %173 = vector.shape_cast %172 : vector<1x8x512xf32> to vector<8x512xf32>
    %174 = arith.truncf %168 : vector<8x128xf32> to vector<8x128xbf16>
    %c0_60 = arith.constant 0 : index
    %c0_61 = arith.constant 0 : index
    %175 = vector.load %arg4[%c0_60, %c0_61] : memref<128x512xbf16, #tpu.memory_space<vmem>>, vector<128x512xbf16>
    %cst_62 = arith.constant dense<0.000000e+00> : vector<8x512xf32>
    %176 = tpu.matmul %174, %175, %cst_62 {dimension_numbers = #tpu.dot_dimension_numbers<[1], [0], [0], [1], [0, 0, 1, 1], [], []>} : vector<8x128xbf16>, vector<128x512xbf16>, vector<8x512xf32> -> vector<8x512xf32>
    %177 = arith.addf %173, %176 : vector<8x512xf32>
    %178 = vector.extract_strided_slice %177 {offsets = [0, 0], sizes = [8, 128], strides = [1, 1]} : vector<8x512xf32> to vector<8x128xf32>
    %179 = arith.negf %178 : vector<8x128xf32>
    %180 = math.exp %179 : vector<8x128xf32>
    %cst_63 = arith.constant 1.000000e+00 : f32
    %181 = vector.broadcast %cst_63 : f32 to vector<8x128xf32>
    %182 = arith.addf %181, %180 : vector<8x128xf32>
    %183 = arith.divf %181, %182 : vector<8x128xf32>
    %184 = vector.extract_strided_slice %177 {offsets = [0, 128], sizes = [8, 128], strides = [1, 1]} : vector<8x512xf32> to vector<8x128xf32>
    %185 = arith.negf %184 : vector<8x128xf32>
    %186 = math.exp %185 : vector<8x128xf32>
    %cst_64 = arith.constant 1.000000e+00 : f32
    %187 = vector.broadcast %cst_64 : f32 to vector<8x128xf32>
    %188 = arith.addf %187, %186 : vector<8x128xf32>
    %189 = arith.divf %187, %188 : vector<8x128xf32>
    %190 = vector.extract_strided_slice %177 {offsets = [0, 256], sizes = [8, 128], strides = [1, 1]} : vector<8x512xf32> to vector<8x128xf32>
    %191 = math.tanh %190 : vector<8x128xf32>
    %192 = vector.extract_strided_slice %177 {offsets = [0, 384], sizes = [8, 128], strides = [1, 1]} : vector<8x512xf32> to vector<8x128xf32>
    %193 = arith.negf %192 : vector<8x128xf32>
    %194 = math.exp %193 : vector<8x128xf32>
    %cst_65 = arith.constant 1.000000e+00 : f32
    %195 = vector.broadcast %cst_65 : f32 to vector<8x128xf32>
    %196 = arith.addf %195, %194 : vector<8x128xf32>
    %197 = arith.divf %195, %196 : vector<8x128xf32>
    %198 = arith.mulf %189, %166 : vector<8x128xf32>
    %199 = arith.mulf %183, %191 : vector<8x128xf32>
    %200 = arith.addf %198, %199 : vector<8x128xf32>
    %201 = math.tanh %200 : vector<8x128xf32>
    %202 = arith.mulf %197, %201 : vector<8x128xf32>
    %203 = vector.shape_cast %202 : vector<8x128xf32> to vector<8x1x128xf32>
    %204 = arith.truncf %203 : vector<8x1x128xf32> to vector<8x1x128xbf16>
    %c0_66 = arith.constant 0 : index
    %c5_67 = arith.constant 5 : index
    %c0_68 = arith.constant 0 : index
    %205 = vector.load %arg5[%c0_66, %c5_67, %c0_68] : memref<8x8x128xbf16, #tpu.memory_space<vmem>>, vector<8x1x128xbf16>
    tpu.vector_store %arg5[%c0_66, %c5_67, %c0_68], %204 {strides = array<i32>} : memref<8x8x128xbf16, #tpu.memory_space<vmem>>, vector<8x1x128xbf16>,
    %c6 = arith.constant 6 : index
    %c0_69 = arith.constant 0 : index
    %c0_70 = arith.constant 0 : index
    %206 = vector.load %arg1[%c6, %c0_69, %c0_70] : memref<8x8x512xf32, #tpu.memory_space<vmem>>, vector<1x8x512xf32>
    %207 = vector.shape_cast %206 : vector<1x8x512xf32> to vector<8x512xf32>
    %208 = arith.truncf %202 : vector<8x128xf32> to vector<8x128xbf16>
    %c0_71 = arith.constant 0 : index
    %c0_72 = arith.constant 0 : index
    %209 = vector.load %arg4[%c0_71, %c0_72] : memref<128x512xbf16, #tpu.memory_space<vmem>>, vector<128x512xbf16>
    %cst_73 = arith.constant dense<0.000000e+00> : vector<8x512xf32>
    %210 = tpu.matmul %208, %209, %cst_73 {dimension_numbers = #tpu.dot_dimension_numbers<[1], [0], [0], [1], [0, 0, 1, 1], [], []>} : vector<8x128xbf16>, vector<128x512xbf16>, vector<8x512xf32> -> vector<8x512xf32>
    %211 = arith.addf %207, %210 : vector<8x512xf32>
    %212 = vector.extract_strided_slice %211 {offsets = [0, 0], sizes = [8, 128], strides = [1, 1]} : vector<8x512xf32> to vector<8x128xf32>
    %213 = arith.negf %212 : vector<8x128xf32>
    %214 = math.exp %213 : vector<8x128xf32>
    %cst_74 = arith.constant 1.000000e+00 : f32
    %215 = vector.broadcast %cst_74 : f32 to vector<8x128xf32>
    %216 = arith.addf %215, %214 : vector<8x128xf32>
    %217 = arith.divf %215, %216 : vector<8x128xf32>
    %218 = vector.extract_strided_slice %211 {offsets = [0, 128], sizes = [8, 128], strides = [1, 1]} : vector<8x512xf32> to vector<8x128xf32>
    %219 = arith.negf %218 : vector<8x128xf32>
    %220 = math.exp %219 : vector<8x128xf32>
    %cst_75 = arith.constant 1.000000e+00 : f32
    %221 = vector.broadcast %cst_75 : f32 to vector<8x128xf32>
    %222 = arith.addf %221, %220 : vector<8x128xf32>
    %223 = arith.divf %221, %222 : vector<8x128xf32>
    %224 = vector.extract_strided_slice %211 {offsets = [0, 256], sizes = [8, 128], strides = [1, 1]} : vector<8x512xf32> to vector<8x128xf32>
    %225 = math.tanh %224 : vector<8x128xf32>
    %226 = vector.extract_strided_slice %211 {offsets = [0, 384], sizes = [8, 128], strides = [1, 1]} : vector<8x512xf32> to vector<8x128xf32>
    %227 = arith.negf %226 : vector<8x128xf32>
    %228 = math.exp %227 : vector<8x128xf32>
    %cst_76 = arith.constant 1.000000e+00 : f32
    %229 = vector.broadcast %cst_76 : f32 to vector<8x128xf32>
    %230 = arith.addf %229, %228 : vector<8x128xf32>
    %231 = arith.divf %229, %230 : vector<8x128xf32>
    %232 = arith.mulf %223, %200 : vector<8x128xf32>
    %233 = arith.mulf %217, %225 : vector<8x128xf32>
    %234 = arith.addf %232, %233 : vector<8x128xf32>
    %235 = math.tanh %234 : vector<8x128xf32>
    %236 = arith.mulf %231, %235 : vector<8x128xf32>
    %237 = vector.shape_cast %236 : vector<8x128xf32> to vector<8x1x128xf32>
    %238 = arith.truncf %237 : vector<8x1x128xf32> to vector<8x1x128xbf16>
    %c0_77 = arith.constant 0 : index
    %c6_78 = arith.constant 6 : index
    %c0_79 = arith.constant 0 : index
    %239 = vector.load %arg5[%c0_77, %c6_78, %c0_79] : memref<8x8x128xbf16, #tpu.memory_space<vmem>>, vector<8x1x128xbf16>
    tpu.vector_store %arg5[%c0_77, %c6_78, %c0_79], %238 {strides = array<i32>} : memref<8x8x128xbf16, #tpu.memory_space<vmem>>, vector<8x1x128xbf16>,
    %c7 = arith.constant 7 : index
    %c0_80 = arith.constant 0 : index
    %c0_81 = arith.constant 0 : index
    %240 = vector.load %arg1[%c7, %c0_80, %c0_81] : memref<8x8x512xf32, #tpu.memory_space<vmem>>, vector<1x8x512xf32>
    %241 = vector.shape_cast %240 : vector<1x8x512xf32> to vector<8x512xf32>
    %242 = arith.truncf %236 : vector<8x128xf32> to vector<8x128xbf16>
    %c0_82 = arith.constant 0 : index
    %c0_83 = arith.constant 0 : index
    %243 = vector.load %arg4[%c0_82, %c0_83] : memref<128x512xbf16, #tpu.memory_space<vmem>>, vector<128x512xbf16>
    %cst_84 = arith.constant dense<0.000000e+00> : vector<8x512xf32>
    %244 = tpu.matmul %242, %243, %cst_84 {dimension_numbers = #tpu.dot_dimension_numbers<[1], [0], [0], [1], [0, 0, 1, 1], [], []>} : vector<8x128xbf16>, vector<128x512xbf16>, vector<8x512xf32> -> vector<8x512xf32>
    %245 = arith.addf %241, %244 : vector<8x512xf32>
    %246 = vector.extract_strided_slice %245 {offsets = [0, 0], sizes = [8, 128], strides = [1, 1]} : vector<8x512xf32> to vector<8x128xf32>
    %247 = arith.negf %246 : vector<8x128xf32>
    %248 = math.exp %247 : vector<8x128xf32>
    %cst_85 = arith.constant 1.000000e+00 : f32
    %249 = vector.broadcast %cst_85 : f32 to vector<8x128xf32>
    %250 = arith.addf %249, %248 : vector<8x128xf32>
    %251 = arith.divf %249, %250 : vector<8x128xf32>
    %252 = vector.extract_strided_slice %245 {offsets = [0, 128], sizes = [8, 128], strides = [1, 1]} : vector<8x512xf32> to vector<8x128xf32>
    %253 = arith.negf %252 : vector<8x128xf32>
    %254 = math.exp %253 : vector<8x128xf32>
    %cst_86 = arith.constant 1.000000e+00 : f32
    %255 = vector.broadcast %cst_86 : f32 to vector<8x128xf32>
    %256 = arith.addf %255, %254 : vector<8x128xf32>
    %257 = arith.divf %255, %256 : vector<8x128xf32>
    %258 = vector.extract_strided_slice %245 {offsets = [0, 256], sizes = [8, 128], strides = [1, 1]} : vector<8x512xf32> to vector<8x128xf32>
    %259 = math.tanh %258 : vector<8x128xf32>
    %260 = vector.extract_strided_slice %245 {offsets = [0, 384], sizes = [8, 128], strides = [1, 1]} : vector<8x512xf32> to vector<8x128xf32>
    %261 = arith.negf %260 : vector<8x128xf32>
    %262 = math.exp %261 : vector<8x128xf32>
    %cst_87 = arith.constant 1.000000e+00 : f32
    %263 = vector.broadcast %cst_87 : f32 to vector<8x128xf32>
    %264 = arith.addf %263, %262 : vector<8x128xf32>
    %265 = arith.divf %263, %264 : vector<8x128xf32>
    %266 = arith.mulf %257, %234 : vector<8x128xf32>
    %267 = arith.mulf %251, %259 : vector<8x128xf32>
    %268 = arith.addf %266, %267 : vector<8x128xf32>
    %269 = math.tanh %268 : vector<8x128xf32>
    %270 = arith.mulf %265, %269 : vector<8x128xf32>
    %271 = vector.shape_cast %270 : vector<8x128xf32> to vector<8x1x128xf32>
    %272 = arith.truncf %271 : vector<8x1x128xf32> to vector<8x1x128xbf16>
    %c0_88 = arith.constant 0 : index
    %c7_89 = arith.constant 7 : index
    %c0_90 = arith.constant 0 : index
    %273 = vector.load %arg5[%c0_88, %c7_89, %c0_90] : memref<8x8x128xbf16, #tpu.memory_space<vmem>>, vector<8x1x128xbf16>
    tpu.vector_store %arg5[%c0_88, %c7_89, %c0_90], %272 {strides = array<i32>} : memref<8x8x128xbf16, #tpu.memory_space<vmem>>, vector<8x1x128xbf16>,
    return
  }
  func.func @transform_0(%arg0: i32) -> (i32, i32, i32) {
    %c0_i32 = arith.constant 0 : i32
    %c0_i32_0 = arith.constant 0 : i32
    %c0_i32_1 = arith.constant 0 : i32
    %c0_i32_2 = arith.constant 0 : i32
    return %c0_i32, %c0_i32_0, %c0_i32_1 : i32, i32, i32
  }
  func.func @transform_1(%arg0: i32) -> (i32, i32) {
    %c0_i32 = arith.constant 0 : i32
    %c0_i32_0 = arith.constant 0 : i32
    %c0_i32_1 = arith.constant 0 : i32
    return %c0_i32, %c0_i32_0 : i32, i32
  }
  func.func @transform_2(%arg0: i32) -> (i32, i32) {
    %c0_i32 = arith.constant 0 : i32
    %c0_i32_0 = arith.constant 0 : i32
    %c0_i32_1 = arith.constant 0 : i32
    return %c0_i32, %c0_i32_0 : i32, i32
  }
  func.func @transform_3(%arg0: i32) -> (i32, i32) {
    %c0_i32 = arith.constant 0 : i32
    %c0_i32_0 = arith.constant 0 : i32
    %c0_i32_1 = arith.constant 0 : i32
    return %c0_i32, %c0_i32_0 : i32, i32
  }
  func.func @transform_4(%arg0: i32) -> (i32, i32, i32) {
    %c0_i32 = arith.constant 0 : i32
    %c0_i32_0 = arith.constant 0 : i32
    %c0_i32_1 = arith.constant 0 : i32
    %c0_i32_2 = arith.constant 0 : i32
    return %c0_i32, %c0_i32_0, %c0_i32_1 : i32, i32, i32
  }
}

</mosaic_0001>

<llo_original>
// kernel: decoder_rnn_forward.5
$region0: #{decoder_rnn_forward.5}
  #allocation0 [shape = 'u32[]', space=smem, size = 0x4, offset = 0x4, fixed_abs, tag = 'smem constant byte address 0x4 - core index']
  #allocation1 [shape = 'u32[144,128]{1,0:T(1,128)}', space=vmem, size = 0x12000, scoped, tag = 'internal scratch']
  %s0 = inlined_call_operand.vmem [shape: bf16[64,128], index: 0, kind: input, shape index: {}]
  %s1 = inlined_call_operand.vmem [shape: bf16[128,128], index: 1, kind: input, shape index: {}]
  %s2 = inlined_call_operand.vmem [shape: f32[1,128], index: 2, kind: input, shape index: {}]
  %s3 = inlined_call_operand.vmem [shape: f32[64,128], index: 3, kind: output, shape index: {}]
  %s4 = sld [smem:[#allocation0]]
  $region22: #{decoder_rnn_forward.5} parent=0
    _
  %s6 = ssub.s32 1, %s4
  %s7 = scalar_select 0, %s6, %s4
  // Predicated region
  $region2: #{decoder_rnn_forward.5} parent=0 // pred_check
    _
  $region3: #{decoder_rnn_forward.5} parent=0 // pred_check_branch
    %9 = sbr.rel (0) target = $region5
  $region4: #{decoder_rnn_forward.5} parent=0 // pred_region
    _
  $region5: #{decoder_rnn_forward.5} parent=0 // pred_fallthru
    _
  // Predicated region
  $region6: #{decoder_rnn_forward.5} parent=0 // pred_check
    _
  $region7: #{decoder_rnn_forward.5} parent=0 // pred_check_branch
    %11 = sbr.rel (0) target = $region9
  $region8: #{decoder_rnn_forward.5} parent=0 // pred_region
    _
  $region9: #{decoder_rnn_forward.5} parent=0 // pred_fallthru
    _
  // Predicated region
  $region10: #{decoder_rnn_forward.5} parent=0 // pred_check
    _
  $region11: #{decoder_rnn_forward.5} parent=0 // pred_check_branch
    %13 = sbr.rel (0) target = $region13
  $region12: #{decoder_rnn_forward.5} parent=0 // pred_region
    _
  $region13: #{decoder_rnn_forward.5} parent=0 // pred_fallthru
    _
  %v15 = vld [vmem:[%s0] sm:$0xf]
  %v16 = vld [vmem:[%s0 + $0x4] sm:$0xf]
  %v17 = vld [vmem:[%s0 + $0x8] sm:$0xf]
  %v18 = vld [vmem:[%s0 + $0xc] sm:$0xf]
  %v19 = vld [vmem:[%s0 + $0x10] sm:$0xf]
  %v20 = vld [vmem:[%s0 + $0x14] sm:$0xf]
  %v21 = vld [vmem:[%s0 + $0x18] sm:$0xf]
  %v22 = vld [vmem:[%s0 + $0x1c] sm:$0xf]
  %v23 = vld [vmem:[%s1] sm:$0xf]
  %v24 = vld [vmem:[%s1 + $0x4] sm:$0xf]
  %v25 = vld [vmem:[%s1 + $0x8] sm:$0xf]
  %v26 = vld [vmem:[%s1 + $0xc] sm:$0xf]
  %v27 = vld [vmem:[%s1 + $0x10] sm:$0xf]
  %v28 = vld [vmem:[%s1 + $0x14] sm:$0xf]
  %v29 = vld [vmem:[%s1 + $0x18] sm:$0xf]
  %v30 = vld [vmem:[%s1 + $0x1c] sm:$0xf]
  %v31 = vld [vmem:[%s1 + $0x20] sm:$0xf]
  %v32 = vld [vmem:[%s1 + $0x24] sm:$0xf]
  %v33 = vld [vmem:[%s1 + $0x28] sm:$0xf]
  %v34 = vld [vmem:[%s1 + $0x2c] sm:$0xf]
  %v35 = vld [vmem:[%s1 + $0x30] sm:$0xf]
  %v36 = vld [vmem:[%s1 + $0x34] sm:$0xf]
  %v37 = vld [vmem:[%s1 + $0x38] sm:$0xf]
  %v38 = vld [vmem:[%s1 + $0x3c] sm:$0xf]
  %v39 = vld [vmem:[%s2] sm:$0x1]
  %v41 = vlaneseq
  %v42 = vshrl.u32 %v41, 7
  %v43 = vsub.s32 0, %v42
  %v44 = vrot.slane %v39, %v43
  %v54 = vunpack.c.l.b16 %v15
  %v55 = vunpack.c.l.b16 %v16
  %v56 = vunpack.c.l.b16 %v17
  %v57 = vunpack.c.l.b16 %v18
  %v58 = vunpack.c.l.b16 %v19
  %v59 = vunpack.c.l.b16 %v20
  %v60 = vunpack.c.l.b16 %v21
  %v61 = vunpack.c.l.b16 %v22
  %v62 = vpack.c.b16 %v55, %v54
  %v63 = vpack.c.b16 %v57, %v56
  %v64 = vpack.c.b16 %v59, %v58
  %v65 = vpack.c.b16 %v61, %v60
  %v86 = vunpack.c.l.b16 %v23
  %v87 = vunpack.c.l.b16 %v24
  %v88 = vunpack.c.l.b16 %v25
  %v89 = vunpack.c.l.b16 %v26
  %v90 = vunpack.c.l.b16 %v27
  %v91 = vunpack.c.l.b16 %v28
  %v92 = vunpack.c.l.b16 %v29
  %v93 = vunpack.c.l.b16 %v30
  %v94 = vunpack.c.l.b16 %v31
  %v95 = vunpack.c.l.b16 %v32
  %v96 = vunpack.c.l.b16 %v33
  %v97 = vunpack.c.l.b16 %v34
  %v98 = vunpack.c.l.b16 %v35
  %v99 = vunpack.c.l.b16 %v36
  %v100 = vunpack.c.l.b16 %v37
  %v101 = vunpack.c.l.b16 %v38
  %v102 = vpack.c.b16 %v87, %v86
  %v103 = vpack.c.b16 %v89, %v88
  %v104 = vpack.c.b16 %v91, %v90
  %v105 = vpack.c.b16 %v93, %v92
  %v106 = vpack.c.b16 %v95, %v94
  %v107 = vpack.c.b16 %v97, %v96
  %v108 = vpack.c.b16 %v99, %v98
  %v109 = vpack.c.b16 %v101, %v100
  %118 = vmatprep.subr.bf16.mxu0 0
  %119 = vmatpush1.bf16.msra.mxu0 %v109
  %120 = vmatprep.subr.bf16.mxu0 0
  %121 = vmatpush1.bf16.msra.mxu0 %v108
  %122 = vmatprep.subr.bf16.mxu0 0
  %123 = vmatpush1.bf16.msra.mxu0 %v107
  %124 = vmatprep.subr.bf16.mxu0 0
  %125 = vmatpush1.bf16.msra.mxu0 %v106
  %126 = vmatprep.subr.bf16.mxu0 0
  %127 = vmatpush1.bf16.msra.mxu0 %v105
  %128 = vmatprep.subr.bf16.mxu0 0
  %129 = vmatpush1.bf16.msra.mxu0 %v104
  %130 = vmatprep.subr.bf16.mxu0 0
  %131 = vmatpush1.bf16.msra.mxu0 %v103
  %132 = vmatprep.subr.bf16.mxu0 0
  %133 = vmatpush1.bf16.msra.mxu0 %v102
  %134 = vmatprep.subr.bf16.mxu0 0
  %135 = vmatpush2.bf16.msra.mxu0 0
  %136 = vmatprep.subr.bf16.mxu0 0
  %137 = vmatpush2.bf16.msra.mxu0 0
  %138 = vmatprep.subr.bf16.mxu0 0
  %139 = vmatpush2.bf16.msra.mxu0 0
  %140 = vmatprep.subr.bf16.mxu0 0
  %141 = vmatpush2.bf16.msra.mxu0 0
  %142 = vmatprep.subr.bf16.mxu0 0
  %143 = vmatpush2.bf16.msra.mxu0 0
  %144 = vmatprep.subr.bf16.mxu0 0
  %145 = vmatpush2.bf16.msra.mxu0 0
  %146 = vmatprep.subr.bf16.mxu0 0
  %147 = vmatpush2.bf16.msra.mxu0 0
  %148 = vmatprep.subr.bf16.mxu0 0
  %149 = vmatpush2.bf16.msra.mxu0 0
  %150 = vmatprep.mubr.bf16.mxu0 0
  %151 = vmatmul.mubr.bf16.gmra.mxu0 %v62
  %v152 = vpop.f32.mrf.mxu0
  %v153 = vadd.f32 %v44, %v152
  %v154 = vpop.f32.mrf.mxu0
  %v155 = vpop.f32.mrf.mxu0
  %v156 = vadd.f32 %v44, %v155
  %v157 = vpop.f32.mrf.mxu0
  %158 = vmatprep.mubr.bf16.mxu0 0
  %159 = vmatmul.mubr.bf16.gmra.mxu0 %v63
  %v160 = vpop.f32.mrf.mxu0
  %v161 = vadd.f32 %v44, %v160
  %v162 = vpop.f32.mrf.mxu0
  %v163 = vpop.f32.mrf.mxu0
  %v164 = vadd.f32 %v44, %v163
  %v165 = vpop.f32.mrf.mxu0
  %166 = vmatprep.mubr.bf16.mxu0 0
  %167 = vmatmul.mubr.bf16.gmra.mxu0 %v64
  %v168 = vpop.f32.mrf.mxu0
  %v169 = vadd.f32 %v44, %v168
  %v170 = vpop.f32.mrf.mxu0
  %v171 = vpop.f32.mrf.mxu0
  %v172 = vadd.f32 %v44, %v171
  %v173 = vpop.f32.mrf.mxu0
  %174 = vmatprep.mubr.bf16.mxu0 0
  %175 = vmatmul.mubr.bf16.gmra.mxu0 %v65
  %v176 = vpop.f32.mrf.mxu0
  %v177 = vadd.f32 %v44, %v176
  %v178 = vpop.f32.mrf.mxu0
  %v179 = vpop.f32.mrf.mxu0
  %v180 = vadd.f32 %v44, %v179
  %v181 = vpop.f32.mrf.mxu0
  %182 = vdwg.mxu0
  %183 = vst [vmem:[%s3] sm:$0xff] %v153
  %184 = vst [vmem:[%s3 + $0x8] sm:$0xff] %v156
  %185 = vst [vmem:[%s3 + $0x10] sm:$0xff] %v161
  %186 = vst [vmem:[%s3 + $0x18] sm:$0xff] %v164
  %187 = vst [vmem:[%s3 + $0x20] sm:$0xff] %v169
  %188 = vst [vmem:[%s3 + $0x28] sm:$0xff] %v172
  %189 = vst [vmem:[%s3 + $0x30] sm:$0xff] %v177
  %190 = vst [vmem:[%s3 + $0x38] sm:$0xff] %v180
  // Predicated region
  $region14: #{decoder_rnn_forward.5} parent=0 // pred_check
    _
  $region15: #{decoder_rnn_forward.5} parent=0 // pred_check_branch
    %192 = sbr.rel (0) target = $region17
  $region16: #{decoder_rnn_forward.5} parent=0 // pred_region
    _
  $region17: #{decoder_rnn_forward.5} parent=0 // pred_fallthru
    _
  // Predicated region
  $region18: #{decoder_rnn_forward.5} parent=0 // pred_check
    _
  $region19: #{decoder_rnn_forward.5} parent=0 // pred_check_branch
    %194 = sbr.rel (0) target = $region21
  $region20: #{decoder_rnn_forward.5} parent=0 // pred_region
    _
  $region21: #{decoder_rnn_forward.5} parent=0 // pred_fallthru
    _

// kernel: decoder_rnn_forward.3
$region0: #{decoder_rnn_forward.3}
  #allocation0 [shape = 'u32[]', space=smem, size = 0x4, offset = 0x4, fixed_abs, tag = 'smem constant byte address 0x4 - core index']
  #allocation1 [shape = 'u32[144,128]{1,0:T(1,128)}', space=vmem, size = 0x12000, scoped, tag = 'internal scratch']
  %s0 = inlined_call_operand.vmem [shape: bf16[64,128], index: 0, kind: input, shape index: {}]
  %s1 = inlined_call_operand.vmem [shape: bf16[128,512], index: 1, kind: input, shape index: {}]
  %s2 = inlined_call_operand.vmem [shape: f32[1,512], index: 2, kind: input, shape index: {}]
  %s3 = inlined_call_operand.vmem [shape: f32[64,512], index: 3, kind: output, shape index: {}]
  %s4 = sld [smem:[#allocation0]]
  $region22: #{decoder_rnn_forward.3} parent=0
    _
  %s6 = ssub.s32 1, %s4
  %s7 = scalar_select 0, %s6, %s4
  // Predicated region
  $region2: #{decoder_rnn_forward.3} parent=0 // pred_check
    _
  $region3: #{decoder_rnn_forward.3} parent=0 // pred_check_branch
    %9 = sbr.rel (0) target = $region5
  $region4: #{decoder_rnn_forward.3} parent=0 // pred_region
    _
  $region5: #{decoder_rnn_forward.3} parent=0 // pred_fallthru
    _
  // Predicated region
  $region6: #{decoder_rnn_forward.3} parent=0 // pred_check
    _
  $region7: #{decoder_rnn_forward.3} parent=0 // pred_check_branch
    %11 = sbr.rel (0) target = $region9
  $region8: #{decoder_rnn_forward.3} parent=0 // pred_region
    _
  $region9: #{decoder_rnn_forward.3} parent=0 // pred_fallthru
    _
  // Predicated region
  $region10: #{decoder_rnn_forward.3} parent=0 // pred_check
    _
  $region11: #{decoder_rnn_forward.3} parent=0 // pred_check_branch
    %13 = sbr.rel (0) target = $region13
  $region12: #{decoder_rnn_forward.3} parent=0 // pred_region
    _
  $region13: #{decoder_rnn_forward.3} parent=0 // pred_fallthru
    _
  %v15 = vld [vmem:[%s0] sm:$0xf]
  %v16 = vld [vmem:[%s0 + $0x4] sm:$0xf]
  %v17 = vld [vmem:[%s0 + $0x8] sm:$0xf]
  %v18 = vld [vmem:[%s0 + $0xc] sm:$0xf]
  %v19 = vld [vmem:[%s0 + $0x10] sm:$0xf]
  %v20 = vld [vmem:[%s0 + $0x14] sm:$0xf]
  %v21 = vld [vmem:[%s0 + $0x18] sm:$0xf]
  %v22 = vld [vmem:[%s0 + $0x1c] sm:$0xf]
  %v23 = vld [vmem:[%s1] sm:$0xff]
  %v24 = vld [vmem:[%s1 + $0x8] sm:$0xff]
  %v25 = vld [vmem:[%s1 + $0x10] sm:$0xff]
  %v26 = vld [vmem:[%s1 + $0x18] sm:$0xff]
  %v27 = vld [vmem:[%s1 + $0x20] sm:$0xff]
  %v28 = vld [vmem:[%s1 + $0x28] sm:$0xff]
  %v29 = vld [vmem:[%s1 + $0x30] sm:$0xff]
  %v30 = vld [vmem:[%s1 + $0x38] sm:$0xff]
  %v31 = vld [vmem:[%s1 + $0x40] sm:$0xff]
  %v32 = vld [vmem:[%s1 + $0x48] sm:$0xff]
  %v33 = vld [vmem:[%s1 + $0x50] sm:$0xff]
  %v34 = vld [vmem:[%s1 + $0x58] sm:$0xff]
  %v35 = vld [vmem:[%s1 + $0x60] sm:$0xff]
  %v36 = vld [vmem:[%s1 + $0x68] sm:$0xff]
  %v37 = vld [vmem:[%s1 + $0x70] sm:$0xff]
  %v38 = vld [vmem:[%s1 + $0x78] sm:$0xff]
  %v39 = vld [vmem:[%s1 + $0x80] sm:$0xff]
  %v40 = vld [vmem:[%s1 + $0x88] sm:$0xff]
  %v41 = vld [vmem:[%s1 + $0x90] sm:$0xff]
  %v42 = vld [vmem:[%s1 + $0x98] sm:$0xff]
  %v43 = vld [vmem:[%s1 + $0xa0] sm:$0xff]
  %v44 = vld [vmem:[%s1 + $0xa8] sm:$0xff]
  %v45 = vld [vmem:[%s1 + $0xb0] sm:$0xff]
  %v46 = vld [vmem:[%s1 + $0xb8] sm:$0xff]
  %v47 = vld [vmem:[%s1 + $0xc0] sm:$0xff]
  %v48 = vld [vmem:[%s1 + $0xc8] sm:$0xff]
  %v49 = vld [vmem:[%s1 + $0xd0] sm:$0xff]
  %v50 = vld [vmem:[%s1 + $0xd8] sm:$0xff]
  %v51 = vld [vmem:[%s1 + $0xe0] sm:$0xff]
  %v52 = vld [vmem:[%s1 + $0xe8] sm:$0xff]
  %v53 = vld [vmem:[%s1 + $0xf0] sm:$0xff]
  %v54 = vld [vmem:[%s1 + $0xf8] sm:$0xff]
  %v55 = vld [vmem:[%s2] sm:$0xf]
  %v57 = vlaneseq
  %v58 = vshrl.u32 %v57, 7
  %v59 = vsub.s32 0, %v58
  %v60 = vrot.slane %v55, %v59
  %v61 = vlaneseq
  %v62 = vshrl.u32 %v61, 7
  %v63 = vsub.s32 1, %v62
  %v64 = vrot.slane %v55, %v63
  %v65 = vlaneseq
  %v66 = vshrl.u32 %v65, 7
  %v67 = vsub.s32 2, %v66
  %v68 = vrot.slane %v55, %v67
  %v69 = vlaneseq
  %v70 = vshrl.u32 %v69, 7
  %v71 = vsub.s32 3, %v70
  %v72 = vrot.slane %v55, %v71
  %v85 = vunpack.c.l.b16 %v15
  %v86 = vunpack.c.l.b16 %v16
  %v87 = vunpack.c.l.b16 %v17
  %v88 = vunpack.c.l.b16 %v18
  %v89 = vunpack.c.l.b16 %v19
  %v90 = vunpack.c.l.b16 %v20
  %v91 = vunpack.c.l.b16 %v21
  %v92 = vunpack.c.l.b16 %v22
  %v93 = vpack.c.b16 %v86, %v85
  %v94 = vpack.c.b16 %v88, %v87
  %v95 = vpack.c.b16 %v90, %v89
  %v96 = vpack.c.b16 %v92, %v91
  %v133 = vunpack.c.l.b16 %v23
  %v134 = vunpack.c.h.b16 %v23
  %v135 = vunpack.c.l.b16 %v24
  %v136 = vunpack.c.h.b16 %v24
  %v137 = vunpack.c.l.b16 %v25
  %v138 = vunpack.c.h.b16 %v25
  %v139 = vunpack.c.l.b16 %v26
  %v140 = vunpack.c.h.b16 %v26
  %v141 = vunpack.c.l.b16 %v27
  %v142 = vunpack.c.h.b16 %v27
  %v143 = vunpack.c.l.b16 %v28
  %v144 = vunpack.c.h.b16 %v28
  %v145 = vunpack.c.l.b16 %v29
  %v146 = vunpack.c.h.b16 %v29
  %v147 = vunpack.c.l.b16 %v30
  %v148 = vunpack.c.h.b16 %v30
  %v149 = vunpack.c.l.b16 %v31
  %v150 = vunpack.c.h.b16 %v31
  %v151 = vunpack.c.l.b16 %v32
  %v152 = vunpack.c.h.b16 %v32
  %v153 = vunpack.c.l.b16 %v33
  %v154 = vunpack.c.h.b16 %v33
  %v155 = vunpack.c.l.b16 %v34
  %v156 = vunpack.c.h.b16 %v34
  %v157 = vunpack.c.l.b16 %v35
  %v158 = vunpack.c.h.b16 %v35
  %v159 = vunpack.c.l.b16 %v36
  %v160 = vunpack.c.h.b16 %v36
  %v161 = vunpack.c.l.b16 %v37
  %v162 = vunpack.c.h.b16 %v37
  %v163 = vunpack.c.l.b16 %v38
  %v164 = vunpack.c.h.b16 %v38
  %v165 = vunpack.c.l.b16 %v39
  %v166 = vunpack.c.h.b16 %v39
  %v167 = vunpack.c.l.b16 %v40
  %v168 = vunpack.c.h.b16 %v40
  %v169 = vunpack.c.l.b16 %v41
  %v170 = vunpack.c.h.b16 %v41
  %v171 = vunpack.c.l.b16 %v42
  %v172 = vunpack.c.h.b16 %v42
  %v173 = vunpack.c.l.b16 %v43
  %v174 = vunpack.c.h.b16 %v43
  %v175 = vunpack.c.l.b16 %v44
  %v176 = vunpack.c.h.b16 %v44
  %v177 = vunpack.c.l.b16 %v45
  %v178 = vunpack.c.h.b16 %v45
  %v179 = vunpack.c.l.b16 %v46
  %v180 = vunpack.c.h.b16 %v46
  %v181 = vunpack.c.l.b16 %v47
  %v182 = vunpack.c.h.b16 %v47
  %v183 = vunpack.c.l.b16 %v48
  %v184 = vunpack.c.h.b16 %v48
  %v185 = vunpack.c.l.b16 %v49
  %v186 = vunpack.c.h.b16 %v49
  %v187 = vunpack.c.l.b16 %v50
  %v188 = vunpack.c.h.b16 %v50
  %v189 = vunpack.c.l.b16 %v51
  %v190 = vunpack.c.h.b16 %v51
  %v191 = vunpack.c.l.b16 %v52
  %v192 = vunpack.c.h.b16 %v52
  %v193 = vunpack.c.l.b16 %v53
  %v194 = vunpack.c.h.b16 %v53
  %v195 = vunpack.c.l.b16 %v54
  %v196 = vunpack.c.h.b16 %v54
  %v197 = vpack.c.b16 %v137, %v133
  %v198 = vpack.c.b16 %v138, %v134
  %v199 = vpack.c.b16 %v139, %v135
  %v200 = vpack.c.b16 %v140, %v136
  %v201 = vpack.c.b16 %v145, %v141
  %v202 = vpack.c.b16 %v146, %v142
  %v203 = vpack.c.b16 %v147, %v143
  %v204 = vpack.c.b16 %v148, %v144
  %v205 = vpack.c.b16 %v153, %v149
  %v206 = vpack.c.b16 %v154, %v150
  %v207 = vpack.c.b16 %v155, %v151
  %v208 = vpack.c.b16 %v156, %v152
  %v209 = vpack.c.b16 %v161, %v157
  %v210 = vpack.c.b16 %v162, %v158
  %v211 = vpack.c.b16 %v163, %v159
  %v212 = vpack.c.b16 %v164, %v160
  %v213 = vpack.c.b16 %v169, %v165
  %v214 = vpack.c.b16 %v170, %v166
  %v215 = vpack.c.b16 %v171, %v167
  %v216 = vpack.c.b16 %v172, %v168
  %v217 = vpack.c.b16 %v177, %v173
  %v218 = vpack.c.b16 %v178, %v174
  %v219 = vpack.c.b16 %v179, %v175
  %v220 = vpack.c.b16 %v180, %v176
  %v221 = vpack.c.b16 %v185, %v181
  %v222 = vpack.c.b16 %v186, %v182
  %v223 = vpack.c.b16 %v187, %v183
  %v224 = vpack.c.b16 %v188, %v184
  %v225 = vpack.c.b16 %v193, %v189
  %v226 = vpack.c.b16 %v194, %v190
  %v227 = vpack.c.b16 %v195, %v191
  %v228 = vpack.c.b16 %v196, %v192
  %261 = vmatprep.subr.bf16.mxu0 %v226
  %262 = vmatpush1.bf16.msra.mxu0 %v225
  %263 = vmatprep.subr.bf16.mxu0 %v222
  %264 = vmatpush1.bf16.msra.mxu0 %v221
  %265 = vmatprep.subr.bf16.mxu0 %v218
  %266 = vmatpush1.bf16.msra.mxu0 %v217
  %267 = vmatprep.subr.bf16.mxu0 %v214
  %268 = vmatpush1.bf16.msra.mxu0 %v213
  %269 = vmatprep.subr.bf16.mxu0 %v210
  %270 = vmatpush1.bf16.msra.mxu0 %v209
  %271 = vmatprep.subr.bf16.mxu0 %v206
  %272 = vmatpush1.bf16.msra.mxu0 %v205
  %273 = vmatprep.subr.bf16.mxu0 %v202
  %274 = vmatpush1.bf16.msra.mxu0 %v201
  %275 = vmatprep.subr.bf16.mxu0 %v198
  %276 = vmatpush1.bf16.msra.mxu0 %v197
  %277 = vmatprep.subr.bf16.mxu0 0
  %278 = vmatpush2.bf16.msra.mxu0 0
  %279 = vmatprep.subr.bf16.mxu0 0
  %280 = vmatpush2.bf16.msra.mxu0 0
  %281 = vmatprep.subr.bf16.mxu0 0
  %282 = vmatpush2.bf16.msra.mxu0 0
  %283 = vmatprep.subr.bf16.mxu0 0
  %284 = vmatpush2.bf16.msra.mxu0 0
  %285 = vmatprep.subr.bf16.mxu0 0
  %286 = vmatpush2.bf16.msra.mxu0 0
  %287 = vmatprep.subr.bf16.mxu0 0
  %288 = vmatpush2.bf16.msra.mxu0 0
  %289 = vmatprep.subr.bf16.mxu0 0
  %290 = vmatpush2.bf16.msra.mxu0 0
  %291 = vmatprep.subr.bf16.mxu0 0
  %292 = vmatpush2.bf16.msra.mxu0 0
  %293 = vmatprep.mubr.bf16.mxu0 0
  %294 = vmatmul.mubr.bf16.gmra.mxu0 %v93
  %v295 = vpop.f32.mrf.mxu0
  %v296 = vadd.f32 %v60, %v295
  %v297 = vpop.f32.mrf.mxu0
  %v298 = vadd.f32 %v64, %v297
  %v299 = vpop.f32.mrf.mxu0
  %v300 = vadd.f32 %v60, %v299
  %v301 = vpop.f32.mrf.mxu0
  %v302 = vadd.f32 %v64, %v301
  %303 = vmatprep.mubr.bf16.mxu0 0
  %304 = vmatmul.mubr.bf16.gmra.mxu0 %v94
  %v305 = vpop.f32.mrf.mxu0
  %v306 = vadd.f32 %v60, %v305
  %v307 = vpop.f32.mrf.mxu0
  %v308 = vadd.f32 %v64, %v307
  %v309 = vpop.f32.mrf.mxu0
  %v310 = vadd.f32 %v60, %v309
  %v311 = vpop.f32.mrf.mxu0
  %v312 = vadd.f32 %v64, %v311
  %313 = vmatprep.mubr.bf16.mxu0 0
  %314 = vmatmul.mubr.bf16.gmra.mxu0 %v95
  %v315 = vpop.f32.mrf.mxu0
  %v316 = vadd.f32 %v60, %v315
  %v317 = vpop.f32.mrf.mxu0
  %v318 = vadd.f32 %v64, %v317
  %v319 = vpop.f32.mrf.mxu0
  %v320 = vadd.f32 %v60, %v319
  %v321 = vpop.f32.mrf.mxu0
  %v322 = vadd.f32 %v64, %v321
  %323 = vmatprep.mubr.bf16.mxu0 0
  %324 = vmatmul.mubr.bf16.gmra.mxu0 %v96
  %v325 = vpop.f32.mrf.mxu0
  %v326 = vadd.f32 %v60, %v325
  %v327 = vpop.f32.mrf.mxu0
  %v328 = vadd.f32 %v64, %v327
  %v329 = vpop.f32.mrf.mxu0
  %v330 = vadd.f32 %v60, %v329
  %v331 = vpop.f32.mrf.mxu0
  %v332 = vadd.f32 %v64, %v331
  %333 = vdwg.mxu0
  %334 = vmatprep.subr.bf16.mxu0 %v228
  %335 = vmatpush1.bf16.msra.mxu0 %v227
  %336 = vmatprep.subr.bf16.mxu0 %v224
  %337 = vmatpush1.bf16.msra.mxu0 %v223
  %338 = vmatprep.subr.bf16.mxu0 %v220
  %339 = vmatpush1.bf16.msra.mxu0 %v219
  %340 = vmatprep.subr.bf16.mxu0 %v216
  %341 = vmatpush1.bf16.msra.mxu0 %v215
  %342 = vmatprep.subr.bf16.mxu0 %v212
  %343 = vmatpush1.bf16.msra.mxu0 %v211
  %344 = vmatprep.subr.bf16.mxu0 %v208
  %345 = vmatpush1.bf16.msra.mxu0 %v207
  %346 = vmatprep.subr.bf16.mxu0 %v204
  %347 = vmatpush1.bf16.msra.mxu0 %v203
  %348 = vmatprep.subr.bf16.mxu0 %v200
  %349 = vmatpush1.bf16.msra.mxu0 %v199
  %350 = vmatprep.subr.bf16.mxu0 0
  %351 = vmatpush2.bf16.msra.mxu0 0
  %352 = vmatprep.subr.bf16.mxu0 0
  %353 = vmatpush2.bf16.msra.mxu0 0
  %354 = vmatprep.subr.bf16.mxu0 0
  %355 = vmatpush2.bf16.msra.mxu0 0
  %356 = vmatprep.subr.bf16.mxu0 0
  %357 = vmatpush2.bf16.msra.mxu0 0
  %358 = vmatprep.subr.bf16.mxu0 0
  %359 = vmatpush2.bf16.msra.mxu0 0
  %360 = vmatprep.subr.bf16.mxu0 0
  %361 = vmatpush2.bf16.msra.mxu0 0
  %362 = vmatprep.subr.bf16.mxu0 0
  %363 = vmatpush2.bf16.msra.mxu0 0
  %364 = vmatprep.subr.bf16.mxu0 0
  %365 = vmatpush2.bf16.msra.mxu0 0
  %366 = vmatprep.mubr.bf16.mxu0 0
  %367 = vmatmul.mubr.bf16.gmra.mxu0 %v93
  %v368 = vpop.f32.mrf.mxu0
  %v369 = vadd.f32 %v68, %v368
  %v370 = vpop.f32.mrf.mxu0
  %v371 = vadd.f32 %v72, %v370
  %v372 = vpop.f32.mrf.mxu0
  %v373 = vadd.f32 %v68, %v372
  %v374 = vpop.f32.mrf.mxu0
  %v375 = vadd.f32 %v72, %v374
  %376 = vmatprep.mubr.bf16.mxu0 0
  %377 = vmatmul.mubr.bf16.gmra.mxu0 %v94
  %v378 = vpop.f32.mrf.mxu0
  %v379 = vadd.f32 %v68, %v378
  %v380 = vpop.f32.mrf.mxu0
  %v381 = vadd.f32 %v72, %v380
  %v382 = vpop.f32.mrf.mxu0
  %v383 = vadd.f32 %v68, %v382
  %v384 = vpop.f32.mrf.mxu0
  %v385 = vadd.f32 %v72, %v384
  %386 = vmatprep.mubr.bf16.mxu0 0
  %387 = vmatmul.mubr.bf16.gmra.mxu0 %v95
  %v388 = vpop.f32.mrf.mxu0
  %v389 = vadd.f32 %v68, %v388
  %v390 = vpop.f32.mrf.mxu0
  %v391 = vadd.f32 %v72, %v390
  %v392 = vpop.f32.mrf.mxu0
  %v393 = vadd.f32 %v68, %v392
  %v394 = vpop.f32.mrf.mxu0
  %v395 = vadd.f32 %v72, %v394
  %396 = vmatprep.mubr.bf16.mxu0 0
  %397 = vmatmul.mubr.bf16.gmra.mxu0 %v96
  %v398 = vpop.f32.mrf.mxu0
  %v399 = vadd.f32 %v68, %v398
  %v400 = vpop.f32.mrf.mxu0
  %v401 = vadd.f32 %v72, %v400
  %v402 = vpop.f32.mrf.mxu0
  %v403 = vadd.f32 %v68, %v402
  %v404 = vpop.f32.mrf.mxu0
  %v405 = vadd.f32 %v72, %v404
  %406 = vdwg.mxu0
  %407 = vst [vmem:[%s3] sm:$0xff] %v296
  %408 = vst [vmem:[%s3 + $0x8] sm:$0xff] %v298
  %409 = vst [vmem:[%s3 + $0x10] sm:$0xff] %v369
  %410 = vst [vmem:[%s3 + $0x18] sm:$0xff] %v371
  %411 = vst [vmem:[%s3 + $0x20] sm:$0xff] %v300
  %412 = vst [vmem:[%s3 + $0x28] sm:$0xff] %v302
  %413 = vst [vmem:[%s3 + $0x30] sm:$0xff] %v373
  %414 = vst [vmem:[%s3 + $0x38] sm:$0xff] %v375
  %415 = vst [vmem:[%s3 + $0x40] sm:$0xff] %v306
  %416 = vst [vmem:[%s3 + $0x48] sm:$0xff] %v308
  %417 = vst [vmem:[%s3 + $0x50] sm:$0xff] %v379
  %418 = vst [vmem:[%s3 + $0x58] sm:$0xff] %v381
  %419 = vst [vmem:[%s3 + $0x60] sm:$0xff] %v310
  %420 = vst [vmem:[%s3 + $0x68] sm:$0xff] %v312
  %421 = vst [vmem:[%s3 + $0x70] sm:$0xff] %v383
  %422 = vst [vmem:[%s3 + $0x78] sm:$0xff] %v385
  %423 = vst [vmem:[%s3 + $0x80] sm:$0xff] %v316
  %424 = vst [vmem:[%s3 + $0x88] sm:$0xff] %v318
  %425 = vst [vmem:[%s3 + $0x90] sm:$0xff] %v389
  %426 = vst [vmem:[%s3 + $0x98] sm:$0xff] %v391
  %427 = vst [vmem:[%s3 + $0xa0] sm:$0xff] %v320
  %428 = vst [vmem:[%s3 + $0xa8] sm:$0xff] %v322
  %429 = vst [vmem:[%s3 + $0xb0] sm:$0xff] %v393
  %430 = vst [vmem:[%s3 + $0xb8] sm:$0xff] %v395
  %431 = vst [vmem:[%s3 + $0xc0] sm:$0xff] %v326
  %432 = vst [vmem:[%s3 + $0xc8] sm:$0xff] %v328
  %433 = vst [vmem:[%s3 + $0xd0] sm:$0xff] %v399
  %434 = vst [vmem:[%s3 + $0xd8] sm:$0xff] %v401
  %435 = vst [vmem:[%s3 + $0xe0] sm:$0xff] %v330
  %436 = vst [vmem:[%s3 + $0xe8] sm:$0xff] %v332
  %437 = vst [vmem:[%s3 + $0xf0] sm:$0xff] %v403
  %438 = vst [vmem:[%s3 + $0xf8] sm:$0xff] %v405
  // Predicated region
  $region14: #{decoder_rnn_forward.3} parent=0 // pred_check
    _
  $region15: #{decoder_rnn_forward.3} parent=0 // pred_check_branch
    %440 = sbr.rel (0) target = $region17
  $region16: #{decoder_rnn_forward.3} parent=0 // pred_region
    _
  $region17: #{decoder_rnn_forward.3} parent=0 // pred_fallthru
    _
  // Predicated region
  $region18: #{decoder_rnn_forward.3} parent=0 // pred_check
    _
  $region19: #{decoder_rnn_forward.3} parent=0 // pred_check_branch
    %442 = sbr.rel (0) target = $region21
  $region20: #{decoder_rnn_forward.3} parent=0 // pred_region
    _
  $region21: #{decoder_rnn_forward.3} parent=0 // pred_fallthru
    _

// kernel: decoder_rnn_forward.4
$region0: #{decoder_rnn_forward.4}
  #allocation0 [shape = 'u32[]', space=smem, size = 0x4, offset = 0x4, fixed_abs, tag = 'smem constant byte address 0x4 - core index']
  #allocation1 [shape = 'u32[144,128]{1,0:T(1,128)}', space=vmem, size = 0x12000, scoped, tag = 'internal scratch']
  %s0 = inlined_call_operand.vmem [shape: f32[8,8,512], index: 0, kind: input, shape index: {}]
  %s1 = inlined_call_operand.vmem [shape: f32[8,128], index: 1, kind: input, shape index: {}]
  %s2 = inlined_call_operand.vmem [shape: f32[8,128], index: 2, kind: input, shape index: {}]
  %s3 = inlined_call_operand.vmem [shape: bf16[128,512], index: 3, kind: input, shape index: {}]
  %s4 = inlined_call_operand.vmem [shape: bf16[8,8,128], index: 4, kind: output, shape index: {}]
  %s5 = sld [smem:[#allocation0]]
  $region26: #{decoder_rnn_forward.4} parent=0
    _
  %s7 = ssub.s32 1, %s5
  %s8 = scalar_select 0, %s7, %s5
  // Predicated region
  $region2: #{decoder_rnn_forward.4} parent=0 // pred_check
    _
  $region3: #{decoder_rnn_forward.4} parent=0 // pred_check_branch
    %10 = sbr.rel (0) target = $region5
  $region4: #{decoder_rnn_forward.4} parent=0 // pred_region
    _
  $region5: #{decoder_rnn_forward.4} parent=0 // pred_fallthru
    _
  // Predicated region
  $region6: #{decoder_rnn_forward.4} parent=0 // pred_check
    _
  $region7: #{decoder_rnn_forward.4} parent=0 // pred_check_branch
    %12 = sbr.rel (0) target = $region9
  $region8: #{decoder_rnn_forward.4} parent=0 // pred_region
    _
  $region9: #{decoder_rnn_forward.4} parent=0 // pred_fallthru
    _
  // Predicated region
  $region10: #{decoder_rnn_forward.4} parent=0 // pred_check
    _
  $region11: #{decoder_rnn_forward.4} parent=0 // pred_check_branch
    %14 = sbr.rel (0) target = $region13
  $region12: #{decoder_rnn_forward.4} parent=0 // pred_region
    _
  $region13: #{decoder_rnn_forward.4} parent=0 // pred_fallthru
    _
  // Predicated region
  $region14: #{decoder_rnn_forward.4} parent=0 // pred_check
    _
  $region15: #{decoder_rnn_forward.4} parent=0 // pred_check_branch
    %16 = sbr.rel (0) target = $region17
  $region16: #{decoder_rnn_forward.4} parent=0 // pred_region
    _
  $region17: #{decoder_rnn_forward.4} parent=0 // pred_fallthru
    _
  %v18 = vld [vmem:[%s1] sm:$0xff]
  %v19 = vld [vmem:[%s2] sm:$0xff]
  %v20 = vld [vmem:[%s0] sm:$0xff]
  %v21 = vld [vmem:[%s0 + $0x8] sm:$0xff]
  %v22 = vld [vmem:[%s0 + $0x10] sm:$0xff]
  %v23 = vld [vmem:[%s0 + $0x18] sm:$0xff]
  %v24 = vpack.c.bf16 %v18, %v18
  %v25 = vld [vmem:[%s3] sm:$0xff]
  %v26 = vld [vmem:[%s3 + $0x8] sm:$0xff]
  %v27 = vld [vmem:[%s3 + $0x10] sm:$0xff]
  %v28 = vld [vmem:[%s3 + $0x18] sm:$0xff]
  %v29 = vld [vmem:[%s3 + $0x20] sm:$0xff]
  %v30 = vld [vmem:[%s3 + $0x28] sm:$0xff]
  %v31 = vld [vmem:[%s3 + $0x30] sm:$0xff]
  %v32 = vld [vmem:[%s3 + $0x38] sm:$0xff]
  %v33 = vld [vmem:[%s3 + $0x40] sm:$0xff]
  %v34 = vld [vmem:[%s3 + $0x48] sm:$0xff]
  %v35 = vld [vmem:[%s3 + $0x50] sm:$0xff]
  %v36 = vld [vmem:[%s3 + $0x58] sm:$0xff]
  %v37 = vld [vmem:[%s3 + $0x60] sm:$0xff]
  %v38 = vld [vmem:[%s3 + $0x68] sm:$0xff]
  %v39 = vld [vmem:[%s3 + $0x70] sm:$0xff]
  %v40 = vld [vmem:[%s3 + $0x78] sm:$0xff]
  %v41 = vld [vmem:[%s3 + $0x80] sm:$0xff]
  %v42 = vld [vmem:[%s3 + $0x88] sm:$0xff]
  %v43 = vld [vmem:[%s3 + $0x90] sm:$0xff]
  %v44 = vld [vmem:[%s3 + $0x98] sm:$0xff]
  %v45 = vld [vmem:[%s3 + $0xa0] sm:$0xff]
  %v46 = vld [vmem:[%s3 + $0xa8] sm:$0xff]
  %v47 = vld [vmem:[%s3 + $0xb0] sm:$0xff]
  %v48 = vld [vmem:[%s3 + $0xb8] sm:$0xff]
  %v49 = vld [vmem:[%s3 + $0xc0] sm:$0xff]
  %v50 = vld [vmem:[%s3 + $0xc8] sm:$0xff]
  %v51 = vld [vmem:[%s3 + $0xd0] sm:$0xff]
  %v52 = vld [vmem:[%s3 + $0xd8] sm:$0xff]
  %v53 = vld [vmem:[%s3 + $0xe0] sm:$0xff]
  %v54 = vld [vmem:[%s3 + $0xe8] sm:$0xff]
  %v55 = vld [vmem:[%s3 + $0xf0] sm:$0xff]
  %v56 = vld [vmem:[%s3 + $0xf8] sm:$0xff]
  %v89 = vunpack.c.l.b16 %v25
  %v90 = vunpack.c.h.b16 %v25
  %v91 = vunpack.c.l.b16 %v26
  %v92 = vunpack.c.h.b16 %v26
  %v93 = vunpack.c.l.b16 %v27
  %v94 = vunpack.c.h.b16 %v27
  %v95 = vunpack.c.l.b16 %v28
  %v96 = vunpack.c.h.b16 %v28
  %v97 = vunpack.c.l.b16 %v29
  %v98 = vunpack.c.h.b16 %v29
  %v99 = vunpack.c.l.b16 %v30
  %v100 = vunpack.c.h.b16 %v30
  %v101 = vunpack.c.l.b16 %v31
  %v102 = vunpack.c.h.b16 %v31
  %v103 = vunpack.c.l.b16 %v32
  %v104 = vunpack.c.h.b16 %v32
  %v105 = vunpack.c.l.b16 %v33
  %v106 = vunpack.c.h.b16 %v33
  %v107 = vunpack.c.l.b16 %v34
  %v108 = vunpack.c.h.b16 %v34
  %v109 = vunpack.c.l.b16 %v35
  %v110 = vunpack.c.h.b16 %v35
  %v111 = vunpack.c.l.b16 %v36
  %v112 = vunpack.c.h.b16 %v36
  %v113 = vunpack.c.l.b16 %v37
  %v114 = vunpack.c.h.b16 %v37
  %v115 = vunpack.c.l.b16 %v38
  %v116 = vunpack.c.h.b16 %v38
  %v117 = vunpack.c.l.b16 %v39
  %v118 = vunpack.c.h.b16 %v39
  %v119 = vunpack.c.l.b16 %v40
  %v120 = vunpack.c.h.b16 %v40
  %v121 = vunpack.c.l.b16 %v41
  %v122 = vunpack.c.h.b16 %v41
  %v123 = vunpack.c.l.b16 %v42
  %v124 = vunpack.c.h.b16 %v42
  %v125 = vunpack.c.l.b16 %v43
  %v126 = vunpack.c.h.b16 %v43
  %v127 = vunpack.c.l.b16 %v44
  %v128 = vunpack.c.h.b16 %v44
  %v129 = vunpack.c.l.b16 %v45
  %v130 = vunpack.c.h.b16 %v45
  %v131 = vunpack.c.l.b16 %v46
  %v132 = vunpack.c.h.b16 %v46
  %v133 = vunpack.c.l.b16 %v47
  %v134 = vunpack.c.h.b16 %v47
  %v135 = vunpack.c.l.b16 %v48
  %v136 = vunpack.c.h.b16 %v48
  %v137 = vunpack.c.l.b16 %v49
  %v138 = vunpack.c.h.b16 %v49
  %v139 = vunpack.c.l.b16 %v50
  %v140 = vunpack.c.h.b16 %v50
  %v141 = vunpack.c.l.b16 %v51
  %v142 = vunpack.c.h.b16 %v51
  %v143 = vunpack.c.l.b16 %v52
  %v144 = vunpack.c.h.b16 %v52
  %v145 = vunpack.c.l.b16 %v53
  %v146 = vunpack.c.h.b16 %v53
  %v147 = vunpack.c.l.b16 %v54
  %v148 = vunpack.c.h.b16 %v54
  %v149 = vunpack.c.l.b16 %v55
  %v150 = vunpack.c.h.b16 %v55
  %v151 = vunpack.c.l.b16 %v56
  %v152 = vunpack.c.h.b16 %v56
  %v153 = vpack.c.b16 %v93, %v89
  %v154 = vpack.c.b16 %v94, %v90
  %v155 = vpack.c.b16 %v95, %v91
  %v156 = vpack.c.b16 %v96, %v92
  %v157 = vpack.c.b16 %v101, %v97
  %v158 = vpack.c.b16 %v102, %v98
  %v159 = vpack.c.b16 %v103, %v99
  %v160 = vpack.c.b16 %v104, %v100
  %v161 = vpack.c.b16 %v109, %v105
  %v162 = vpack.c.b16 %v110, %v106
  %v163 = vpack.c.b16 %v111, %v107
  %v164 = vpack.c.b16 %v112, %v108
  %v165 = vpack.c.b16 %v117, %v113
  %v166 = vpack.c.b16 %v118, %v114
  %v167 = vpack.c.b16 %v119, %v115
  %v168 = vpack.c.b16 %v120, %v116
  %v169 = vpack.c.b16 %v125, %v121
  %v170 = vpack.c.b16 %v126, %v122
  %v171 = vpack.c.b16 %v127, %v123
  %v172 = vpack.c.b16 %v128, %v124
  %v173 = vpack.c.b16 %v133, %v129
  %v174 = vpack.c.b16 %v134, %v130
  %v175 = vpack.c.b16 %v135, %v131
  %v176 = vpack.c.b16 %v136, %v132
  %v177 = vpack.c.b16 %v141, %v137
  %v178 = vpack.c.b16 %v142, %v138
  %v179 = vpack.c.b16 %v143, %v139
  %v180 = vpack.c.b16 %v144, %v140
  %v181 = vpack.c.b16 %v149, %v145
  %v182 = vpack.c.b16 %v150, %v146
  %v183 = vpack.c.b16 %v151, %v147
  %v184 = vpack.c.b16 %v152, %v148
  %217 = vmatprep.subr.bf16.mxu0 %v182
  %218 = vmatpush1.bf16.msra.mxu0 %v181
  %219 = vmatprep.subr.bf16.mxu0 %v178
  %220 = vmatpush1.bf16.msra.mxu0 %v177
  %221 = vmatprep.subr.bf16.mxu0 %v174
  %222 = vmatpush1.bf16.msra.mxu0 %v173
  %223 = vmatprep.subr.bf16.mxu0 %v170
  %224 = vmatpush1.bf16.msra.mxu0 %v169
  %225 = vmatprep.subr.bf16.mxu0 %v166
  %226 = vmatpush1.bf16.msra.mxu0 %v165
  %227 = vmatprep.subr.bf16.mxu0 %v162
  %228 = vmatpush1.bf16.msra.mxu0 %v161
  %229 = vmatprep.subr.bf16.mxu0 %v158
  %230 = vmatpush1.bf16.msra.mxu0 %v157
  %231 = vmatprep.subr.bf16.mxu0 %v154
  %232 = vmatpush1.bf16.msra.mxu0 %v153
  %233 = vmatprep.subr.bf16.mxu0 0
  %234 = vmatpush2.bf16.msra.mxu0 0
  %235 = vmatprep.subr.bf16.mxu0 0
  %236 = vmatpush2.bf16.msra.mxu0 0
  %237 = vmatprep.subr.bf16.mxu0 0
  %238 = vmatpush2.bf16.msra.mxu0 0
  %239 = vmatprep.subr.bf16.mxu0 0
  %240 = vmatpush2.bf16.msra.mxu0 0
  %241 = vmatprep.subr.bf16.mxu0 0
  %242 = vmatpush2.bf16.msra.mxu0 0
  %243 = vmatprep.subr.bf16.mxu0 0
  %244 = vmatpush2.bf16.msra.mxu0 0
  %245 = vmatprep.subr.bf16.mxu0 0
  %246 = vmatpush2.bf16.msra.mxu0 0
  %247 = vmatprep.subr.bf16.mxu0 0
  %248 = vmatpush2.bf16.msra.mxu0 0
  %249 = vmatprep.mubr.bf16.mxu0 0
  %250 = vmatmul.mubr.bf16.gmra.mxu0 %v24
  %v251 = vpop.f32.mrf.mxu0
  %v252 = vadd.f32 0.0, %v251
  %v253 = vpop.f32.mrf.mxu0
  %v254 = vadd.f32 0.0, %v253
  %v255 = vpop.f32.mrf.mxu0
  %v256 = vpop.f32.mrf.mxu0
  %257 = vdwg.mxu0
  %258 = vmatprep.subr.bf16.mxu0 %v184
  %259 = vmatpush1.bf16.msra.mxu0 %v183
  %260 = vmatprep.subr.bf16.mxu0 %v180
  %261 = vmatpush1.bf16.msra.mxu0 %v179
  %262 = vmatprep.subr.bf16.mxu0 %v176
  %263 = vmatpush1.bf16.msra.mxu0 %v175
  %264 = vmatprep.subr.bf16.mxu0 %v172
  %265 = vmatpush1.bf16.msra.mxu0 %v171
  %266 = vmatprep.subr.bf16.mxu0 %v168
  %267 = vmatpush1.bf16.msra.mxu0 %v167
  %268 = vmatprep.subr.bf16.mxu0 %v164
  %269 = vmatpush1.bf16.msra.mxu0 %v163
  %270 = vmatprep.subr.bf16.mxu0 %v160
  %271 = vmatpush1.bf16.msra.mxu0 %v159
  %272 = vmatprep.subr.bf16.mxu0 %v156
  %273 = vmatpush1.bf16.msra.mxu0 %v155
  %274 = vmatprep.subr.bf16.mxu0 0
  %275 = vmatpush2.bf16.msra.mxu0 0
  %276 = vmatprep.subr.bf16.mxu0 0
  %277 = vmatpush2.bf16.msra.mxu0 0
  %278 = vmatprep.subr.bf16.mxu0 0
  %279 = vmatpush2.bf16.msra.mxu0 0
  %280 = vmatprep.subr.bf16.mxu0 0
  %281 = vmatpush2.bf16.msra.mxu0 0
  %282 = vmatprep.subr.bf16.mxu0 0
  %283 = vmatpush2.bf16.msra.mxu0 0
  %284 = vmatprep.subr.bf16.mxu0 0
  %285 = vmatpush2.bf16.msra.mxu0 0
  %286 = vmatprep.subr.bf16.mxu0 0
  %287 = vmatpush2.bf16.msra.mxu0 0
  %288 = vmatprep.subr.bf16.mxu0 0
  %289 = vmatpush2.bf16.msra.mxu0 0
  %290 = vmatprep.mubr.bf16.mxu0 0
  %291 = vmatmul.mubr.bf16.gmra.mxu0 %v24
  %v292 = vpop.f32.mrf.mxu0
  %v293 = vadd.f32 0.0, %v292
  %v294 = vpop.f32.mrf.mxu0
  %v295 = vadd.f32 0.0, %v294
  %v296 = vpop.f32.mrf.mxu0
  %v297 = vpop.f32.mrf.mxu0
  %298 = vdwg.mxu0
  %v299 = vadd.f32 %v20, %v252
  %v300 = vadd.f32 %v21, %v254
  %v301 = vadd.f32 %v22, %v293
  %v302 = vadd.f32 %v23, %v295
  %v303 = vxor.u32 %v299, 2147483648
  %v304 = vmul.f32 %v303, 1.442695
  %v305 = vpow.pop %v304
  %v306 = vadd.f32 %v305, 1.0
  %v307 = vrcp.pop %v306
  %v308 = vmul.f32 1.0, %v307
  %v309 = vxor.u32 %v300, 2147483648
  %v310 = vmul.f32 %v309, 1.442695
  %v311 = vpow.pop %v310
  %v312 = vadd.f32 %v311, 1.0
  %v313 = vrcp.pop %v312
  %v314 = vmul.f32 1.0, %v313
  %v315 = vtanh.pop %v301
  %v316 = vxor.u32 %v302, 2147483648
  %v317 = vmul.f32 %v316, 1.442695
  %v318 = vpow.pop %v317
  %v319 = vadd.f32 %v318, 1.0
  %v320 = vrcp.pop %v319
  %v321 = vmul.f32 1.0, %v320
  %v322 = vmul.f32 %v314, %v19
  %v323 = vmul.f32 %v308, %v315
  %v324 = vadd.f32 %v322, %v323
  %v325 = vtanh.pop %v324
  %v326 = vmul.f32 %v321, %v325
  %v328 = vcombine.high %v326, %v326
  %v330 = vunpack.c.l.s4 1966171168
  %v331 = vunpack.c.0.s8 %v330
  %v332 = vlaneseq
  %v333 = vshrl.u32 %v332, 7
  %v334 = vsub.s32 %v331, %v333
  %v335 = vrot.slane %v326, %v334
  %v337 = vunpack.c.l.s4 1966171168
  %v338 = vunpack.c.0.s8 %v337
  %v339 = vlaneseq
  %v340 = vshrl.u32 %v339, 7
  %v341 = vsub.s32 %v338, %v340
  %v342 = vrot.slane %v328, %v341
  %v343 = vcombine.high %v335, %v335
  %v344 = vcombine.high %v342, %v342
  %v346 = vunpack.c.l.s4 1966171168
  %v347 = vunpack.c.0.s8 %v346
  %v348 = vlaneseq
  %v349 = vshrl.u32 %v348, 7
  %v350 = vsub.s32 %v347, %v349
  %v351 = vrot.slane %v335, %v350
  %v353 = vunpack.c.l.s4 1966171168
  %v354 = vunpack.c.0.s8 %v353
  %v355 = vlaneseq
  %v356 = vshrl.u32 %v355, 7
  %v357 = vsub.s32 %v354, %v356
  %v358 = vrot.slane %v342, %v357
  %v360 = vunpack.c.l.s4 1966171168
  %v361 = vunpack.c.0.s8 %v360
  %v362 = vlaneseq
  %v363 = vshrl.u32 %v362, 7
  %v364 = vsub.s32 %v361, %v363
  %v365 = vrot.slane %v343, %v364
  %v367 = vunpack.c.l.s4 1966171168
  %v368 = vunpack.c.0.s8 %v367
  %v369 = vlaneseq
  %v370 = vshrl.u32 %v369, 7
  %v371 = vsub.s32 %v368, %v370
  %v372 = vrot.slane %v344, %v371
  %v373 = vcombine.high %v351, %v351
  %v374 = vcombine.high %v358, %v358
  %v375 = vcombine.high %v365, %v365
  %v376 = vcombine.high %v372, %v372
  %v385 = vpack.c.bf16 %v351, %v351
  %v386 = vpack.c.bf16 %v365, %v365
  %v387 = vpack.c.bf16 %v373, %v373
  %v388 = vpack.c.bf16 %v375, %v375
  %v389 = vpack.c.bf16 %v358, %v358
  %v390 = vpack.c.bf16 %v372, %v372
  %v391 = vpack.c.bf16 %v374, %v374
  %v392 = vpack.c.bf16 %v376, %v376
  %vm393 = vcmask 1040384
  %vm394 = vsmask.f32 256
  %vm395 = vmand %vm393, %vm394
  %v396 = vld [vmem:[%s4] sm:$0x1]
  %v397 = vsel %vm395, %v385, %v396
  %398 = vst [vmem:[%s4] sm:$0x1] %v397
  %v399 = vld [vmem:[%s4 + $0x4] sm:$0x1]
  %v400 = vsel %vm395, %v386, %v399
  %401 = vst [vmem:[%s4 + $0x4] sm:$0x1] %v400
  %v402 = vld [vmem:[%s4 + $0x8] sm:$0x1]
  %v403 = vsel %vm395, %v387, %v402
  %404 = vst [vmem:[%s4 + $0x8] sm:$0x1] %v403
  %v405 = vld [vmem:[%s4 + $0xc] sm:$0x1]
  %v406 = vsel %vm395, %v388, %v405
  %407 = vst [vmem:[%s4 + $0xc] sm:$0x1] %v406
  %v408 = vld [vmem:[%s4 + $0x10] sm:$0x1]
  %v409 = vsel %vm395, %v389, %v408
  %410 = vst [vmem:[%s4 + $0x10] sm:$0x1] %v409
  %v411 = vld [vmem:[%s4 + $0x14] sm:$0x1]
  %v412 = vsel %vm395, %v390, %v411
  %413 = vst [vmem:[%s4 + $0x14] sm:$0x1] %v412
  %v414 = vld [vmem:[%s4 + $0x18] sm:$0x1]
  %v415 = vsel %vm395, %v391, %v414
  %416 = vst [vmem:[%s4 + $0x18] sm:$0x1] %v415
  %v417 = vld [vmem:[%s4 + $0x1c] sm:$0x1]
  %v418 = vsel %vm395, %v392, %v417
  %419 = vst [vmem:[%s4 + $0x1c] sm:$0x1] %v418
  %s420 = scalar_lea.vmem %s0, 32
  %v421 = vld [vmem:[%s420] sm:$0xff]
  %v422 = vld [vmem:[%s420 + $0x8] sm:$0xff]
  %v423 = vld [vmem:[%s420 + $0x10] sm:$0xff]
  %v424 = vld [vmem:[%s420 + $0x18] sm:$0xff]
  %v425 = vpack.c.bf16 %v326, %v326
  %v426 = vld [vmem:[%s3] sm:$0xff]
  %v427 = vld [vmem:[%s3 + $0x8] sm:$0xff]
  %v428 = vld [vmem:[%s3 + $0x10] sm:$0xff]
  %v429 = vld [vmem:[%s3 + $0x18] sm:$0xff]
  %v430 = vld [vmem:[%s3 + $0x20] sm:$0xff]
  %v431 = vld [vmem:[%s3 + $0x28] sm:$0xff]
  %v432 = vld [vmem:[%s3 + $0x30] sm:$0xff]
  %v433 = vld [vmem:[%s3 + $0x38] sm:$0xff]
  %v434 = vld [vmem:[%s3 + $0x40] sm:$0xff]
  %v435 = vld [vmem:[%s3 + $0x48] sm:$0xff]
  %v436 = vld [vmem:[%s3 + $0x50] sm:$0xff]
  %v437 = vld [vmem:[%s3 + $0x58] sm:$0xff]
  %v438 = vld [vmem:[%s3 + $0x60] sm:$0xff]
  %v439 = vld [vmem:[%s3 + $0x68] sm:$0xff]
  %v440 = vld [vmem:[%s3 + $0x70] sm:$0xff]
  %v441 = vld [vmem:[%s3 + $0x78] sm:$0xff]
  %v442 = vld [vmem:[%s3 + $0x80] sm:$0xff]
  %v443 = vld [vmem:[%s3 + $0x88] sm:$0xff]
  %v444 = vld [vmem:[%s3 + $0x90] sm:$0xff]
  %v445 = vld [vmem:[%s3 + $0x98] sm:$0xff]
  %v446 = vld [vmem:[%s3 + $0xa0] sm:$0xff]
  %v447 = vld [vmem:[%s3 + $0xa8] sm:$0xff]
  %v448 = vld [vmem:[%s3 + $0xb0] sm:$0xff]
  %v449 = vld [vmem:[%s3 + $0xb8] sm:$0xff]
  %v450 = vld [vmem:[%s3 + $0xc0] sm:$0xff]
  %v451 = vld [vmem:[%s3 + $0xc8] sm:$0xff]
  %v452 = vld [vmem:[%s3 + $0xd0] sm:$0xff]
  %v453 = vld [vmem:[%s3 + $0xd8] sm:$0xff]
  %v454 = vld [vmem:[%s3 + $0xe0] sm:$0xff]
  %v455 = vld [vmem:[%s3 + $0xe8] sm:$0xff]
  %v456 = vld [vmem:[%s3 + $0xf0] sm:$0xff]
  %v457 = vld [vmem:[%s3 + $0xf8] sm:$0xff]
  %v490 = vunpack.c.l.b16 %v426
  %v491 = vunpack.c.h.b16 %v426
  %v492 = vunpack.c.l.b16 %v427
  %v493 = vunpack.c.h.b16 %v427
  %v494 = vunpack.c.l.b16 %v428
  %v495 = vunpack.c.h.b16 %v428
  %v496 = vunpack.c.l.b16 %v429
  %v497 = vunpack.c.h.b16 %v429
  %v498 = vunpack.c.l.b16 %v430
  %v499 = vunpack.c.h.b16 %v430
  %v500 = vunpack.c.l.b16 %v431
  %v501 = vunpack.c.h.b16 %v431
  %v502 = vunpack.c.l.b16 %v432
  %v503 = vunpack.c.h.b16 %v432
  %v504 = vunpack.c.l.b16 %v433
  %v505 = vunpack.c.h.b16 %v433
  %v506 = vunpack.c.l.b16 %v434
  %v507 = vunpack.c.h.b16 %v434
  %v508 = vunpack.c.l.b16 %v435
  %v509 = vunpack.c.h.b16 %v435
  %v510 = vunpack.c.l.b16 %v436
  %v511 = vunpack.c.h.b16 %v436
  %v512 = vunpack.c.l.b16 %v437
  %v513 = vunpack.c.h.b16 %v437
  %v514 = vunpack.c.l.b16 %v438
  %v515 = vunpack.c.h.b16 %v438
  %v516 = vunpack.c.l.b16 %v439
  %v517 = vunpack.c.h.b16 %v439
  %v518 = vunpack.c.l.b16 %v440
  %v519 = vunpack.c.h.b16 %v440
  %v520 = vunpack.c.l.b16 %v441
  %v521 = vunpack.c.h.b16 %v441
  %v522 = vunpack.c.l.b16 %v442
  %v523 = vunpack.c.h.b16 %v442
  %v524 = vunpack.c.l.b16 %v443
  %v525 = vunpack.c.h.b16 %v443
  %v526 = vunpack.c.l.b16 %v444
  %v527 = vunpack.c.h.b16 %v444
  %v528 = vunpack.c.l.b16 %v445
  %v529 = vunpack.c.h.b16 %v445
  %v530 = vunpack.c.l.b16 %v446
  %v531 = vunpack.c.h.b16 %v446
  %v532 = vunpack.c.l.b16 %v447
  %v533 = vunpack.c.h.b16 %v447
  %v534 = vunpack.c.l.b16 %v448
  %v535 = vunpack.c.h.b16 %v448
  %v536 = vunpack.c.l.b16 %v449
  %v537 = vunpack.c.h.b16 %v449
  %v538 = vunpack.c.l.b16 %v450
  %v539 = vunpack.c.h.b16 %v450
  %v540 = vunpack.c.l.b16 %v451
  %v541 = vunpack.c.h.b16 %v451
  %v542 = vunpack.c.l.b16 %v452
  %v543 = vunpack.c.h.b16 %v452
  %v544 = vunpack.c.l.b16 %v453
  %v545 = vunpack.c.h.b16 %v453
  %v546 = vunpack.c.l.b16 %v454
  %v547 = vunpack.c.h.b16 %v454
  %v548 = vunpack.c.l.b16 %v455
  %v549 = vunpack.c.h.b16 %v455
  %v550 = vunpack.c.l.b16 %v456
  %v551 = vunpack.c.h.b16 %v456
  %v552 = vunpack.c.l.b16 %v457
  %v553 = vunpack.c.h.b16 %v457
  %v554 = vpack.c.b16 %v494, %v490
  %v555 = vpack.c.b16 %v495, %v491
  %v556 = vpack.c.b16 %v496, %v492
  %v557 = vpack.c.b16 %v497, %v493
  %v558 = vpack.c.b16 %v502, %v498
  %v559 = vpack.c.b16 %v503, %v499
  %v560 = vpack.c.b16 %v504, %v500
  %v561 = vpack.c.b16 %v505, %v501
  %v562 = vpack.c.b16 %v510, %v506
  %v563 = vpack.c.b16 %v511, %v507
  %v564 = vpack.c.b16 %v512, %v508
  %v565 = vpack.c.b16 %v513, %v509
  %v566 = vpack.c.b16 %v518, %v514
  %v567 = vpack.c.b16 %v519, %v515
  %v568 = vpack.c.b16 %v520, %v516
  %v569 = vpack.c.b16 %v521, %v517
  %v570 = vpack.c.b16 %v526, %v522
  %v571 = vpack.c.b16 %v527, %v523
  %v572 = vpack.c.b16 %v528, %v524
  %v573 = vpack.c.b16 %v529, %v525
  %v574 = vpack.c.b16 %v534, %v530
  %v575 = vpack.c.b16 %v535, %v531
  %v576 = vpack.c.b16 %v536, %v532
  %v577 = vpack.c.b16 %v537, %v533
  %v578 = vpack.c.b16 %v542, %v538
  %v579 = vpack.c.b16 %v543, %v539
  %v580 = vpack.c.b16 %v544, %v540
  %v581 = vpack.c.b16 %v545, %v541
  %v582 = vpack.c.b16 %v550, %v546
  %v583 = vpack.c.b16 %v551, %v547
  %v584 = vpack.c.b16 %v552, %v548
  %v585 = vpack.c.b16 %v553, %v549
  %618 = vmatprep.subr.bf16.mxu0 %v583
  %619 = vmatpush1.bf16.msra.mxu0 %v582
  %620 = vmatprep.subr.bf16.mxu0 %v579
  %621 = vmatpush1.bf16.msra.mxu0 %v578
  %622 = vmatprep.subr.bf16.mxu0 %v575
  %623 = vmatpush1.bf16.msra.mxu0 %v574
  %624 = vmatprep.subr.bf16.mxu0 %v571
  %625 = vmatpush1.bf16.msra.mxu0 %v570
  %626 = vmatprep.subr.bf16.mxu0 %v567
  %627 = vmatpush1.bf16.msra.mxu0 %v566
  %628 = vmatprep.subr.bf16.mxu0 %v563
  %629 = vmatpush1.bf16.msra.mxu0 %v562
  %630 = vmatprep.subr.bf16.mxu0 %v559
  %631 = vmatpush1.bf16.msra.mxu0 %v558
  %632 = vmatprep.subr.bf16.mxu0 %v555
  %633 = vmatpush1.bf16.msra.mxu0 %v554
  %634 = vmatprep.subr.bf16.mxu0 0
  %635 = vmatpush2.bf16.msra.mxu0 0
  %636 = vmatprep.subr.bf16.mxu0 0
  %637 = vmatpush2.bf16.msra.mxu0 0
  %638 = vmatprep.subr.bf16.mxu0 0
  %639 = vmatpush2.bf16.msra.mxu0 0
  %640 = vmatprep.subr.bf16.mxu0 0
  %641 = vmatpush2.bf16.msra.mxu0 0
  %642 = vmatprep.subr.bf16.mxu0 0
  %643 = vmatpush2.bf16.msra.mxu0 0
  %644 = vmatprep.subr.bf16.mxu0 0
  %645 = vmatpush2.bf16.msra.mxu0 0
  %646 = vmatprep.subr.bf16.mxu0 0
  %647 = vmatpush2.bf16.msra.mxu0 0
  %648 = vmatprep.subr.bf16.mxu0 0
  %649 = vmatpush2.bf16.msra.mxu0 0
  %650 = vmatprep.mubr.bf16.mxu0 0
  %651 = vmatmul.mubr.bf16.gmra.mxu0 %v425
  %v652 = vpop.f32.mrf.mxu0
  %v653 = vadd.f32 0.0, %v652
  %v654 = vpop.f32.mrf.mxu0
  %v655 = vadd.f32 0.0, %v654
  %v656 = vpop.f32.mrf.mxu0
  %v657 = vpop.f32.mrf.mxu0
  %658 = vdwg.mxu0
  %659 = vmatprep.subr.bf16.mxu0 %v585
  %660 = vmatpush1.bf16.msra.mxu0 %v584
  %661 = vmatprep.subr.bf16.mxu0 %v581
  %662 = vmatpush1.bf16.msra.mxu0 %v580
  %663 = vmatprep.subr.bf16.mxu0 %v577
  %664 = vmatpush1.bf16.msra.mxu0 %v576
  %665 = vmatprep.subr.bf16.mxu0 %v573
  %666 = vmatpush1.bf16.msra.mxu0 %v572
  %667 = vmatprep.subr.bf16.mxu0 %v569
  %668 = vmatpush1.bf16.msra.mxu0 %v568
  %669 = vmatprep.subr.bf16.mxu0 %v565
  %670 = vmatpush1.bf16.msra.mxu0 %v564
  %671 = vmatprep.subr.bf16.mxu0 %v561
  %672 = vmatpush1.bf16.msra.mxu0 %v560
  %673 = vmatprep.subr.bf16.mxu0 %v557
  %674 = vmatpush1.bf16.msra.mxu0 %v556
  %675 = vmatprep.subr.bf16.mxu0 0
  %676 = vmatpush2.bf16.msra.mxu0 0
  %677 = vmatprep.subr.bf16.mxu0 0
  %678 = vmatpush2.bf16.msra.mxu0 0
  %679 = vmatprep.subr.bf16.mxu0 0
  %680 = vmatpush2.bf16.msra.mxu0 0
  %681 = vmatprep.subr.bf16.mxu0 0
  %682 = vmatpush2.bf16.msra.mxu0 0
  %683 = vmatprep.subr.bf16.mxu0 0
  %684 = vmatpush2.bf16.msra.mxu0 0
  %685 = vmatprep.subr.bf16.mxu0 0
  %686 = vmatpush2.bf16.msra.mxu0 0
  %687 = vmatprep.subr.bf16.mxu0 0
  %688 = vmatpush2.bf16.msra.mxu0 0
  %689 = vmatprep.subr.bf16.mxu0 0
  %690 = vmatpush2.bf16.msra.mxu0 0
  %691 = vmatprep.mubr.bf16.mxu0 0
  %692 = vmatmul.mubr.bf16.gmra.mxu0 %v425
  %v693 = vpop.f32.mrf.mxu0
  %v694 = vadd.f32 0.0, %v693
  %v695 = vpop.f32.mrf.mxu0
  %v696 = vadd.f32 0.0, %v695
  %v697 = vpop.f32.mrf.mxu0
  %v698 = vpop.f32.mrf.mxu0
  %699 = vdwg.mxu0
  %v700 = vadd.f32 %v421, %v653
  %v701 = vadd.f32 %v422, %v655
  %v702 = vadd.f32 %v423, %v694
  %v703 = vadd.f32 %v424, %v696
  %v704 = vxor.u32 %v700, 2147483648
  %v705 = vmul.f32 %v704, 1.442695
  %v706 = vpow.pop %v705
  %v707 = vadd.f32 %v706, 1.0
  %v708 = vrcp.pop %v707
  %v709 = vmul.f32 1.0, %v708
  %v710 = vxor.u32 %v701, 2147483648
  %v711 = vmul.f32 %v710, 1.442695
  %v712 = vpow.pop %v711
  %v713 = vadd.f32 %v712, 1.0
  %v714 = vrcp.pop %v713
  %v715 = vmul.f32 1.0, %v714
  %v716 = vtanh.pop %v702
  %v717 = vxor.u32 %v703, 2147483648
  %v718 = vmul.f32 %v717, 1.442695
  %v719 = vpow.pop %v718
  %v720 = vadd.f32 %v719, 1.0
  %v721 = vrcp.pop %v720
  %v722 = vmul.f32 1.0, %v721
  %v723 = vmul.f32 %v715, %v324
  %v724 = vmul.f32 %v709, %v716
  %v725 = vadd.f32 %v723, %v724
  %v726 = vtanh.pop %v725
  %v727 = vmul.f32 %v722, %v726
  %v729 = vcombine.high %v727, %v727
  %v731 = vunpack.c.l.s4 1966171168
  %v732 = vunpack.c.0.s8 %v731
  %v733 = vlaneseq
  %v734 = vshrl.u32 %v733, 7
  %v735 = vsub.s32 %v732, %v734
  %v736 = vrot.slane %v727, %v735
  %v738 = vunpack.c.l.s4 1966171168
  %v739 = vunpack.c.0.s8 %v738
  %v740 = vlaneseq
  %v741 = vshrl.u32 %v740, 7
  %v742 = vsub.s32 %v739, %v741
  %v743 = vrot.slane %v729, %v742
  %v744 = vcombine.high %v736, %v736
  %v745 = vcombine.high %v743, %v743
  %v747 = vunpack.c.l.s4 1966171168
  %v748 = vunpack.c.0.s8 %v747
  %v749 = vlaneseq
  %v750 = vshrl.u32 %v749, 7
  %v751 = vsub.s32 %v748, %v750
  %v752 = vrot.slane %v736, %v751
  %v754 = vunpack.c.l.s4 1966171168
  %v755 = vunpack.c.0.s8 %v754
  %v756 = vlaneseq
  %v757 = vshrl.u32 %v756, 7
  %v758 = vsub.s32 %v755, %v757
  %v759 = vrot.slane %v743, %v758
  %v761 = vunpack.c.l.s4 1966171168
  %v762 = vunpack.c.0.s8 %v761
  %v763 = vlaneseq
  %v764 = vshrl.u32 %v763, 7
  %v765 = vsub.s32 %v762, %v764
  %v766 = vrot.slane %v744, %v765
  %v768 = vunpack.c.l.s4 1966171168
  %v769 = vunpack.c.0.s8 %v768
  %v770 = vlaneseq
  %v771 = vshrl.u32 %v770, 7
  %v772 = vsub.s32 %v769, %v771
  %v773 = vrot.slane %v745, %v772
  %v774 = vcombine.high %v752, %v752
  %v775 = vcombine.high %v759, %v759
  %v776 = vcombine.high %v766, %v766
  %v777 = vcombine.high %v773, %v773
  %v786 = vpack.c.bf16 %v752, %v752
  %v787 = vpack.c.bf16 %v766, %v766
  %v788 = vpack.c.bf16 %v774, %v774
  %v789 = vpack.c.bf16 %v776, %v776
  %v790 = vpack.c.bf16 %v759, %v759
  %v791 = vpack.c.bf16 %v773, %v773
  %v792 = vpack.c.bf16 %v775, %v775
  %v793 = vpack.c.bf16 %v777, %v777
  %v802 = vunpack.c.l.b16 %v786
  %v803 = vunpack.c.l.b16 %v787
  %v804 = vunpack.c.l.b16 %v788
  %v805 = vunpack.c.l.b16 %v789
  %v806 = vunpack.c.l.b16 %v790
  %v807 = vunpack.c.l.b16 %v791
  %v808 = vunpack.c.l.b16 %v792
  %v809 = vunpack.c.l.b16 %v793
  %v810 = vpack.c.b16 %v802, %v802
  %v811 = vpack.c.b16 %v803, %v803
  %v812 = vpack.c.b16 %v804, %v804
  %v813 = vpack.c.b16 %v805, %v805
  %v814 = vpack.c.b16 %v806, %v806
  %v815 = vpack.c.b16 %v807, %v807
  %v816 = vpack.c.b16 %v808, %v808
  %v817 = vpack.c.b16 %v809, %v809
  %v819 = vshll.u32 %v810, 16
  %v822 = vshll.u32 %v811, 16
  %v825 = vshll.u32 %v812, 16
  %v828 = vshll.u32 %v813, 16
  %v831 = vshll.u32 %v814, 16
  %v834 = vshll.u32 %v815, 16
  %v837 = vshll.u32 %v816, 16
  %v840 = vshll.u32 %v817, 16
  %vm850 = vsmask.f32 7938
  %vm851 = vmand %vm393, %vm850
  %v852 = vld [vmem:[%s4] sm:$0x1]
  %v853 = vsel %vm851, %v819, %v852
  %854 = vst [vmem:[%s4] sm:$0x1] %v853
  %v855 = vld [vmem:[%s4 + $0x4] sm:$0x1]
  %v856 = vsel %vm851, %v822, %v855
  %857 = vst [vmem:[%s4 + $0x4] sm:$0x1] %v856
  %v858 = vld [vmem:[%s4 + $0x8] sm:$0x1]
  %v859 = vsel %vm851, %v825, %v858
  %860 = vst [vmem:[%s4 + $0x8] sm:$0x1] %v859
  %v861 = vld [vmem:[%s4 + $0xc] sm:$0x1]
  %v862 = vsel %vm851, %v828, %v861
  %863 = vst [vmem:[%s4 + $0xc] sm:$0x1] %v862
  %v864 = vld [vmem:[%s4 + $0x10] sm:$0x1]
  %v865 = vsel %vm851, %v831, %v864
  %866 = vst [vmem:[%s4 + $0x10] sm:$0x1] %v865
  %v867 = vld [vmem:[%s4 + $0x14] sm:$0x1]
  %v868 = vsel %vm851, %v834, %v867
  %869 = vst [vmem:[%s4 + $0x14] sm:$0x1] %v868
  %v870 = vld [vmem:[%s4 + $0x18] sm:$0x1]
  %v871 = vsel %vm851, %v837, %v870
  %872 = vst [vmem:[%s4 + $0x18] sm:$0x1] %v871
  %v873 = vld [vmem:[%s4 + $0x1c] sm:$0x1]
  %v874 = vsel %vm851, %v840, %v873
  %875 = vst [vmem:[%s4 + $0x1c] sm:$0x1] %v874
  %s876 = scalar_lea.vmem %s0, 64
  %v877 = vld [vmem:[%s876] sm:$0xff]
  %v878 = vld [vmem:[%s876 + $0x8] sm:$0xff]
  %v879 = vld [vmem:[%s876 + $0x10] sm:$0xff]
  %v880 = vld [vmem:[%s876 + $0x18] sm:$0xff]
  %v881 = vpack.c.bf16 %v727, %v727
  %v882 = vld [vmem:[%s3] sm:$0xff]
  %v883 = vld [vmem:[%s3 + $0x8] sm:$0xff]
  %v884 = vld [vmem:[%s3 + $0x10] sm:$0xff]
  %v885 = vld [vmem:[%s3 + $0x18] sm:$0xff]
  %v886 = vld [vmem:[%s3 + $0x20] sm:$0xff]
  %v887 = vld [vmem:[%s3 + $0x28] sm:$0xff]
  %v888 = vld [vmem:[%s3 + $0x30] sm:$0xff]
  %v889 = vld [vmem:[%s3 + $0x38] sm:$0xff]
  %v890 = vld [vmem:[%s3 + $0x40] sm:$0xff]
  %v891 = vld [vmem:[%s3 + $0x48] sm:$0xff]
  %v892 = vld [vmem:[%s3 + $0x50] sm:$0xff]
  %v893 = vld [vmem:[%s3 + $0x58] sm:$0xff]
  %v894 = vld [vmem:[%s3 + $0x60] sm:$0xff]
  %v895 = vld [vmem:[%s3 + $0x68] sm:$0xff]
  %v896 = vld [vmem:[%s3 + $0x70] sm:$0xff]
  %v897 = vld [vmem:[%s3 + $0x78] sm:$0xff]
  %v898 = vld [vmem:[%s3 + $0x80] sm:$0xff]
  %v899 = vld [vmem:[%s3 + $0x88] sm:$0xff]
  %v900 = vld [vmem:[%s3 + $0x90] sm:$0xff]
  %v901 = vld [vmem:[%s3 + $0x98] sm:$0xff]
  %v902 = vld [vmem:[%s3 + $0xa0] sm:$0xff]
  %v903 = vld [vmem:[%s3 + $0xa8] sm:$0xff]
  %v904 = vld [vmem:[%s3 + $0xb0] sm:$0xff]
  %v905 = vld [vmem:[%s3 + $0xb8] sm:$0xff]
  %v906 = vld [vmem:[%s3 + $0xc0] sm:$0xff]
  %v907 = vld [vmem:[%s3 + $0xc8] sm:$0xff]
  %v908 = vld [vmem:[%s3 + $0xd0] sm:$0xff]
  %v909 = vld [vmem:[%s3 + $0xd8] sm:$0xff]
  %v910 = vld [vmem:[%s3 + $0xe0] sm:$0xff]
  %v911 = vld [vmem:[%s3 + $0xe8] sm:$0xff]
  %v912 = vld [vmem:[%s3 + $0xf0] sm:$0xff]
  %v913 = vld [vmem:[%s3 + $0xf8] sm:$0xff]
  %v946 = vunpack.c.l.b16 %v882
  %v947 = vunpack.c.h.b16 %v882
  %v948 = vunpack.c.l.b16 %v883
  %v949 = vunpack.c.h.b16 %v883
  %v950 = vunpack.c.l.b16 %v884
  %v951 = vunpack.c.h.b16 %v884
  %v952 = vunpack.c.l.b16 %v885
  %v953 = vunpack.c.h.b16 %v885
  %v954 = vunpack.c.l.b16 %v886
  %v955 = vunpack.c.h.b16 %v886
  %v956 = vunpack.c.l.b16 %v887
  %v957 = vunpack.c.h.b16 %v887
  %v958 = vunpack.c.l.b16 %v888
  %v959 = vunpack.c.h.b16 %v888
  %v960 = vunpack.c.l.b16 %v889
  %v961 = vunpack.c.h.b16 %v889
  %v962 = vunpack.c.l.b16 %v890
  %v963 = vunpack.c.h.b16 %v890
  %v964 = vunpack.c.l.b16 %v891
  %v965 = vunpack.c.h.b16 %v891
  %v966 = vunpack.c.l.b16 %v892
  %v967 = vunpack.c.h.b16 %v892
  %v968 = vunpack.c.l.b16 %v893
  %v969 = vunpack.c.h.b16 %v893
  %v970 = vunpack.c.l.b16 %v894
  %v971 = vunpack.c.h.b16 %v894
  %v972 = vunpack.c.l.b16 %v895
  %v973 = vunpack.c.h.b16 %v895
  %v974 = vunpack.c.l.b16 %v896
  %v975 = vunpack.c.h.b16 %v896
  %v976 = vunpack.c.l.b16 %v897
  %v977 = vunpack.c.h.b16 %v897
  %v978 = vunpack.c.l.b16 %v898
  %v979 = vunpack.c.h.b16 %v898
  %v980 = vunpack.c.l.b16 %v899
  %v981 = vunpack.c.h.b16 %v899
  %v982 = vunpack.c.l.b16 %v900
  %v983 = vunpack.c.h.b16 %v900
  %v984 = vunpack.c.l.b16 %v901
  %v985 = vunpack.c.h.b16 %v901
  %v986 = vunpack.c.l.b16 %v902
  %v987 = vunpack.c.h.b16 %v902
  %v988 = vunpack.c.l.b16 %v903
  %v989 = vunpack.c.h.b16 %v903
  %v990 = vunpack.c.l.b16 %v904
  %v991 = vunpack.c.h.b16 %v904
  %v992 = vunpack.c.l.b16 %v905
  %v993 = vunpack.c.h.b16 %v905
  %v994 = vunpack.c.l.b16 %v906
  %v995 = vunpack.c.h.b16 %v906
  %v996 = vunpack.c.l.b16 %v907
  %v997 = vunpack.c.h.b16 %v907
  %v998 = vunpack.c.l.b16 %v908
  %v999 = vunpack.c.h.b16 %v908
  %v1000 = vunpack.c.l.b16 %v909
  %v1001 = vunpack.c.h.b16 %v909
  %v1002 = vunpack.c.l.b16 %v910
  %v1003 = vunpack.c.h.b16 %v910
  %v1004 = vunpack.c.l.b16 %v911
  %v1005 = vunpack.c.h.b16 %v911
  %v1006 = vunpack.c.l.b16 %v912
  %v1007 = vunpack.c.h.b16 %v912
  %v1008 = vunpack.c.l.b16 %v913
  %v1009 = vunpack.c.h.b16 %v913
  %v1010 = vpack.c.b16 %v950, %v946
  %v1011 = vpack.c.b16 %v951, %v947
  %v1012 = vpack.c.b16 %v952, %v948
  %v1013 = vpack.c.b16 %v953, %v949
  %v1014 = vpack.c.b16 %v958, %v954
  %v1015 = vpack.c.b16 %v959, %v955
  %v1016 = vpack.c.b16 %v960, %v956
  %v1017 = vpack.c.b16 %v961, %v957
  %v1018 = vpack.c.b16 %v966, %v962
  %v1019 = vpack.c.b16 %v967, %v963
  %v1020 = vpack.c.b16 %v968, %v964
  %v1021 = vpack.c.b16 %v969, %v965
  %v1022 = vpack.c.b16 %v974, %v970
  %v1023 = vpack.c.b16 %v975, %v971
  %v1024 = vpack.c.b16 %v976, %v972
  %v1025 = vpack.c.b16 %v977, %v973
  %v1026 = vpack.c.b16 %v982, %v978
  %v1027 = vpack.c.b16 %v983, %v979
  %v1028 = vpack.c.b16 %v984, %v980
  %v1029 = vpack.c.b16 %v985, %v981
  %v1030 = vpack.c.b16 %v990, %v986
  %v1031 = vpack.c.b16 %v991, %v987
  %v1032 = vpack.c.b16 %v992, %v988
  %v1033 = vpack.c.b16 %v993, %v989
  %v1034 = vpack.c.b16 %v998, %v994
  %v1035 = vpack.c.b16 %v999, %v995
  %v1036 = vpack.c.b16 %v1000, %v996
  %v1037 = vpack.c.b16 %v1001, %v997
  %v1038 = vpack.c.b16 %v1006, %v1002
  %v1039 = vpack.c.b16 %v1007, %v1003
  %v1040 = vpack.c.b16 %v1008, %v1004
  %v1041 = vpack.c.b16 %v1009, %v1005
  %1074 = vmatprep.subr.bf16.mxu0 %v1039
  %1075 = vmatpush1.bf16.msra.mxu0 %v1038
  %1076 = vmatprep.subr.bf16.mxu0 %v1035
  %1077 = vmatpush1.bf16.msra.mxu0 %v1034
  %1078 = vmatprep.subr.bf16.mxu0 %v1031
  %1079 = vmatpush1.bf16.msra.mxu0 %v1030
  %1080 = vmatprep.subr.bf16.mxu0 %v1027
  %1081 = vmatpush1.bf16.msra.mxu0 %v1026
  %1082 = vmatprep.subr.bf16.mxu0 %v1023
  %1083 = vmatpush1.bf16.msra.mxu0 %v1022
  %1084 = vmatprep.subr.bf16.mxu0 %v1019
  %1085 = vmatpush1.bf16.msra.mxu0 %v1018
  %1086 = vmatprep.subr.bf16.mxu0 %v1015
  %1087 = vmatpush1.bf16.msra.mxu0 %v1014
  %1088 = vmatprep.subr.bf16.mxu0 %v1011
  %1089 = vmatpush1.bf16.msra.mxu0 %v1010
  %1090 = vmatprep.subr.bf16.mxu0 0
  %1091 = vmatpush2.bf16.msra.mxu0 0
  %1092 = vmatprep.subr.bf16.mxu0 0
  %1093 = vmatpush2.bf16.msra.mxu0 0
  %1094 = vmatprep.subr.bf16.mxu0 0
  %1095 = vmatpush2.bf16.msra.mxu0 0
  %1096 = vmatprep.subr.bf16.mxu0 0
  %1097 = vmatpush2.bf16.msra.mxu0 0
  %1098 = vmatprep.subr.bf16.mxu0 0
  %1099 = vmatpush2.bf16.msra.mxu0 0
  %1100 = vmatprep.subr.bf16.mxu0 0
  %1101 = vmatpush2.bf16.msra.mxu0 0
  %1102 = vmatprep.subr.bf16.mxu0 0
  %1103 = vmatpush2.bf16.msra.mxu0 0
  %1104 = vmatprep.subr.bf16.mxu0 0
  %1105 = vmatpush2.bf16.msra.mxu0 0
  %1106 = vmatprep.mubr.bf16.mxu0 0
  %1107 = vmatmul.mubr.bf16.gmra.mxu0 %v881
  %v1108 = vpop.f32.mrf.mxu0
  %v1109 = vadd.f32 0.0, %v1108
  %v1110 = vpop.f32.mrf.mxu0
  %v1111 = vadd.f32 0.0, %v1110
  %v1112 = vpop.f32.mrf.mxu0
  %v1113 = vpop.f32.mrf.mxu0
  %1114 = vdwg.mxu0
  %1115 = vmatprep.subr.bf16.mxu0 %v1041
  %1116 = vmatpush1.bf16.msra.mxu0 %v1040
  %1117 = vmatprep.subr.bf16.mxu0 %v1037
  %1118 = vmatpush1.bf16.msra.mxu0 %v1036
  %1119 = vmatprep.subr.bf16.mxu0 %v1033
  %1120 = vmatpush1.bf16.msra.mxu0 %v1032
  %1121 = vmatprep.subr.bf16.mxu0 %v1029
  %1122 = vmatpush1.bf16.msra.mxu0 %v1028
  %1123 = vmatprep.subr.bf16.mxu0 %v1025
  %1124 = vmatpush1.bf16.msra.mxu0 %v1024
  %1125 = vmatprep.subr.bf16.mxu0 %v1021
  %1126 = vmatpush1.bf16.msra.mxu0 %v1020
  %1127 = vmatprep.subr.bf16.mxu0 %v1017
  %1128 = vmatpush1.bf16.msra.mxu0 %v1016
  %1129 = vmatprep.subr.bf16.mxu0 %v1013
  %1130 = vmatpush1.bf16.msra.mxu0 %v1012
  %1131 = vmatprep.subr.bf16.mxu0 0
  %1132 = vmatpush2.bf16.msra.mxu0 0
  %1133 = vmatprep.subr.bf16.mxu0 0
  %1134 = vmatpush2.bf16.msra.mxu0 0
  %1135 = vmatprep.subr.bf16.mxu0 0
  %1136 = vmatpush2.bf16.msra.mxu0 0
  %1137 = vmatprep.subr.bf16.mxu0 0
  %1138 = vmatpush2.bf16.msra.mxu0 0
  %1139 = vmatprep.subr.bf16.mxu0 0
  %1140 = vmatpush2.bf16.msra.mxu0 0
  %1141 = vmatprep.subr.bf16.mxu0 0
  %1142 = vmatpush2.bf16.msra.mxu0 0
  %1143 = vmatprep.subr.bf16.mxu0 0
  %1144 = vmatpush2.bf16.msra.mxu0 0
  %1145 = vmatprep.subr.bf16.mxu0 0
  %1146 = vmatpush2.bf16.msra.mxu0 0
  %1147 = vmatprep.mubr.bf16.mxu0 0
  %1148 = vmatmul.mubr.bf16.gmra.mxu0 %v881
  %v1149 = vpop.f32.mrf.mxu0
  %v1150 = vadd.f32 0.0, %v1149
  %v1151 = vpop.f32.mrf.mxu0
  %v1152 = vadd.f32 0.0, %v1151
  %v1153 = vpop.f32.mrf.mxu0
  %v1154 = vpop.f32.mrf.mxu0
  %1155 = vdwg.mxu0
  %v1156 = vadd.f32 %v877, %v1109
  %v1157 = vadd.f32 %v878, %v1111
  %v1158 = vadd.f32 %v879, %v1150
  %v1159 = vadd.f32 %v880, %v1152
  %v1160 = vxor.u32 %v1156, 2147483648
  %v1161 = vmul.f32 %v1160, 1.442695
  %v1162 = vpow.pop %v1161
  %v1163 = vadd.f32 %v1162, 1.0
  %v1164 = vrcp.pop %v1163
  %v1165 = vmul.f32 1.0, %v1164
  %v1166 = vxor.u32 %v1157, 2147483648
  %v1167 = vmul.f32 %v1166, 1.442695
  %v1168 = vpow.pop %v1167
  %v1169 = vadd.f32 %v1168, 1.0
  %v1170 = vrcp.pop %v1169
  %v1171 = vmul.f32 1.0, %v1170
  %v1172 = vtanh.pop %v1158
  %v1173 = vxor.u32 %v1159, 2147483648
  %v1174 = vmul.f32 %v1173, 1.442695
  %v1175 = vpow.pop %v1174
  %v1176 = vadd.f32 %v1175, 1.0
  %v1177 = vrcp.pop %v1176
  %v1178 = vmul.f32 1.0, %v1177
  %v1179 = vmul.f32 %v1171, %v725
  %v1180 = vmul.f32 %v1165, %v1172
  %v1181 = vadd.f32 %v1179, %v1180
  %v1182 = vtanh.pop %v1181
  %v1183 = vmul.f32 %v1178, %v1182
  %v1185 = vcombine.high %v1183, %v1183
  %v1187 = vunpack.c.l.s4 1966171168
  %v1188 = vunpack.c.0.s8 %v1187
  %v1189 = vlaneseq
  %v1190 = vshrl.u32 %v1189, 7
  %v1191 = vsub.s32 %v1188, %v1190
  %v1192 = vrot.slane %v1183, %v1191
  %v1194 = vunpack.c.l.s4 1966171168
  %v1195 = vunpack.c.0.s8 %v1194
  %v1196 = vlaneseq
  %v1197 = vshrl.u32 %v1196, 7
  %v1198 = vsub.s32 %v1195, %v1197
  %v1199 = vrot.slane %v1185, %v1198
  %v1200 = vcombine.high %v1192, %v1192
  %v1201 = vcombine.high %v1199, %v1199
  %v1203 = vunpack.c.l.s4 1966171168
  %v1204 = vunpack.c.0.s8 %v1203
  %v1205 = vlaneseq
  %v1206 = vshrl.u32 %v1205, 7
  %v1207 = vsub.s32 %v1204, %v1206
  %v1208 = vrot.slane %v1192, %v1207
  %v1210 = vunpack.c.l.s4 1966171168
  %v1211 = vunpack.c.0.s8 %v1210
  %v1212 = vlaneseq
  %v1213 = vshrl.u32 %v1212, 7
  %v1214 = vsub.s32 %v1211, %v1213
  %v1215 = vrot.slane %v1199, %v1214
  %v1217 = vunpack.c.l.s4 1966171168
  %v1218 = vunpack.c.0.s8 %v1217
  %v1219 = vlaneseq
  %v1220 = vshrl.u32 %v1219, 7
  %v1221 = vsub.s32 %v1218, %v1220
  %v1222 = vrot.slane %v1200, %v1221
  %v1224 = vunpack.c.l.s4 1966171168
  %v1225 = vunpack.c.0.s8 %v1224
  %v1226 = vlaneseq
  %v1227 = vshrl.u32 %v1226, 7
  %v1228 = vsub.s32 %v1225, %v1227
  %v1229 = vrot.slane %v1201, %v1228
  %v1230 = vcombine.high %v1208, %v1208
  %v1231 = vcombine.high %v1215, %v1215
  %v1232 = vcombine.high %v1222, %v1222
  %v1233 = vcombine.high %v1229, %v1229
  %v1242 = vpack.c.bf16 %v1208, %v1208
  %v1243 = vpack.c.bf16 %v1222, %v1222
  %v1244 = vpack.c.bf16 %v1230, %v1230
  %v1245 = vpack.c.bf16 %v1232, %v1232
  %v1246 = vpack.c.bf16 %v1215, %v1215
  %v1247 = vpack.c.bf16 %v1229, %v1229
  %v1248 = vpack.c.bf16 %v1231, %v1231
  %v1249 = vpack.c.bf16 %v1233, %v1233
  %v1258 = vunpack.c.l.b16 %v1242
  %v1259 = vunpack.c.l.b16 %v1243
  %v1260 = vunpack.c.l.b16 %v1244
  %v1261 = vunpack.c.l.b16 %v1245
  %v1262 = vunpack.c.l.b16 %v1246
  %v1263 = vunpack.c.l.b16 %v1247
  %v1264 = vunpack.c.l.b16 %v1248
  %v1265 = vunpack.c.l.b16 %v1249
  %v1266 = vpack.c.b16 %v1258, %v1258
  %v1267 = vpack.c.b16 %v1259, %v1259
  %v1268 = vpack.c.b16 %v1260, %v1260
  %v1269 = vpack.c.b16 %v1261, %v1261
  %v1270 = vpack.c.b16 %v1262, %v1262
  %v1271 = vpack.c.b16 %v1263, %v1263
  %v1272 = vpack.c.b16 %v1264, %v1264
  %v1273 = vpack.c.b16 %v1265, %v1265
  %v1274 = vrot.slane %v1266, 7
  %v1275 = vrot.slane %v1267, 7
  %v1276 = vrot.slane %v1268, 7
  %v1277 = vrot.slane %v1269, 7
  %v1278 = vrot.slane %v1270, 7
  %v1279 = vrot.slane %v1271, 7
  %v1280 = vrot.slane %v1272, 7
  %v1281 = vrot.slane %v1273, 7
  %vm1290 = vcmask 1041409
  %vm1291 = vsmask.f32 1280
  %vm1292 = vmand %vm1290, %vm1291
  %v1293 = vld [vmem:[%s4] sm:$0x2]
  %v1294 = vsel %vm1292, %v1274, %v1293
  %1295 = vst [vmem:[%s4] sm:$0x2] %v1294
  %v1296 = vld [vmem:[%s4 + $0x4] sm:$0x2]
  %v1297 = vsel %vm1292, %v1275, %v1296
  %1298 = vst [vmem:[%s4 + $0x4] sm:$0x2] %v1297
  %v1299 = vld [vmem:[%s4 + $0x8] sm:$0x2]
  %v1300 = vsel %vm1292, %v1276, %v1299
  %1301 = vst [vmem:[%s4 + $0x8] sm:$0x2] %v1300
  %v1302 = vld [vmem:[%s4 + $0xc] sm:$0x2]
  %v1303 = vsel %vm1292, %v1277, %v1302
  %1304 = vst [vmem:[%s4 + $0xc] sm:$0x2] %v1303
  %v1305 = vld [vmem:[%s4 + $0x10] sm:$0x2]
  %v1306 = vsel %vm1292, %v1278, %v1305
  %1307 = vst [vmem:[%s4 + $0x10] sm:$0x2] %v1306
  %v1308 = vld [vmem:[%s4 + $0x14] sm:$0x2]
  %v1309 = vsel %vm1292, %v1279, %v1308
  %1310 = vst [vmem:[%s4 + $0x14] sm:$0x2] %v1309
  %v1311 = vld [vmem:[%s4 + $0x18] sm:$0x2]
  %v1312 = vsel %vm1292, %v1280, %v1311
  %1313 = vst [vmem:[%s4 + $0x18] sm:$0x2] %v1312
  %v1314 = vld [vmem:[%s4 + $0x1c] sm:$0x2]
  %v1315 = vsel %vm1292, %v1281, %v1314
  %1316 = vst [vmem:[%s4 + $0x1c] sm:$0x2] %v1315
  %s1317 = scalar_lea.vmem %s0, 96
  %v1318 = vld [vmem:[%s1317] sm:$0xff]
  %v1319 = vld [vmem:[%s1317 + $0x8] sm:$0xff]
  %v1320 = vld [vmem:[%s1317 + $0x10] sm:$0xff]
  %v1321 = vld [vmem:[%s1317 + $0x18] sm:$0xff]
  %v1322 = vpack.c.bf16 %v1183, %v1183
  %v1323 = vld [vmem:[%s3] sm:$0xff]
  %v1324 = vld [vmem:[%s3 + $0x8] sm:$0xff]
  %v1325 = vld [vmem:[%s3 + $0x10] sm:$0xff]
  %v1326 = vld [vmem:[%s3 + $0x18] sm:$0xff]
  %v1327 = vld [vmem:[%s3 + $0x20] sm:$0xff]
  %v1328 = vld [vmem:[%s3 + $0x28] sm:$0xff]
  %v1329 = vld [vmem:[%s3 + $0x30] sm:$0xff]
  %v1330 = vld [vmem:[%s3 + $0x38] sm:$0xff]
  %v1331 = vld [vmem:[%s3 + $0x40] sm:$0xff]
  %v1332 = vld [vmem:[%s3 + $0x48] sm:$0xff]
  %v1333 = vld [vmem:[%s3 + $0x50] sm:$0xff]
  %v1334 = vld [vmem:[%s3 + $0x58] sm:$0xff]
  %v1335 = vld [vmem:[%s3 + $0x60] sm:$0xff]
  %v1336 = vld [vmem:[%s3 + $0x68] sm:$0xff]
  %v1337 = vld [vmem:[%s3 + $0x70] sm:$0xff]
  %v1338 = vld [vmem:[%s3 + $0x78] sm:$0xff]
  %v1339 = vld [vmem:[%s3 + $0x80] sm:$0xff]
  %v1340 = vld [vmem:[%s3 + $0x88] sm:$0xff]
  %v1341 = vld [vmem:[%s3 + $0x90] sm:$0xff]
  %v1342 = vld [vmem:[%s3 + $0x98] sm:$0xff]
  %v1343 = vld [vmem:[%s3 + $0xa0] sm:$0xff]
  %v1344 = vld [vmem:[%s3 + $0xa8] sm:$0xff]
  %v1345 = vld [vmem:[%s3 + $0xb0] sm:$0xff]
  %v1346 = vld [vmem:[%s3 + $0xb8] sm:$0xff]
  %v1347 = vld [vmem:[%s3 + $0xc0] sm:$0xff]
  %v1348 = vld [vmem:[%s3 + $0xc8] sm:$0xff]
  %v1349 = vld [vmem:[%s3 + $0xd0] sm:$0xff]
  %v1350 = vld [vmem:[%s3 + $0xd8] sm:$0xff]
  %v1351 = vld [vmem:[%s3 + $0xe0] sm:$0xff]
  %v1352 = vld [vmem:[%s3 + $0xe8] sm:$0xff]
  %v1353 = vld [vmem:[%s3 + $0xf0] sm:$0xff]
  %v1354 = vld [vmem:[%s3 + $0xf8] sm:$0xff]
  %v1387 = vunpack.c.l.b16 %v1323
  %v1388 = vunpack.c.h.b16 %v1323
  %v1389 = vunpack.c.l.b16 %v1324
  %v1390 = vunpack.c.h.b16 %v1324
  %v1391 = vunpack.c.l.b16 %v1325
  %v1392 = vunpack.c.h.b16 %v1325
  %v1393 = vunpack.c.l.b16 %v1326
  %v1394 = vunpack.c.h.b16 %v1326
  %v1395 = vunpack.c.l.b16 %v1327
  %v1396 = vunpack.c.h.b16 %v1327
  %v1397 = vunpack.c.l.b16 %v1328
  %v1398 = vunpack.c.h.b16 %v1328
  %v1399 = vunpack.c.l.b16 %v1329
  %v1400 = vunpack.c.h.b16 %v1329
  %v1401 = vunpack.c.l.b16 %v1330
  %v1402 = vunpack.c.h.b16 %v1330
  %v1403 = vunpack.c.l.b16 %v1331
  %v1404 = vunpack.c.h.b16 %v1331
  %v1405 = vunpack.c.l.b16 %v1332
  %v1406 = vunpack.c.h.b16 %v1332
  %v1407 = vunpack.c.l.b16 %v1333
  %v1408 = vunpack.c.h.b16 %v1333
  %v1409 = vunpack.c.l.b16 %v1334
  %v1410 = vunpack.c.h.b16 %v1334
  %v1411 = vunpack.c.l.b16 %v1335
  %v1412 = vunpack.c.h.b16 %v1335
  %v1413 = vunpack.c.l.b16 %v1336
  %v1414 = vunpack.c.h.b16 %v1336
  %v1415 = vunpack.c.l.b16 %v1337
  %v1416 = vunpack.c.h.b16 %v1337
  %v1417 = vunpack.c.l.b16 %v1338
  %v1418 = vunpack.c.h.b16 %v1338
  %v1419 = vunpack.c.l.b16 %v1339
  %v1420 = vunpack.c.h.b16 %v1339
  %v1421 = vunpack.c.l.b16 %v1340
  %v1422 = vunpack.c.h.b16 %v1340
  %v1423 = vunpack.c.l.b16 %v1341
  %v1424 = vunpack.c.h.b16 %v1341
  %v1425 = vunpack.c.l.b16 %v1342
  %v1426 = vunpack.c.h.b16 %v1342
  %v1427 = vunpack.c.l.b16 %v1343
  %v1428 = vunpack.c.h.b16 %v1343
  %v1429 = vunpack.c.l.b16 %v1344
  %v1430 = vunpack.c.h.b16 %v1344
  %v1431 = vunpack.c.l.b16 %v1345
  %v1432 = vunpack.c.h.b16 %v1345
  %v1433 = vunpack.c.l.b16 %v1346
  %v1434 = vunpack.c.h.b16 %v1346
  %v1435 = vunpack.c.l.b16 %v1347
  %v1436 = vunpack.c.h.b16 %v1347
  %v1437 = vunpack.c.l.b16 %v1348
  %v1438 = vunpack.c.h.b16 %v1348
  %v1439 = vunpack.c.l.b16 %v1349
  %v1440 = vunpack.c.h.b16 %v1349
  %v1441 = vunpack.c.l.b16 %v1350
  %v1442 = vunpack.c.h.b16 %v1350
  %v1443 = vunpack.c.l.b16 %v1351
  %v1444 = vunpack.c.h.b16 %v1351
  %v1445 = vunpack.c.l.b16 %v1352
  %v1446 = vunpack.c.h.b16 %v1352
  %v1447 = vunpack.c.l.b16 %v1353
  %v1448 = vunpack.c.h.b16 %v1353
  %v1449 = vunpack.c.l.b16 %v1354
  %v1450 = vunpack.c.h.b16 %v1354
  %v1451 = vpack.c.b16 %v1391, %v1387
  %v1452 = vpack.c.b16 %v1392, %v1388
  %v1453 = vpack.c.b16 %v1393, %v1389
  %v1454 = vpack.c.b16 %v1394, %v1390
  %v1455 = vpack.c.b16 %v1399, %v1395
  %v1456 = vpack.c.b16 %v1400, %v1396
  %v1457 = vpack.c.b16 %v1401, %v1397
  %v1458 = vpack.c.b16 %v1402, %v1398
  %v1459 = vpack.c.b16 %v1407, %v1403
  %v1460 = vpack.c.b16 %v1408, %v1404
  %v1461 = vpack.c.b16 %v1409, %v1405
  %v1462 = vpack.c.b16 %v1410, %v1406
  %v1463 = vpack.c.b16 %v1415, %v1411
  %v1464 = vpack.c.b16 %v1416, %v1412
  %v1465 = vpack.c.b16 %v1417, %v1413
  %v1466 = vpack.c.b16 %v1418, %v1414
  %v1467 = vpack.c.b16 %v1423, %v1419
  %v1468 = vpack.c.b16 %v1424, %v1420
  %v1469 = vpack.c.b16 %v1425, %v1421
  %v1470 = vpack.c.b16 %v1426, %v1422
  %v1471 = vpack.c.b16 %v1431, %v1427
  %v1472 = vpack.c.b16 %v1432, %v1428
  %v1473 = vpack.c.b16 %v1433, %v1429
  %v1474 = vpack.c.b16 %v1434, %v1430
  %v1475 = vpack.c.b16 %v1439, %v1435
  %v1476 = vpack.c.b16 %v1440, %v1436
  %v1477 = vpack.c.b16 %v1441, %v1437
  %v1478 = vpack.c.b16 %v1442, %v1438
  %v1479 = vpack.c.b16 %v1447, %v1443
  %v1480 = vpack.c.b16 %v1448, %v1444
  %v1481 = vpack.c.b16 %v1449, %v1445
  %v1482 = vpack.c.b16 %v1450, %v1446
  %1515 = vmatprep.subr.bf16.mxu0 %v1480
  %1516 = vmatpush1.bf16.msra.mxu0 %v1479
  %1517 = vmatprep.subr.bf16.mxu0 %v1476
  %1518 = vmatpush1.bf16.msra.mxu0 %v1475
  %1519 = vmatprep.subr.bf16.mxu0 %v1472
  %1520 = vmatpush1.bf16.msra.mxu0 %v1471
  %1521 = vmatprep.subr.bf16.mxu0 %v1468
  %1522 = vmatpush1.bf16.msra.mxu0 %v1467
  %1523 = vmatprep.subr.bf16.mxu0 %v1464
  %1524 = vmatpush1.bf16.msra.mxu0 %v1463
  %1525 = vmatprep.subr.bf16.mxu0 %v1460
  %1526 = vmatpush1.bf16.msra.mxu0 %v1459
  %1527 = vmatprep.subr.bf16.mxu0 %v1456
  %1528 = vmatpush1.bf16.msra.mxu0 %v1455
  %1529 = vmatprep.subr.bf16.mxu0 %v1452
  %1530 = vmatpush1.bf16.msra.mxu0 %v1451
  %1531 = vmatprep.subr.bf16.mxu0 0
  %1532 = vmatpush2.bf16.msra.mxu0 0
  %1533 = vmatprep.subr.bf16.mxu0 0
  %1534 = vmatpush2.bf16.msra.mxu0 0
  %1535 = vmatprep.subr.bf16.mxu0 0
  %1536 = vmatpush2.bf16.msra.mxu0 0
  %1537 = vmatprep.subr.bf16.mxu0 0
  %1538 = vmatpush2.bf16.msra.mxu0 0
  %1539 = vmatprep.subr.bf16.mxu0 0
  %1540 = vmatpush2.bf16.msra.mxu0 0
  %1541 = vmatprep.subr.bf16.mxu0 0
  %1542 = vmatpush2.bf16.msra.mxu0 0
  %1543 = vmatprep.subr.bf16.mxu0 0
  %1544 = vmatpush2.bf16.msra.mxu0 0
  %1545 = vmatprep.subr.bf16.mxu0 0
  %1546 = vmatpush2.bf16.msra.mxu0 0
  %1547 = vmatprep.mubr.bf16.mxu0 0
  %1548 = vmatmul.mubr.bf16.gmra.mxu0 %v1322
  %v1549 = vpop.f32.mrf.mxu0
  %v1550 = vadd.f32 0.0, %v1549
  %v1551 = vpop.f32.mrf.mxu0
  %v1552 = vadd.f32 0.0, %v1551
  %v1553 = vpop.f32.mrf.mxu0
  %v1554 = vpop.f32.mrf.mxu0
  %1555 = vdwg.mxu0
  %1556 = vmatprep.subr.bf16.mxu0 %v1482
  %1557 = vmatpush1.bf16.msra.mxu0 %v1481
  %1558 = vmatprep.subr.bf16.mxu0 %v1478
  %1559 = vmatpush1.bf16.msra.mxu0 %v1477
  %1560 = vmatprep.subr.bf16.mxu0 %v1474
  %1561 = vmatpush1.bf16.msra.mxu0 %v1473
  %1562 = vmatprep.subr.bf16.mxu0 %v1470
  %1563 = vmatpush1.bf16.msra.mxu0 %v1469
  %1564 = vmatprep.subr.bf16.mxu0 %v1466
  %1565 = vmatpush1.bf16.msra.mxu0 %v1465
  %1566 = vmatprep.subr.bf16.mxu0 %v1462
  %1567 = vmatpush1.bf16.msra.mxu0 %v1461
  %1568 = vmatprep.subr.bf16.mxu0 %v1458
  %1569 = vmatpush1.bf16.msra.mxu0 %v1457
  %1570 = vmatprep.subr.bf16.mxu0 %v1454
  %1571 = vmatpush1.bf16.msra.mxu0 %v1453
  %1572 = vmatprep.subr.bf16.mxu0 0
  %1573 = vmatpush2.bf16.msra.mxu0 0
  %1574 = vmatprep.subr.bf16.mxu0 0
  %1575 = vmatpush2.bf16.msra.mxu0 0
  %1576 = vmatprep.subr.bf16.mxu0 0
  %1577 = vmatpush2.bf16.msra.mxu0 0
  %1578 = vmatprep.subr.bf16.mxu0 0
  %1579 = vmatpush2.bf16.msra.mxu0 0
  %1580 = vmatprep.subr.bf16.mxu0 0
  %1581 = vmatpush2.bf16.msra.mxu0 0
  %1582 = vmatprep.subr.bf16.mxu0 0
  %1583 = vmatpush2.bf16.msra.mxu0 0
  %1584 = vmatprep.subr.bf16.mxu0 0
  %1585 = vmatpush2.bf16.msra.mxu0 0
  %1586 = vmatprep.subr.bf16.mxu0 0
  %1587 = vmatpush2.bf16.msra.mxu0 0
  %1588 = vmatprep.mubr.bf16.mxu0 0
  %1589 = vmatmul.mubr.bf16.gmra.mxu0 %v1322
  %v1590 = vpop.f32.mrf.mxu0
  %v1591 = vadd.f32 0.0, %v1590
  %v1592 = vpop.f32.mrf.mxu0
  %v1593 = vadd.f32 0.0, %v1592
  %v1594 = vpop.f32.mrf.mxu0
  %v1595 = vpop.f32.mrf.mxu0
  %1596 = vdwg.mxu0
  %v1597 = vadd.f32 %v1318, %v1550
  %v1598 = vadd.f32 %v1319, %v1552
  %v1599 = vadd.f32 %v1320, %v1591
  %v1600 = vadd.f32 %v1321, %v1593
  %v1601 = vxor.u32 %v1597, 2147483648
  %v1602 = vmul.f32 %v1601, 1.442695
  %v1603 = vpow.pop %v1602
  %v1604 = vadd.f32 %v1603, 1.0
  %v1605 = vrcp.pop %v1604
  %v1606 = vmul.f32 1.0, %v1605
  %v1607 = vxor.u32 %v1598, 2147483648
  %v1608 = vmul.f32 %v1607, 1.442695
  %v1609 = vpow.pop %v1608
  %v1610 = vadd.f32 %v1609, 1.0
  %v1611 = vrcp.pop %v1610
  %v1612 = vmul.f32 1.0, %v1611
  %v1613 = vtanh.pop %v1599
  %v1614 = vxor.u32 %v1600, 2147483648
  %v1615 = vmul.f32 %v1614, 1.442695
  %v1616 = vpow.pop %v1615
  %v1617 = vadd.f32 %v1616, 1.0
  %v1618 = vrcp.pop %v1617
  %v1619 = vmul.f32 1.0, %v1618
  %v1620 = vmul.f32 %v1612, %v1181
  %v1621 = vmul.f32 %v1606, %v1613
  %v1622 = vadd.f32 %v1620, %v1621
  %v1623 = vtanh.pop %v1622
  %v1624 = vmul.f32 %v1619, %v1623
  %v1626 = vcombine.high %v1624, %v1624
  %v1628 = vunpack.c.l.s4 1966171168
  %v1629 = vunpack.c.0.s8 %v1628
  %v1630 = vlaneseq
  %v1631 = vshrl.u32 %v1630, 7
  %v1632 = vsub.s32 %v1629, %v1631
  %v1633 = vrot.slane %v1624, %v1632
  %v1635 = vunpack.c.l.s4 1966171168
  %v1636 = vunpack.c.0.s8 %v1635
  %v1637 = vlaneseq
  %v1638 = vshrl.u32 %v1637, 7
  %v1639 = vsub.s32 %v1636, %v1638
  %v1640 = vrot.slane %v1626, %v1639
  %v1641 = vcombine.high %v1633, %v1633
  %v1642 = vcombine.high %v1640, %v1640
  %v1644 = vunpack.c.l.s4 1966171168
  %v1645 = vunpack.c.0.s8 %v1644
  %v1646 = vlaneseq
  %v1647 = vshrl.u32 %v1646, 7
  %v1648 = vsub.s32 %v1645, %v1647
  %v1649 = vrot.slane %v1633, %v1648
  %v1651 = vunpack.c.l.s4 1966171168
  %v1652 = vunpack.c.0.s8 %v1651
  %v1653 = vlaneseq
  %v1654 = vshrl.u32 %v1653, 7
  %v1655 = vsub.s32 %v1652, %v1654
  %v1656 = vrot.slane %v1640, %v1655
  %v1658 = vunpack.c.l.s4 1966171168
  %v1659 = vunpack.c.0.s8 %v1658
  %v1660 = vlaneseq
  %v1661 = vshrl.u32 %v1660, 7
  %v1662 = vsub.s32 %v1659, %v1661
  %v1663 = vrot.slane %v1641, %v1662
  %v1665 = vunpack.c.l.s4 1966171168
  %v1666 = vunpack.c.0.s8 %v1665
  %v1667 = vlaneseq
  %v1668 = vshrl.u32 %v1667, 7
  %v1669 = vsub.s32 %v1666, %v1668
  %v1670 = vrot.slane %v1642, %v1669
  %v1671 = vcombine.high %v1649, %v1649
  %v1672 = vcombine.high %v1656, %v1656
  %v1673 = vcombine.high %v1663, %v1663
  %v1674 = vcombine.high %v1670, %v1670
  %v1683 = vpack.c.bf16 %v1649, %v1649
  %v1684 = vpack.c.bf16 %v1663, %v1663
  %v1685 = vpack.c.bf16 %v1671, %v1671
  %v1686 = vpack.c.bf16 %v1673, %v1673
  %v1687 = vpack.c.bf16 %v1656, %v1656
  %v1688 = vpack.c.bf16 %v1670, %v1670
  %v1689 = vpack.c.bf16 %v1672, %v1672
  %v1690 = vpack.c.bf16 %v1674, %v1674
  %v1699 = vunpack.c.l.b16 %v1683
  %v1700 = vunpack.c.l.b16 %v1684
  %v1701 = vunpack.c.l.b16 %v1685
  %v1702 = vunpack.c.l.b16 %v1686
  %v1703 = vunpack.c.l.b16 %v1687
  %v1704 = vunpack.c.l.b16 %v1688
  %v1705 = vunpack.c.l.b16 %v1689
  %v1706 = vunpack.c.l.b16 %v1690
  %v1707 = vpack.c.b16 %v1699, %v1699
  %v1708 = vpack.c.b16 %v1700, %v1700
  %v1709 = vpack.c.b16 %v1701, %v1701
  %v1710 = vpack.c.b16 %v1702, %v1702
  %v1711 = vpack.c.b16 %v1703, %v1703
  %v1712 = vpack.c.b16 %v1704, %v1704
  %v1713 = vpack.c.b16 %v1705, %v1705
  %v1714 = vpack.c.b16 %v1706, %v1706
  %v1716 = vshll.u32 %v1707, 16
  %v1718 = vrot.slane %v1716, 7
  %v1720 = vshll.u32 %v1708, 16
  %v1722 = vrot.slane %v1720, 7
  %v1724 = vshll.u32 %v1709, 16
  %v1726 = vrot.slane %v1724, 7
  %v1728 = vshll.u32 %v1710, 16
  %v1730 = vrot.slane %v1728, 7
  %v1732 = vshll.u32 %v1711, 16
  %v1734 = vrot.slane %v1732, 7
  %v1736 = vshll.u32 %v1712, 16
  %v1738 = vrot.slane %v1736, 7
  %v1740 = vshll.u32 %v1713, 16
  %v1742 = vrot.slane %v1740, 7
  %v1744 = vshll.u32 %v1714, 16
  %v1746 = vrot.slane %v1744, 7
  %vm1755 = vsmask.f32 7942
  %vm1756 = vmand %vm1290, %vm1755
  %v1757 = vld [vmem:[%s4] sm:$0x2]
  %v1758 = vsel %vm1756, %v1718, %v1757
  %1759 = vst [vmem:[%s4] sm:$0x2] %v1758
  %v1760 = vld [vmem:[%s4 + $0x4] sm:$0x2]
  %v1761 = vsel %vm1756, %v1722, %v1760
  %1762 = vst [vmem:[%s4 + $0x4] sm:$0x2] %v1761
  %v1763 = vld [vmem:[%s4 + $0x8] sm:$0x2]
  %v1764 = vsel %vm1756, %v1726, %v1763
  %1765 = vst [vmem:[%s4 + $0x8] sm:$0x2] %v1764
  %v1766 = vld [vmem:[%s4 + $0xc] sm:$0x2]
  %v1767 = vsel %vm1756, %v1730, %v1766
  %1768 = vst [vmem:[%s4 + $0xc] sm:$0x2] %v1767
  %v1769 = vld [vmem:[%s4 + $0x10] sm:$0x2]
  %v1770 = vsel %vm1756, %v1734, %v1769
  %1771 = vst [vmem:[%s4 + $0x10] sm:$0x2] %v1770
  %v1772 = vld [vmem:[%s4 + $0x14] sm:$0x2]
  %v1773 = vsel %vm1756, %v1738, %v1772
  %1774 = vst [vmem:[%s4 + $0x14] sm:$0x2] %v1773
  %v1775 = vld [vmem:[%s4 + $0x18] sm:$0x2]
  %v1776 = vsel %vm1756, %v1742, %v1775
  %1777 = vst [vmem:[%s4 + $0x18] sm:$0x2] %v1776
  %v1778 = vld [vmem:[%s4 + $0x1c] sm:$0x2]
  %v1779 = vsel %vm1756, %v1746, %v1778
  %1780 = vst [vmem:[%s4 + $0x1c] sm:$0x2] %v1779
  %s1781 = scalar_lea.vmem %s0, 128
  %v1782 = vld [vmem:[%s1781] sm:$0xff]
  %v1783 = vld [vmem:[%s1781 + $0x8] sm:$0xff]
  %v1784 = vld [vmem:[%s1781 + $0x10] sm:$0xff]
  %v1785 = vld [vmem:[%s1781 + $0x18] sm:$0xff]
  %v1786 = vpack.c.bf16 %v1624, %v1624
  %v1787 = vld [vmem:[%s3] sm:$0xff]
  %v1788 = vld [vmem:[%s3 + $0x8] sm:$0xff]
  %v1789 = vld [vmem:[%s3 + $0x10] sm:$0xff]
  %v1790 = vld [vmem:[%s3 + $0x18] sm:$0xff]
  %v1791 = vld [vmem:[%s3 + $0x20] sm:$0xff]
  %v1792 = vld [vmem:[%s3 + $0x28] sm:$0xff]
  %v1793 = vld [vmem:[%s3 + $0x30] sm:$0xff]
  %v1794 = vld [vmem:[%s3 + $0x38] sm:$0xff]
  %v1795 = vld [vmem:[%s3 + $0x40] sm:$0xff]
  %v1796 = vld [vmem:[%s3 + $0x48] sm:$0xff]
  %v1797 = vld [vmem:[%s3 + $0x50] sm:$0xff]
  %v1798 = vld [vmem:[%s3 + $0x58] sm:$0xff]
  %v1799 = vld [vmem:[%s3 + $0x60] sm:$0xff]
  %v1800 = vld [vmem:[%s3 + $0x68] sm:$0xff]
  %v1801 = vld [vmem:[%s3 + $0x70] sm:$0xff]
  %v1802 = vld [vmem:[%s3 + $0x78] sm:$0xff]
  %v1803 = vld [vmem:[%s3 + $0x80] sm:$0xff]
  %v1804 = vld [vmem:[%s3 + $0x88] sm:$0xff]
  %v1805 = vld [vmem:[%s3 + $0x90] sm:$0xff]
  %v1806 = vld [vmem:[%s3 + $0x98] sm:$0xff]
  %v1807 = vld [vmem:[%s3 + $0xa0] sm:$0xff]
  %v1808 = vld [vmem:[%s3 + $0xa8] sm:$0xff]
  %v1809 = vld [vmem:[%s3 + $0xb0] sm:$0xff]
  %v1810 = vld [vmem:[%s3 + $0xb8] sm:$0xff]
  %v1811 = vld [vmem:[%s3 + $0xc0] sm:$0xff]
  %v1812 = vld [vmem:[%s3 + $0xc8] sm:$0xff]
  %v1813 = vld [vmem:[%s3 + $0xd0] sm:$0xff]
  %v1814 = vld [vmem:[%s3 + $0xd8] sm:$0xff]
  %v1815 = vld [vmem:[%s3 + $0xe0] sm:$0xff]
  %v1816 = vld [vmem:[%s3 + $0xe8] sm:$0xff]
  %v1817 = vld [vmem:[%s3 + $0xf0] sm:$0xff]
  %v1818 = vld [vmem:[%s3 + $0xf8] sm:$0xff]
  %v1851 = vunpack.c.l.b16 %v1787
  %v1852 = vunpack.c.h.b16 %v1787
  %v1853 = vunpack.c.l.b16 %v1788
  %v1854 = vunpack.c.h.b16 %v1788
  %v1855 = vunpack.c.l.b16 %v1789
  %v1856 = vunpack.c.h.b16 %v1789
  %v1857 = vunpack.c.l.b16 %v1790
  %v1858 = vunpack.c.h.b16 %v1790
  %v1859 = vunpack.c.l.b16 %v1791
  %v1860 = vunpack.c.h.b16 %v1791
  %v1861 = vunpack.c.l.b16 %v1792
  %v1862 = vunpack.c.h.b16 %v1792
  %v1863 = vunpack.c.l.b16 %v1793
  %v1864 = vunpack.c.h.b16 %v1793
  %v1865 = vunpack.c.l.b16 %v1794
  %v1866 = vunpack.c.h.b16 %v1794
  %v1867 = vunpack.c.l.b16 %v1795
  %v1868 = vunpack.c.h.b16 %v1795
  %v1869 = vunpack.c.l.b16 %v1796
  %v1870 = vunpack.c.h.b16 %v1796
  %v1871 = vunpack.c.l.b16 %v1797
  %v1872 = vunpack.c.h.b16 %v1797
  %v1873 = vunpack.c.l.b16 %v1798
  %v1874 = vunpack.c.h.b16 %v1798
  %v1875 = vunpack.c.l.b16 %v1799
  %v1876 = vunpack.c.h.b16 %v1799
  %v1877 = vunpack.c.l.b16 %v1800
  %v1878 = vunpack.c.h.b16 %v1800
  %v1879 = vunpack.c.l.b16 %v1801
  %v1880 = vunpack.c.h.b16 %v1801
  %v1881 = vunpack.c.l.b16 %v1802
  %v1882 = vunpack.c.h.b16 %v1802
  %v1883 = vunpack.c.l.b16 %v1803
  %v1884 = vunpack.c.h.b16 %v1803
  %v1885 = vunpack.c.l.b16 %v1804
  %v1886 = vunpack.c.h.b16 %v1804
  %v1887 = vunpack.c.l.b16 %v1805
  %v1888 = vunpack.c.h.b16 %v1805
  %v1889 = vunpack.c.l.b16 %v1806
  %v1890 = vunpack.c.h.b16 %v1806
  %v1891 = vunpack.c.l.b16 %v1807
  %v1892 = vunpack.c.h.b16 %v1807
  %v1893 = vunpack.c.l.b16 %v1808
  %v1894 = vunpack.c.h.b16 %v1808
  %v1895 = vunpack.c.l.b16 %v1809
  %v1896 = vunpack.c.h.b16 %v1809
  %v1897 = vunpack.c.l.b16 %v1810
  %v1898 = vunpack.c.h.b16 %v1810
  %v1899 = vunpack.c.l.b16 %v1811
  %v1900 = vunpack.c.h.b16 %v1811
  %v1901 = vunpack.c.l.b16 %v1812
  %v1902 = vunpack.c.h.b16 %v1812
  %v1903 = vunpack.c.l.b16 %v1813
  %v1904 = vunpack.c.h.b16 %v1813
  %v1905 = vunpack.c.l.b16 %v1814
  %v1906 = vunpack.c.h.b16 %v1814
  %v1907 = vunpack.c.l.b16 %v1815
  %v1908 = vunpack.c.h.b16 %v1815
  %v1909 = vunpack.c.l.b16 %v1816
  %v1910 = vunpack.c.h.b16 %v1816
  %v1911 = vunpack.c.l.b16 %v1817
  %v1912 = vunpack.c.h.b16 %v1817
  %v1913 = vunpack.c.l.b16 %v1818
  %v1914 = vunpack.c.h.b16 %v1818
  %v1915 = vpack.c.b16 %v1855, %v1851
  %v1916 = vpack.c.b16 %v1856, %v1852
  %v1917 = vpack.c.b16 %v1857, %v1853
  %v1918 = vpack.c.b16 %v1858, %v1854
  %v1919 = vpack.c.b16 %v1863, %v1859
  %v1920 = vpack.c.b16 %v1864, %v1860
  %v1921 = vpack.c.b16 %v1865, %v1861
  %v1922 = vpack.c.b16 %v1866, %v1862
  %v1923 = vpack.c.b16 %v1871, %v1867
  %v1924 = vpack.c.b16 %v1872, %v1868
  %v1925 = vpack.c.b16 %v1873, %v1869
  %v1926 = vpack.c.b16 %v1874, %v1870
  %v1927 = vpack.c.b16 %v1879, %v1875
  %v1928 = vpack.c.b16 %v1880, %v1876
  %v1929 = vpack.c.b16 %v1881, %v1877
  %v1930 = vpack.c.b16 %v1882, %v1878
  %v1931 = vpack.c.b16 %v1887, %v1883
  %v1932 = vpack.c.b16 %v1888, %v1884
  %v1933 = vpack.c.b16 %v1889, %v1885
  %v1934 = vpack.c.b16 %v1890, %v1886
  %v1935 = vpack.c.b16 %v1895, %v1891
  %v1936 = vpack.c.b16 %v1896, %v1892
  %v1937 = vpack.c.b16 %v1897, %v1893
  %v1938 = vpack.c.b16 %v1898, %v1894
  %v1939 = vpack.c.b16 %v1903, %v1899
  %v1940 = vpack.c.b16 %v1904, %v1900
  %v1941 = vpack.c.b16 %v1905, %v1901
  %v1942 = vpack.c.b16 %v1906, %v1902
  %v1943 = vpack.c.b16 %v1911, %v1907
  %v1944 = vpack.c.b16 %v1912, %v1908
  %v1945 = vpack.c.b16 %v1913, %v1909
  %v1946 = vpack.c.b16 %v1914, %v1910
  %1979 = vmatprep.subr.bf16.mxu0 %v1944
  %1980 = vmatpush1.bf16.msra.mxu0 %v1943
  %1981 = vmatprep.subr.bf16.mxu0 %v1940
  %1982 = vmatpush1.bf16.msra.mxu0 %v1939
  %1983 = vmatprep.subr.bf16.mxu0 %v1936
  %1984 = vmatpush1.bf16.msra.mxu0 %v1935
  %1985 = vmatprep.subr.bf16.mxu0 %v1932
  %1986 = vmatpush1.bf16.msra.mxu0 %v1931
  %1987 = vmatprep.subr.bf16.mxu0 %v1928
  %1988 = vmatpush1.bf16.msra.mxu0 %v1927
  %1989 = vmatprep.subr.bf16.mxu0 %v1924
  %1990 = vmatpush1.bf16.msra.mxu0 %v1923
  %1991 = vmatprep.subr.bf16.mxu0 %v1920
  %1992 = vmatpush1.bf16.msra.mxu0 %v1919
  %1993 = vmatprep.subr.bf16.mxu0 %v1916
  %1994 = vmatpush1.bf16.msra.mxu0 %v1915
  %1995 = vmatprep.subr.bf16.mxu0 0
  %1996 = vmatpush2.bf16.msra.mxu0 0
  %1997 = vmatprep.subr.bf16.mxu0 0
  %1998 = vmatpush2.bf16.msra.mxu0 0
  %1999 = vmatprep.subr.bf16.mxu0 0
  %2000 = vmatpush2.bf16.msra.mxu0 0
  %2001 = vmatprep.subr.bf16.mxu0 0
  %2002 = vmatpush2.bf16.msra.mxu0 0
  %2003 = vmatprep.subr.bf16.mxu0 0
  %2004 = vmatpush2.bf16.msra.mxu0 0
  %2005 = vmatprep.subr.bf16.mxu0 0
  %2006 = vmatpush2.bf16.msra.mxu0 0
  %2007 = vmatprep.subr.bf16.mxu0 0
  %2008 = vmatpush2.bf16.msra.mxu0 0
  %2009 = vmatprep.subr.bf16.mxu0 0
  %2010 = vmatpush2.bf16.msra.mxu0 0
  %2011 = vmatprep.mubr.bf16.mxu0 0
  %2012 = vmatmul.mubr.bf16.gmra.mxu0 %v1786
  %v2013 = vpop.f32.mrf.mxu0
  %v2014 = vadd.f32 0.0, %v2013
  %v2015 = vpop.f32.mrf.mxu0
  %v2016 = vadd.f32 0.0, %v2015
  %v2017 = vpop.f32.mrf.mxu0
  %v2018 = vpop.f32.mrf.mxu0
  %2019 = vdwg.mxu0
  %2020 = vmatprep.subr.bf16.mxu0 %v1946
  %2021 = vmatpush1.bf16.msra.mxu0 %v1945
  %2022 = vmatprep.subr.bf16.mxu0 %v1942
  %2023 = vmatpush1.bf16.msra.mxu0 %v1941
  %2024 = vmatprep.subr.bf16.mxu0 %v1938
  %2025 = vmatpush1.bf16.msra.mxu0 %v1937
  %2026 = vmatprep.subr.bf16.mxu0 %v1934
  %2027 = vmatpush1.bf16.msra.mxu0 %v1933
  %2028 = vmatprep.subr.bf16.mxu0 %v1930
  %2029 = vmatpush1.bf16.msra.mxu0 %v1929
  %2030 = vmatprep.subr.bf16.mxu0 %v1926
  %2031 = vmatpush1.bf16.msra.mxu0 %v1925
  %2032 = vmatprep.subr.bf16.mxu0 %v1922
  %2033 = vmatpush1.bf16.msra.mxu0 %v1921
  %2034 = vmatprep.subr.bf16.mxu0 %v1918
  %2035 = vmatpush1.bf16.msra.mxu0 %v1917
  %2036 = vmatprep.subr.bf16.mxu0 0
  %2037 = vmatpush2.bf16.msra.mxu0 0
  %2038 = vmatprep.subr.bf16.mxu0 0
  %2039 = vmatpush2.bf16.msra.mxu0 0
  %2040 = vmatprep.subr.bf16.mxu0 0
  %2041 = vmatpush2.bf16.msra.mxu0 0
  %2042 = vmatprep.subr.bf16.mxu0 0
  %2043 = vmatpush2.bf16.msra.mxu0 0
  %2044 = vmatprep.subr.bf16.mxu0 0
  %2045 = vmatpush2.bf16.msra.mxu0 0
  %2046 = vmatprep.subr.bf16.mxu0 0
  %2047 = vmatpush2.bf16.msra.mxu0 0
  %2048 = vmatprep.subr.bf16.mxu0 0
  %2049 = vmatpush2.bf16.msra.mxu0 0
  %2050 = vmatprep.subr.bf16.mxu0 0
  %2051 = vmatpush2.bf16.msra.mxu0 0
  %2052 = vmatprep.mubr.bf16.mxu0 0
  %2053 = vmatmul.mubr.bf16.gmra.mxu0 %v1786
  %v2054 = vpop.f32.mrf.mxu0
  %v2055 = vadd.f32 0.0, %v2054
  %v2056 = vpop.f32.mrf.mxu0
  %v2057 = vadd.f32 0.0, %v2056
  %v2058 = vpop.f32.mrf.mxu0
  %v2059 = vpop.f32.mrf.mxu0
  %2060 = vdwg.mxu0
  %v2061 = vadd.f32 %v1782, %v2014
  %v2062 = vadd.f32 %v1783, %v2016
  %v2063 = vadd.f32 %v1784, %v2055
  %v2064 = vadd.f32 %v1785, %v2057
  %v2065 = vxor.u32 %v2061, 2147483648
  %v2066 = vmul.f32 %v2065, 1.442695
  %v2067 = vpow.pop %v2066
  %v2068 = vadd.f32 %v2067, 1.0
  %v2069 = vrcp.pop %v2068
  %v2070 = vmul.f32 1.0, %v2069
  %v2071 = vxor.u32 %v2062, 2147483648
  %v2072 = vmul.f32 %v2071, 1.442695
  %v2073 = vpow.pop %v2072
  %v2074 = vadd.f32 %v2073, 1.0
  %v2075 = vrcp.pop %v2074
  %v2076 = vmul.f32 1.0, %v2075
  %v2077 = vtanh.pop %v2063
  %v2078 = vxor.u32 %v2064, 2147483648
  %v2079 = vmul.f32 %v2078, 1.442695
  %v2080 = vpow.pop %v2079
  %v2081 = vadd.f32 %v2080, 1.0
  %v2082 = vrcp.pop %v2081
  %v2083 = vmul.f32 1.0, %v2082
  %v2084 = vmul.f32 %v2076, %v1622
  %v2085 = vmul.f32 %v2070, %v2077
  %v2086 = vadd.f32 %v2084, %v2085
  %v2087 = vtanh.pop %v2086
  %v2088 = vmul.f32 %v2083, %v2087
  %v2090 = vcombine.high %v2088, %v2088
  %v2092 = vunpack.c.l.s4 1966171168
  %v2093 = vunpack.c.0.s8 %v2092
  %v2094 = vlaneseq
  %v2095 = vshrl.u32 %v2094, 7
  %v2096 = vsub.s32 %v2093, %v2095
  %v2097 = vrot.slane %v2088, %v2096
  %v2099 = vunpack.c.l.s4 1966171168
  %v2100 = vunpack.c.0.s8 %v2099
  %v2101 = vlaneseq
  %v2102 = vshrl.u32 %v2101, 7
  %v2103 = vsub.s32 %v2100, %v2102
  %v2104 = vrot.slane %v2090, %v2103
  %v2105 = vcombine.high %v2097, %v2097
  %v2106 = vcombine.high %v2104, %v2104
  %v2108 = vunpack.c.l.s4 1966171168
  %v2109 = vunpack.c.0.s8 %v2108
  %v2110 = vlaneseq
  %v2111 = vshrl.u32 %v2110, 7
  %v2112 = vsub.s32 %v2109, %v2111
  %v2113 = vrot.slane %v2097, %v2112
  %v2115 = vunpack.c.l.s4 1966171168
  %v2116 = vunpack.c.0.s8 %v2115
  %v2117 = vlaneseq
  %v2118 = vshrl.u32 %v2117, 7
  %v2119 = vsub.s32 %v2116, %v2118
  %v2120 = vrot.slane %v2104, %v2119
  %v2122 = vunpack.c.l.s4 1966171168
  %v2123 = vunpack.c.0.s8 %v2122
  %v2124 = vlaneseq
  %v2125 = vshrl.u32 %v2124, 7
  %v2126 = vsub.s32 %v2123, %v2125
  %v2127 = vrot.slane %v2105, %v2126
  %v2129 = vunpack.c.l.s4 1966171168
  %v2130 = vunpack.c.0.s8 %v2129
  %v2131 = vlaneseq
  %v2132 = vshrl.u32 %v2131, 7
  %v2133 = vsub.s32 %v2130, %v2132
  %v2134 = vrot.slane %v2106, %v2133
  %v2135 = vcombine.high %v2113, %v2113
  %v2136 = vcombine.high %v2120, %v2120
  %v2137 = vcombine.high %v2127, %v2127
  %v2138 = vcombine.high %v2134, %v2134
  %v2147 = vpack.c.bf16 %v2113, %v2113
  %v2148 = vpack.c.bf16 %v2127, %v2127
  %v2149 = vpack.c.bf16 %v2135, %v2135
  %v2150 = vpack.c.bf16 %v2137, %v2137
  %v2151 = vpack.c.bf16 %v2120, %v2120
  %v2152 = vpack.c.bf16 %v2134, %v2134
  %v2153 = vpack.c.bf16 %v2136, %v2136
  %v2154 = vpack.c.bf16 %v2138, %v2138
  %v2163 = vunpack.c.l.b16 %v2147
  %v2164 = vunpack.c.l.b16 %v2148
  %v2165 = vunpack.c.l.b16 %v2149
  %v2166 = vunpack.c.l.b16 %v2150
  %v2167 = vunpack.c.l.b16 %v2151
  %v2168 = vunpack.c.l.b16 %v2152
  %v2169 = vunpack.c.l.b16 %v2153
  %v2170 = vunpack.c.l.b16 %v2154
  %v2171 = vpack.c.b16 %v2163, %v2163
  %v2172 = vpack.c.b16 %v2164, %v2164
  %v2173 = vpack.c.b16 %v2165, %v2165
  %v2174 = vpack.c.b16 %v2166, %v2166
  %v2175 = vpack.c.b16 %v2167, %v2167
  %v2176 = vpack.c.b16 %v2168, %v2168
  %v2177 = vpack.c.b16 %v2169, %v2169
  %v2178 = vpack.c.b16 %v2170, %v2170
  %v2179 = vrot.slane %v2171, 6
  %v2180 = vrot.slane %v2172, 6
  %v2181 = vrot.slane %v2173, 6
  %v2182 = vrot.slane %v2174, 6
  %v2183 = vrot.slane %v2175, 6
  %v2184 = vrot.slane %v2176, 6
  %v2185 = vrot.slane %v2177, 6
  %v2186 = vrot.slane %v2178, 6
  %vm2195 = vcmask 1042434
  %vm2196 = vsmask.f32 2304
  %vm2197 = vmand %vm2195, %vm2196
  %v2198 = vld [vmem:[%s4] sm:$0x4]
  %v2199 = vsel %vm2197, %v2179, %v2198
  %2200 = vst [vmem:[%s4] sm:$0x4] %v2199
  %v2201 = vld [vmem:[%s4 + $0x4] sm:$0x4]
  %v2202 = vsel %vm2197, %v2180, %v2201
  %2203 = vst [vmem:[%s4 + $0x4] sm:$0x4] %v2202
  %v2204 = vld [vmem:[%s4 + $0x8] sm:$0x4]
  %v2205 = vsel %vm2197, %v2181, %v2204
  %2206 = vst [vmem:[%s4 + $0x8] sm:$0x4] %v2205
  %v2207 = vld [vmem:[%s4 + $0xc] sm:$0x4]
  %v2208 = vsel %vm2197, %v2182, %v2207
  %2209 = vst [vmem:[%s4 + $0xc] sm:$0x4] %v2208
  %v2210 = vld [vmem:[%s4 + $0x10] sm:$0x4]
  %v2211 = vsel %vm2197, %v2183, %v2210
  %2212 = vst [vmem:[%s4 + $0x10] sm:$0x4] %v2211
  %v2213 = vld [vmem:[%s4 + $0x14] sm:$0x4]
  %v2214 = vsel %vm2197, %v2184, %v2213
  %2215 = vst [vmem:[%s4 + $0x14] sm:$0x4] %v2214
  %v2216 = vld [vmem:[%s4 + $0x18] sm:$0x4]
  %v2217 = vsel %vm2197, %v2185, %v2216
  %2218 = vst [vmem:[%s4 + $0x18] sm:$0x4] %v2217
  %v2219 = vld [vmem:[%s4 + $0x1c] sm:$0x4]
  %v2220 = vsel %vm2197, %v2186, %v2219
  %2221 = vst [vmem:[%s4 + $0x1c] sm:$0x4] %v2220
  %s2222 = scalar_lea.vmem %s0, 160
  %v2223 = vld [vmem:[%s2222] sm:$0xff]
  %v2224 = vld [vmem:[%s2222 + $0x8] sm:$0xff]
  %v2225 = vld [vmem:[%s2222 + $0x10] sm:$0xff]
  %v2226 = vld [vmem:[%s2222 + $0x18] sm:$0xff]
  %v2227 = vpack.c.bf16 %v2088, %v2088
  %v2228 = vld [vmem:[%s3] sm:$0xff]
  %v2229 = vld [vmem:[%s3 + $0x8] sm:$0xff]
  %v2230 = vld [vmem:[%s3 + $0x10] sm:$0xff]
  %v2231 = vld [vmem:[%s3 + $0x18] sm:$0xff]
  %v2232 = vld [vmem:[%s3 + $0x20] sm:$0xff]
  %v2233 = vld [vmem:[%s3 + $0x28] sm:$0xff]
  %v2234 = vld [vmem:[%s3 + $0x30] sm:$0xff]
  %v2235 = vld [vmem:[%s3 + $0x38] sm:$0xff]
  %v2236 = vld [vmem:[%s3 + $0x40] sm:$0xff]
  %v2237 = vld [vmem:[%s3 + $0x48] sm:$0xff]
  %v2238 = vld [vmem:[%s3 + $0x50] sm:$0xff]
  %v2239 = vld [vmem:[%s3 + $0x58] sm:$0xff]
  %v2240 = vld [vmem:[%s3 + $0x60] sm:$0xff]
  %v2241 = vld [vmem:[%s3 + $0x68] sm:$0xff]
  %v2242 = vld [vmem:[%s3 + $0x70] sm:$0xff]
  %v2243 = vld [vmem:[%s3 + $0x78] sm:$0xff]
  %v2244 = vld [vmem:[%s3 + $0x80] sm:$0xff]
  %v2245 = vld [vmem:[%s3 + $0x88] sm:$0xff]
  %v2246 = vld [vmem:[%s3 + $0x90] sm:$0xff]
  %v2247 = vld [vmem:[%s3 + $0x98] sm:$0xff]
  %v2248 = vld [vmem:[%s3 + $0xa0] sm:$0xff]
  %v2249 = vld [vmem:[%s3 + $0xa8] sm:$0xff]
  %v2250 = vld [vmem:[%s3 + $0xb0] sm:$0xff]
  %v2251 = vld [vmem:[%s3 + $0xb8] sm:$0xff]
  %v2252 = vld [vmem:[%s3 + $0xc0] sm:$0xff]
  %v2253 = vld [vmem:[%s3 + $0xc8] sm:$0xff]
  %v2254 = vld [vmem:[%s3 + $0xd0] sm:$0xff]
  %v2255 = vld [vmem:[%s3 + $0xd8] sm:$0xff]
  %v2256 = vld [vmem:[%s3 + $0xe0] sm:$0xff]
  %v2257 = vld [vmem:[%s3 + $0xe8] sm:$0xff]
  %v2258 = vld [vmem:[%s3 + $0xf0] sm:$0xff]
  %v2259 = vld [vmem:[%s3 + $0xf8] sm:$0xff]
  %v2292 = vunpack.c.l.b16 %v2228
  %v2293 = vunpack.c.h.b16 %v2228
  %v2294 = vunpack.c.l.b16 %v2229
  %v2295 = vunpack.c.h.b16 %v2229
  %v2296 = vunpack.c.l.b16 %v2230
  %v2297 = vunpack.c.h.b16 %v2230
  %v2298 = vunpack.c.l.b16 %v2231
  %v2299 = vunpack.c.h.b16 %v2231
  %v2300 = vunpack.c.l.b16 %v2232
  %v2301 = vunpack.c.h.b16 %v2232
  %v2302 = vunpack.c.l.b16 %v2233
  %v2303 = vunpack.c.h.b16 %v2233
  %v2304 = vunpack.c.l.b16 %v2234
  %v2305 = vunpack.c.h.b16 %v2234
  %v2306 = vunpack.c.l.b16 %v2235
  %v2307 = vunpack.c.h.b16 %v2235
  %v2308 = vunpack.c.l.b16 %v2236
  %v2309 = vunpack.c.h.b16 %v2236
  %v2310 = vunpack.c.l.b16 %v2237
  %v2311 = vunpack.c.h.b16 %v2237
  %v2312 = vunpack.c.l.b16 %v2238
  %v2313 = vunpack.c.h.b16 %v2238
  %v2314 = vunpack.c.l.b16 %v2239
  %v2315 = vunpack.c.h.b16 %v2239
  %v2316 = vunpack.c.l.b16 %v2240
  %v2317 = vunpack.c.h.b16 %v2240
  %v2318 = vunpack.c.l.b16 %v2241
  %v2319 = vunpack.c.h.b16 %v2241
  %v2320 = vunpack.c.l.b16 %v2242
  %v2321 = vunpack.c.h.b16 %v2242
  %v2322 = vunpack.c.l.b16 %v2243
  %v2323 = vunpack.c.h.b16 %v2243
  %v2324 = vunpack.c.l.b16 %v2244
  %v2325 = vunpack.c.h.b16 %v2244
  %v2326 = vunpack.c.l.b16 %v2245
  %v2327 = vunpack.c.h.b16 %v2245
  %v2328 = vunpack.c.l.b16 %v2246
  %v2329 = vunpack.c.h.b16 %v2246
  %v2330 = vunpack.c.l.b16 %v2247
  %v2331 = vunpack.c.h.b16 %v2247
  %v2332 = vunpack.c.l.b16 %v2248
  %v2333 = vunpack.c.h.b16 %v2248
  %v2334 = vunpack.c.l.b16 %v2249
  %v2335 = vunpack.c.h.b16 %v2249
  %v2336 = vunpack.c.l.b16 %v2250
  %v2337 = vunpack.c.h.b16 %v2250
  %v2338 = vunpack.c.l.b16 %v2251
  %v2339 = vunpack.c.h.b16 %v2251
  %v2340 = vunpack.c.l.b16 %v2252
  %v2341 = vunpack.c.h.b16 %v2252
  %v2342 = vunpack.c.l.b16 %v2253
  %v2343 = vunpack.c.h.b16 %v2253
  %v2344 = vunpack.c.l.b16 %v2254
  %v2345 = vunpack.c.h.b16 %v2254
  %v2346 = vunpack.c.l.b16 %v2255
  %v2347 = vunpack.c.h.b16 %v2255
  %v2348 = vunpack.c.l.b16 %v2256
  %v2349 = vunpack.c.h.b16 %v2256
  %v2350 = vunpack.c.l.b16 %v2257
  %v2351 = vunpack.c.h.b16 %v2257
  %v2352 = vunpack.c.l.b16 %v2258
  %v2353 = vunpack.c.h.b16 %v2258
  %v2354 = vunpack.c.l.b16 %v2259
  %v2355 = vunpack.c.h.b16 %v2259
  %v2356 = vpack.c.b16 %v2296, %v2292
  %v2357 = vpack.c.b16 %v2297, %v2293
  %v2358 = vpack.c.b16 %v2298, %v2294
  %v2359 = vpack.c.b16 %v2299, %v2295
  %v2360 = vpack.c.b16 %v2304, %v2300
  %v2361 = vpack.c.b16 %v2305, %v2301
  %v2362 = vpack.c.b16 %v2306, %v2302
  %v2363 = vpack.c.b16 %v2307, %v2303
  %v2364 = vpack.c.b16 %v2312, %v2308
  %v2365 = vpack.c.b16 %v2313, %v2309
  %v2366 = vpack.c.b16 %v2314, %v2310
  %v2367 = vpack.c.b16 %v2315, %v2311
  %v2368 = vpack.c.b16 %v2320, %v2316
  %v2369 = vpack.c.b16 %v2321, %v2317
  %v2370 = vpack.c.b16 %v2322, %v2318
  %v2371 = vpack.c.b16 %v2323, %v2319
  %v2372 = vpack.c.b16 %v2328, %v2324
  %v2373 = vpack.c.b16 %v2329, %v2325
  %v2374 = vpack.c.b16 %v2330, %v2326
  %v2375 = vpack.c.b16 %v2331, %v2327
  %v2376 = vpack.c.b16 %v2336, %v2332
  %v2377 = vpack.c.b16 %v2337, %v2333
  %v2378 = vpack.c.b16 %v2338, %v2334
  %v2379 = vpack.c.b16 %v2339, %v2335
  %v2380 = vpack.c.b16 %v2344, %v2340
  %v2381 = vpack.c.b16 %v2345, %v2341
  %v2382 = vpack.c.b16 %v2346, %v2342
  %v2383 = vpack.c.b16 %v2347, %v2343
  %v2384 = vpack.c.b16 %v2352, %v2348
  %v2385 = vpack.c.b16 %v2353, %v2349
  %v2386 = vpack.c.b16 %v2354, %v2350
  %v2387 = vpack.c.b16 %v2355, %v2351
  %2420 = vmatprep.subr.bf16.mxu0 %v2385
  %2421 = vmatpush1.bf16.msra.mxu0 %v2384
  %2422 = vmatprep.subr.bf16.mxu0 %v2381
  %2423 = vmatpush1.bf16.msra.mxu0 %v2380
  %2424 = vmatprep.subr.bf16.mxu0 %v2377
  %2425 = vmatpush1.bf16.msra.mxu0 %v2376
  %2426 = vmatprep.subr.bf16.mxu0 %v2373
  %2427 = vmatpush1.bf16.msra.mxu0 %v2372
  %2428 = vmatprep.subr.bf16.mxu0 %v2369
  %2429 = vmatpush1.bf16.msra.mxu0 %v2368
  %2430 = vmatprep.subr.bf16.mxu0 %v2365
  %2431 = vmatpush1.bf16.msra.mxu0 %v2364
  %2432 = vmatprep.subr.bf16.mxu0 %v2361
  %2433 = vmatpush1.bf16.msra.mxu0 %v2360
  %2434 = vmatprep.subr.bf16.mxu0 %v2357
  %2435 = vmatpush1.bf16.msra.mxu0 %v2356
  %2436 = vmatprep.subr.bf16.mxu0 0
  %2437 = vmatpush2.bf16.msra.mxu0 0
  %2438 = vmatprep.subr.bf16.mxu0 0
  %2439 = vmatpush2.bf16.msra.mxu0 0
  %2440 = vmatprep.subr.bf16.mxu0 0
  %2441 = vmatpush2.bf16.msra.mxu0 0
  %2442 = vmatprep.subr.bf16.mxu0 0
  %2443 = vmatpush2.bf16.msra.mxu0 0
  %2444 = vmatprep.subr.bf16.mxu0 0
  %2445 = vmatpush2.bf16.msra.mxu0 0
  %2446 = vmatprep.subr.bf16.mxu0 0
  %2447 = vmatpush2.bf16.msra.mxu0 0
  %2448 = vmatprep.subr.bf16.mxu0 0
  %2449 = vmatpush2.bf16.msra.mxu0 0
  %2450 = vmatprep.subr.bf16.mxu0 0
  %2451 = vmatpush2.bf16.msra.mxu0 0
  %2452 = vmatprep.mubr.bf16.mxu0 0
  %2453 = vmatmul.mubr.bf16.gmra.mxu0 %v2227
  %v2454 = vpop.f32.mrf.mxu0
  %v2455 = vadd.f32 0.0, %v2454
  %v2456 = vpop.f32.mrf.mxu0
  %v2457 = vadd.f32 0.0, %v2456
  %v2458 = vpop.f32.mrf.mxu0
  %v2459 = vpop.f32.mrf.mxu0
  %2460 = vdwg.mxu0
  %2461 = vmatprep.subr.bf16.mxu0 %v2387
  %2462 = vmatpush1.bf16.msra.mxu0 %v2386
  %2463 = vmatprep.subr.bf16.mxu0 %v2383
  %2464 = vmatpush1.bf16.msra.mxu0 %v2382
  %2465 = vmatprep.subr.bf16.mxu0 %v2379
  %2466 = vmatpush1.bf16.msra.mxu0 %v2378
  %2467 = vmatprep.subr.bf16.mxu0 %v2375
  %2468 = vmatpush1.bf16.msra.mxu0 %v2374
  %2469 = vmatprep.subr.bf16.mxu0 %v2371
  %2470 = vmatpush1.bf16.msra.mxu0 %v2370
  %2471 = vmatprep.subr.bf16.mxu0 %v2367
  %2472 = vmatpush1.bf16.msra.mxu0 %v2366
  %2473 = vmatprep.subr.bf16.mxu0 %v2363
  %2474 = vmatpush1.bf16.msra.mxu0 %v2362
  %2475 = vmatprep.subr.bf16.mxu0 %v2359
  %2476 = vmatpush1.bf16.msra.mxu0 %v2358
  %2477 = vmatprep.subr.bf16.mxu0 0
  %2478 = vmatpush2.bf16.msra.mxu0 0
  %2479 = vmatprep.subr.bf16.mxu0 0
  %2480 = vmatpush2.bf16.msra.mxu0 0
  %2481 = vmatprep.subr.bf16.mxu0 0
  %2482 = vmatpush2.bf16.msra.mxu0 0
  %2483 = vmatprep.subr.bf16.mxu0 0
  %2484 = vmatpush2.bf16.msra.mxu0 0
  %2485 = vmatprep.subr.bf16.mxu0 0
  %2486 = vmatpush2.bf16.msra.mxu0 0
  %2487 = vmatprep.subr.bf16.mxu0 0
  %2488 = vmatpush2.bf16.msra.mxu0 0
  %2489 = vmatprep.subr.bf16.mxu0 0
  %2490 = vmatpush2.bf16.msra.mxu0 0
  %2491 = vmatprep.subr.bf16.mxu0 0
  %2492 = vmatpush2.bf16.msra.mxu0 0
  %2493 = vmatprep.mubr.bf16.mxu0 0
  %2494 = vmatmul.mubr.bf16.gmra.mxu0 %v2227
  %v2495 = vpop.f32.mrf.mxu0
  %v2496 = vadd.f32 0.0, %v2495
  %v2497 = vpop.f32.mrf.mxu0
  %v2498 = vadd.f32 0.0, %v2497
  %v2499 = vpop.f32.mrf.mxu0
  %v2500 = vpop.f32.mrf.mxu0
  %2501 = vdwg.mxu0
  %v2502 = vadd.f32 %v2223, %v2455
  %v2503 = vadd.f32 %v2224, %v2457
  %v2504 = vadd.f32 %v2225, %v2496
  %v2505 = vadd.f32 %v2226, %v2498
  %v2506 = vxor.u32 %v2502, 2147483648
  %v2507 = vmul.f32 %v2506, 1.442695
  %v2508 = vpow.pop %v2507
  %v2509 = vadd.f32 %v2508, 1.0
  %v2510 = vrcp.pop %v2509
  %v2511 = vmul.f32 1.0, %v2510
  %v2512 = vxor.u32 %v2503, 2147483648
  %v2513 = vmul.f32 %v2512, 1.442695
  %v2514 = vpow.pop %v2513
  %v2515 = vadd.f32 %v2514, 1.0
  %v2516 = vrcp.pop %v2515
  %v2517 = vmul.f32 1.0, %v2516
  %v2518 = vtanh.pop %v2504
  %v2519 = vxor.u32 %v2505, 2147483648
  %v2520 = vmul.f32 %v2519, 1.442695
  %v2521 = vpow.pop %v2520
  %v2522 = vadd.f32 %v2521, 1.0
  %v2523 = vrcp.pop %v2522
  %v2524 = vmul.f32 1.0, %v2523
  %v2525 = vmul.f32 %v2517, %v2086
  %v2526 = vmul.f32 %v2511, %v2518
  %v2527 = vadd.f32 %v2525, %v2526
  %v2528 = vtanh.pop %v2527
  %v2529 = vmul.f32 %v2524, %v2528
  %v2531 = vcombine.high %v2529, %v2529
  %v2533 = vunpack.c.l.s4 1966171168
  %v2534 = vunpack.c.0.s8 %v2533
  %v2535 = vlaneseq
  %v2536 = vshrl.u32 %v2535, 7
  %v2537 = vsub.s32 %v2534, %v2536
  %v2538 = vrot.slane %v2529, %v2537
  %v2540 = vunpack.c.l.s4 1966171168
  %v2541 = vunpack.c.0.s8 %v2540
  %v2542 = vlaneseq
  %v2543 = vshrl.u32 %v2542, 7
  %v2544 = vsub.s32 %v2541, %v2543
  %v2545 = vrot.slane %v2531, %v2544
  %v2546 = vcombine.high %v2538, %v2538
  %v2547 = vcombine.high %v2545, %v2545
  %v2549 = vunpack.c.l.s4 1966171168
  %v2550 = vunpack.c.0.s8 %v2549
  %v2551 = vlaneseq
  %v2552 = vshrl.u32 %v2551, 7
  %v2553 = vsub.s32 %v2550, %v2552
  %v2554 = vrot.slane %v2538, %v2553
  %v2556 = vunpack.c.l.s4 1966171168
  %v2557 = vunpack.c.0.s8 %v2556
  %v2558 = vlaneseq
  %v2559 = vshrl.u32 %v2558, 7
  %v2560 = vsub.s32 %v2557, %v2559
  %v2561 = vrot.slane %v2545, %v2560
  %v2563 = vunpack.c.l.s4 1966171168
  %v2564 = vunpack.c.0.s8 %v2563
  %v2565 = vlaneseq
  %v2566 = vshrl.u32 %v2565, 7
  %v2567 = vsub.s32 %v2564, %v2566
  %v2568 = vrot.slane %v2546, %v2567
  %v2570 = vunpack.c.l.s4 1966171168
  %v2571 = vunpack.c.0.s8 %v2570
  %v2572 = vlaneseq
  %v2573 = vshrl.u32 %v2572, 7
  %v2574 = vsub.s32 %v2571, %v2573
  %v2575 = vrot.slane %v2547, %v2574
  %v2576 = vcombine.high %v2554, %v2554
  %v2577 = vcombine.high %v2561, %v2561
  %v2578 = vcombine.high %v2568, %v2568
  %v2579 = vcombine.high %v2575, %v2575
  %v2588 = vpack.c.bf16 %v2554, %v2554
  %v2589 = vpack.c.bf16 %v2568, %v2568
  %v2590 = vpack.c.bf16 %v2576, %v2576
  %v2591 = vpack.c.bf16 %v2578, %v2578
  %v2592 = vpack.c.bf16 %v2561, %v2561
  %v2593 = vpack.c.bf16 %v2575, %v2575
  %v2594 = vpack.c.bf16 %v2577, %v2577
  %v2595 = vpack.c.bf16 %v2579, %v2579
  %v2604 = vunpack.c.l.b16 %v2588
  %v2605 = vunpack.c.l.b16 %v2589
  %v2606 = vunpack.c.l.b16 %v2590
  %v2607 = vunpack.c.l.b16 %v2591
  %v2608 = vunpack.c.l.b16 %v2592
  %v2609 = vunpack.c.l.b16 %v2593
  %v2610 = vunpack.c.l.b16 %v2594
  %v2611 = vunpack.c.l.b16 %v2595
  %v2612 = vpack.c.b16 %v2604, %v2604
  %v2613 = vpack.c.b16 %v2605, %v2605
  %v2614 = vpack.c.b16 %v2606, %v2606
  %v2615 = vpack.c.b16 %v2607, %v2607
  %v2616 = vpack.c.b16 %v2608, %v2608
  %v2617 = vpack.c.b16 %v2609, %v2609
  %v2618 = vpack.c.b16 %v2610, %v2610
  %v2619 = vpack.c.b16 %v2611, %v2611
  %v2621 = vshll.u32 %v2612, 16
  %v2623 = vrot.slane %v2621, 6
  %v2625 = vshll.u32 %v2613, 16
  %v2627 = vrot.slane %v2625, 6
  %v2629 = vshll.u32 %v2614, 16
  %v2631 = vrot.slane %v2629, 6
  %v2633 = vshll.u32 %v2615, 16
  %v2635 = vrot.slane %v2633, 6
  %v2637 = vshll.u32 %v2616, 16
  %v2639 = vrot.slane %v2637, 6
  %v2641 = vshll.u32 %v2617, 16
  %v2643 = vrot.slane %v2641, 6
  %v2645 = vshll.u32 %v2618, 16
  %v2647 = vrot.slane %v2645, 6
  %v2649 = vshll.u32 %v2619, 16
  %v2651 = vrot.slane %v2649, 6
  %vm2660 = vsmask.f32 7946
  %vm2661 = vmand %vm2195, %vm2660
  %v2662 = vld [vmem:[%s4] sm:$0x4]
  %v2663 = vsel %vm2661, %v2623, %v2662
  %2664 = vst [vmem:[%s4] sm:$0x4] %v2663
  %v2665 = vld [vmem:[%s4 + $0x4] sm:$0x4]
  %v2666 = vsel %vm2661, %v2627, %v2665
  %2667 = vst [vmem:[%s4 + $0x4] sm:$0x4] %v2666
  %v2668 = vld [vmem:[%s4 + $0x8] sm:$0x4]
  %v2669 = vsel %vm2661, %v2631, %v2668
  %2670 = vst [vmem:[%s4 + $0x8] sm:$0x4] %v2669
  %v2671 = vld [vmem:[%s4 + $0xc] sm:$0x4]
  %v2672 = vsel %vm2661, %v2635, %v2671
  %2673 = vst [vmem:[%s4 + $0xc] sm:$0x4] %v2672
  %v2674 = vld [vmem:[%s4 + $0x10] sm:$0x4]
  %v2675 = vsel %vm2661, %v2639, %v2674
  %2676 = vst [vmem:[%s4 + $0x10] sm:$0x4] %v2675
  %v2677 = vld [vmem:[%s4 + $0x14] sm:$0x4]
  %v2678 = vsel %vm2661, %v2643, %v2677
  %2679 = vst [vmem:[%s4 + $0x14] sm:$0x4] %v2678
  %v2680 = vld [vmem:[%s4 + $0x18] sm:$0x4]
  %v2681 = vsel %vm2661, %v2647, %v2680
  %2682 = vst [vmem:[%s4 + $0x18] sm:$0x4] %v2681
  %v2683 = vld [vmem:[%s4 + $0x1c] sm:$0x4]
  %v2684 = vsel %vm2661, %v2651, %v2683
  %2685 = vst [vmem:[%s4 + $0x1c] sm:$0x4] %v2684
  %s2686 = scalar_lea.vmem %s0, 192
  %v2687 = vld [vmem:[%s2686] sm:$0xff]
  %v2688 = vld [vmem:[%s2686 + $0x8] sm:$0xff]
  %v2689 = vld [vmem:[%s2686 + $0x10] sm:$0xff]
  %v2690 = vld [vmem:[%s2686 + $0x18] sm:$0xff]
  %v2691 = vpack.c.bf16 %v2529, %v2529
  %v2692 = vld [vmem:[%s3] sm:$0xff]
  %v2693 = vld [vmem:[%s3 + $0x8] sm:$0xff]
  %v2694 = vld [vmem:[%s3 + $0x10] sm:$0xff]
  %v2695 = vld [vmem:[%s3 + $0x18] sm:$0xff]
  %v2696 = vld [vmem:[%s3 + $0x20] sm:$0xff]
  %v2697 = vld [vmem:[%s3 + $0x28] sm:$0xff]
  %v2698 = vld [vmem:[%s3 + $0x30] sm:$0xff]
  %v2699 = vld [vmem:[%s3 + $0x38] sm:$0xff]
  %v2700 = vld [vmem:[%s3 + $0x40] sm:$0xff]
  %v2701 = vld [vmem:[%s3 + $0x48] sm:$0xff]
  %v2702 = vld [vmem:[%s3 + $0x50] sm:$0xff]
  %v2703 = vld [vmem:[%s3 + $0x58] sm:$0xff]
  %v2704 = vld [vmem:[%s3 + $0x60] sm:$0xff]
  %v2705 = vld [vmem:[%s3 + $0x68] sm:$0xff]
  %v2706 = vld [vmem:[%s3 + $0x70] sm:$0xff]
  %v2707 = vld [vmem:[%s3 + $0x78] sm:$0xff]
  %v2708 = vld [vmem:[%s3 + $0x80] sm:$0xff]
  %v2709 = vld [vmem:[%s3 + $0x88] sm:$0xff]
  %v2710 = vld [vmem:[%s3 + $0x90] sm:$0xff]
  %v2711 = vld [vmem:[%s3 + $0x98] sm:$0xff]
  %v2712 = vld [vmem:[%s3 + $0xa0] sm:$0xff]
  %v2713 = vld [vmem:[%s3 + $0xa8] sm:$0xff]
  %v2714 = vld [vmem:[%s3 + $0xb0] sm:$0xff]
  %v2715 = vld [vmem:[%s3 + $0xb8] sm:$0xff]
  %v2716 = vld [vmem:[%s3 + $0xc0] sm:$0xff]
  %v2717 = vld [vmem:[%s3 + $0xc8] sm:$0xff]
  %v2718 = vld [vmem:[%s3 + $0xd0] sm:$0xff]
  %v2719 = vld [vmem:[%s3 + $0xd8] sm:$0xff]
  %v2720 = vld [vmem:[%s3 + $0xe0] sm:$0xff]
  %v2721 = vld [vmem:[%s3 + $0xe8] sm:$0xff]
  %v2722 = vld [vmem:[%s3 + $0xf0] sm:$0xff]
  %v2723 = vld [vmem:[%s3 + $0xf8] sm:$0xff]
  %v2756 = vunpack.c.l.b16 %v2692
  %v2757 = vunpack.c.h.b16 %v2692
  %v2758 = vunpack.c.l.b16 %v2693
  %v2759 = vunpack.c.h.b16 %v2693
  %v2760 = vunpack.c.l.b16 %v2694
  %v2761 = vunpack.c.h.b16 %v2694
  %v2762 = vunpack.c.l.b16 %v2695
  %v2763 = vunpack.c.h.b16 %v2695
  %v2764 = vunpack.c.l.b16 %v2696
  %v2765 = vunpack.c.h.b16 %v2696
  %v2766 = vunpack.c.l.b16 %v2697
  %v2767 = vunpack.c.h.b16 %v2697
  %v2768 = vunpack.c.l.b16 %v2698
  %v2769 = vunpack.c.h.b16 %v2698
  %v2770 = vunpack.c.l.b16 %v2699
  %v2771 = vunpack.c.h.b16 %v2699
  %v2772 = vunpack.c.l.b16 %v2700
  %v2773 = vunpack.c.h.b16 %v2700
  %v2774 = vunpack.c.l.b16 %v2701
  %v2775 = vunpack.c.h.b16 %v2701
  %v2776 = vunpack.c.l.b16 %v2702
  %v2777 = vunpack.c.h.b16 %v2702
  %v2778 = vunpack.c.l.b16 %v2703
  %v2779 = vunpack.c.h.b16 %v2703
  %v2780 = vunpack.c.l.b16 %v2704
  %v2781 = vunpack.c.h.b16 %v2704
  %v2782 = vunpack.c.l.b16 %v2705
  %v2783 = vunpack.c.h.b16 %v2705
  %v2784 = vunpack.c.l.b16 %v2706
  %v2785 = vunpack.c.h.b16 %v2706
  %v2786 = vunpack.c.l.b16 %v2707
  %v2787 = vunpack.c.h.b16 %v2707
  %v2788 = vunpack.c.l.b16 %v2708
  %v2789 = vunpack.c.h.b16 %v2708
  %v2790 = vunpack.c.l.b16 %v2709
  %v2791 = vunpack.c.h.b16 %v2709
  %v2792 = vunpack.c.l.b16 %v2710
  %v2793 = vunpack.c.h.b16 %v2710
  %v2794 = vunpack.c.l.b16 %v2711
  %v2795 = vunpack.c.h.b16 %v2711
  %v2796 = vunpack.c.l.b16 %v2712
  %v2797 = vunpack.c.h.b16 %v2712
  %v2798 = vunpack.c.l.b16 %v2713
  %v2799 = vunpack.c.h.b16 %v2713
  %v2800 = vunpack.c.l.b16 %v2714
  %v2801 = vunpack.c.h.b16 %v2714
  %v2802 = vunpack.c.l.b16 %v2715
  %v2803 = vunpack.c.h.b16 %v2715
  %v2804 = vunpack.c.l.b16 %v2716
  %v2805 = vunpack.c.h.b16 %v2716
  %v2806 = vunpack.c.l.b16 %v2717
  %v2807 = vunpack.c.h.b16 %v2717
  %v2808 = vunpack.c.l.b16 %v2718
  %v2809 = vunpack.c.h.b16 %v2718
  %v2810 = vunpack.c.l.b16 %v2719
  %v2811 = vunpack.c.h.b16 %v2719
  %v2812 = vunpack.c.l.b16 %v2720
  %v2813 = vunpack.c.h.b16 %v2720
  %v2814 = vunpack.c.l.b16 %v2721
  %v2815 = vunpack.c.h.b16 %v2721
  %v2816 = vunpack.c.l.b16 %v2722
  %v2817 = vunpack.c.h.b16 %v2722
  %v2818 = vunpack.c.l.b16 %v2723
  %v2819 = vunpack.c.h.b16 %v2723
  %v2820 = vpack.c.b16 %v2760, %v2756
  %v2821 = vpack.c.b16 %v2761, %v2757
  %v2822 = vpack.c.b16 %v2762, %v2758
  %v2823 = vpack.c.b16 %v2763, %v2759
  %v2824 = vpack.c.b16 %v2768, %v2764
  %v2825 = vpack.c.b16 %v2769, %v2765
  %v2826 = vpack.c.b16 %v2770, %v2766
  %v2827 = vpack.c.b16 %v2771, %v2767
  %v2828 = vpack.c.b16 %v2776, %v2772
  %v2829 = vpack.c.b16 %v2777, %v2773
  %v2830 = vpack.c.b16 %v2778, %v2774
  %v2831 = vpack.c.b16 %v2779, %v2775
  %v2832 = vpack.c.b16 %v2784, %v2780
  %v2833 = vpack.c.b16 %v2785, %v2781
  %v2834 = vpack.c.b16 %v2786, %v2782
  %v2835 = vpack.c.b16 %v2787, %v2783
  %v2836 = vpack.c.b16 %v2792, %v2788
  %v2837 = vpack.c.b16 %v2793, %v2789
  %v2838 = vpack.c.b16 %v2794, %v2790
  %v2839 = vpack.c.b16 %v2795, %v2791
  %v2840 = vpack.c.b16 %v2800, %v2796
  %v2841 = vpack.c.b16 %v2801, %v2797
  %v2842 = vpack.c.b16 %v2802, %v2798
  %v2843 = vpack.c.b16 %v2803, %v2799
  %v2844 = vpack.c.b16 %v2808, %v2804
  %v2845 = vpack.c.b16 %v2809, %v2805
  %v2846 = vpack.c.b16 %v2810, %v2806
  %v2847 = vpack.c.b16 %v2811, %v2807
  %v2848 = vpack.c.b16 %v2816, %v2812
  %v2849 = vpack.c.b16 %v2817, %v2813
  %v2850 = vpack.c.b16 %v2818, %v2814
  %v2851 = vpack.c.b16 %v2819, %v2815
  %2884 = vmatprep.subr.bf16.mxu0 %v2849
  %2885 = vmatpush1.bf16.msra.mxu0 %v2848
  %2886 = vmatprep.subr.bf16.mxu0 %v2845
  %2887 = vmatpush1.bf16.msra.mxu0 %v2844
  %2888 = vmatprep.subr.bf16.mxu0 %v2841
  %2889 = vmatpush1.bf16.msra.mxu0 %v2840
  %2890 = vmatprep.subr.bf16.mxu0 %v2837
  %2891 = vmatpush1.bf16.msra.mxu0 %v2836
  %2892 = vmatprep.subr.bf16.mxu0 %v2833
  %2893 = vmatpush1.bf16.msra.mxu0 %v2832
  %2894 = vmatprep.subr.bf16.mxu0 %v2829
  %2895 = vmatpush1.bf16.msra.mxu0 %v2828
  %2896 = vmatprep.subr.bf16.mxu0 %v2825
  %2897 = vmatpush1.bf16.msra.mxu0 %v2824
  %2898 = vmatprep.subr.bf16.mxu0 %v2821
  %2899 = vmatpush1.bf16.msra.mxu0 %v2820
  %2900 = vmatprep.subr.bf16.mxu0 0
  %2901 = vmatpush2.bf16.msra.mxu0 0
  %2902 = vmatprep.subr.bf16.mxu0 0
  %2903 = vmatpush2.bf16.msra.mxu0 0
  %2904 = vmatprep.subr.bf16.mxu0 0
  %2905 = vmatpush2.bf16.msra.mxu0 0
  %2906 = vmatprep.subr.bf16.mxu0 0
  %2907 = vmatpush2.bf16.msra.mxu0 0
  %2908 = vmatprep.subr.bf16.mxu0 0
  %2909 = vmatpush2.bf16.msra.mxu0 0
  %2910 = vmatprep.subr.bf16.mxu0 0
  %2911 = vmatpush2.bf16.msra.mxu0 0
  %2912 = vmatprep.subr.bf16.mxu0 0
  %2913 = vmatpush2.bf16.msra.mxu0 0
  %2914 = vmatprep.subr.bf16.mxu0 0
  %2915 = vmatpush2.bf16.msra.mxu0 0
  %2916 = vmatprep.mubr.bf16.mxu0 0
  %2917 = vmatmul.mubr.bf16.gmra.mxu0 %v2691
  %v2918 = vpop.f32.mrf.mxu0
  %v2919 = vadd.f32 0.0, %v2918
  %v2920 = vpop.f32.mrf.mxu0
  %v2921 = vadd.f32 0.0, %v2920
  %v2922 = vpop.f32.mrf.mxu0
  %v2923 = vpop.f32.mrf.mxu0
  %2924 = vdwg.mxu0
  %2925 = vmatprep.subr.bf16.mxu0 %v2851
  %2926 = vmatpush1.bf16.msra.mxu0 %v2850
  %2927 = vmatprep.subr.bf16.mxu0 %v2847
  %2928 = vmatpush1.bf16.msra.mxu0 %v2846
  %2929 = vmatprep.subr.bf16.mxu0 %v2843
  %2930 = vmatpush1.bf16.msra.mxu0 %v2842
  %2931 = vmatprep.subr.bf16.mxu0 %v2839
  %2932 = vmatpush1.bf16.msra.mxu0 %v2838
  %2933 = vmatprep.subr.bf16.mxu0 %v2835
  %2934 = vmatpush1.bf16.msra.mxu0 %v2834
  %2935 = vmatprep.subr.bf16.mxu0 %v2831
  %2936 = vmatpush1.bf16.msra.mxu0 %v2830
  %2937 = vmatprep.subr.bf16.mxu0 %v2827
  %2938 = vmatpush1.bf16.msra.mxu0 %v2826
  %2939 = vmatprep.subr.bf16.mxu0 %v2823
  %2940 = vmatpush1.bf16.msra.mxu0 %v2822
  %2941 = vmatprep.subr.bf16.mxu0 0
  %2942 = vmatpush2.bf16.msra.mxu0 0
  %2943 = vmatprep.subr.bf16.mxu0 0
  %2944 = vmatpush2.bf16.msra.mxu0 0
  %2945 = vmatprep.subr.bf16.mxu0 0
  %2946 = vmatpush2.bf16.msra.mxu0 0
  %2947 = vmatprep.subr.bf16.mxu0 0
  %2948 = vmatpush2.bf16.msra.mxu0 0
  %2949 = vmatprep.subr.bf16.mxu0 0
  %2950 = vmatpush2.bf16.msra.mxu0 0
  %2951 = vmatprep.subr.bf16.mxu0 0
  %2952 = vmatpush2.bf16.msra.mxu0 0
  %2953 = vmatprep.subr.bf16.mxu0 0
  %2954 = vmatpush2.bf16.msra.mxu0 0
  %2955 = vmatprep.subr.bf16.mxu0 0
  %2956 = vmatpush2.bf16.msra.mxu0 0
  %2957 = vmatprep.mubr.bf16.mxu0 0
  %2958 = vmatmul.mubr.bf16.gmra.mxu0 %v2691
  %v2959 = vpop.f32.mrf.mxu0
  %v2960 = vadd.f32 0.0, %v2959
  %v2961 = vpop.f32.mrf.mxu0
  %v2962 = vadd.f32 0.0, %v2961
  %v2963 = vpop.f32.mrf.mxu0
  %v2964 = vpop.f32.mrf.mxu0
  %2965 = vdwg.mxu0
  %v2966 = vadd.f32 %v2687, %v2919
  %v2967 = vadd.f32 %v2688, %v2921
  %v2968 = vadd.f32 %v2689, %v2960
  %v2969 = vadd.f32 %v2690, %v2962
  %v2970 = vxor.u32 %v2966, 2147483648
  %v2971 = vmul.f32 %v2970, 1.442695
  %v2972 = vpow.pop %v2971
  %v2973 = vadd.f32 %v2972, 1.0
  %v2974 = vrcp.pop %v2973
  %v2975 = vmul.f32 1.0, %v2974
  %v2976 = vxor.u32 %v2967, 2147483648
  %v2977 = vmul.f32 %v2976, 1.442695
  %v2978 = vpow.pop %v2977
  %v2979 = vadd.f32 %v2978, 1.0
  %v2980 = vrcp.pop %v2979
  %v2981 = vmul.f32 1.0, %v2980
  %v2982 = vtanh.pop %v2968
  %v2983 = vxor.u32 %v2969, 2147483648
  %v2984 = vmul.f32 %v2983, 1.442695
  %v2985 = vpow.pop %v2984
  %v2986 = vadd.f32 %v2985, 1.0
  %v2987 = vrcp.pop %v2986
  %v2988 = vmul.f32 1.0, %v2987
  %v2989 = vmul.f32 %v2981, %v2527
  %v2990 = vmul.f32 %v2975, %v2982
  %v2991 = vadd.f32 %v2989, %v2990
  %v2992 = vtanh.pop %v2991
  %v2993 = vmul.f32 %v2988, %v2992
  %v2995 = vcombine.high %v2993, %v2993
  %v2997 = vunpack.c.l.s4 1966171168
  %v2998 = vunpack.c.0.s8 %v2997
  %v2999 = vlaneseq
  %v3000 = vshrl.u32 %v2999, 7
  %v3001 = vsub.s32 %v2998, %v3000
  %v3002 = vrot.slane %v2993, %v3001
  %v3004 = vunpack.c.l.s4 1966171168
  %v3005 = vunpack.c.0.s8 %v3004
  %v3006 = vlaneseq
  %v3007 = vshrl.u32 %v3006, 7
  %v3008 = vsub.s32 %v3005, %v3007
  %v3009 = vrot.slane %v2995, %v3008
  %v3010 = vcombine.high %v3002, %v3002
  %v3011 = vcombine.high %v3009, %v3009
  %v3013 = vunpack.c.l.s4 1966171168
  %v3014 = vunpack.c.0.s8 %v3013
  %v3015 = vlaneseq
  %v3016 = vshrl.u32 %v3015, 7
  %v3017 = vsub.s32 %v3014, %v3016
  %v3018 = vrot.slane %v3002, %v3017
  %v3020 = vunpack.c.l.s4 1966171168
  %v3021 = vunpack.c.0.s8 %v3020
  %v3022 = vlaneseq
  %v3023 = vshrl.u32 %v3022, 7
  %v3024 = vsub.s32 %v3021, %v3023
  %v3025 = vrot.slane %v3009, %v3024
  %v3027 = vunpack.c.l.s4 1966171168
  %v3028 = vunpack.c.0.s8 %v3027
  %v3029 = vlaneseq
  %v3030 = vshrl.u32 %v3029, 7
  %v3031 = vsub.s32 %v3028, %v3030
  %v3032 = vrot.slane %v3010, %v3031
  %v3034 = vunpack.c.l.s4 1966171168
  %v3035 = vunpack.c.0.s8 %v3034
  %v3036 = vlaneseq
  %v3037 = vshrl.u32 %v3036, 7
  %v3038 = vsub.s32 %v3035, %v3037
  %v3039 = vrot.slane %v3011, %v3038
  %v3040 = vcombine.high %v3018, %v3018
  %v3041 = vcombine.high %v3025, %v3025
  %v3042 = vcombine.high %v3032, %v3032
  %v3043 = vcombine.high %v3039, %v3039
  %v3052 = vpack.c.bf16 %v3018, %v3018
  %v3053 = vpack.c.bf16 %v3032, %v3032
  %v3054 = vpack.c.bf16 %v3040, %v3040
  %v3055 = vpack.c.bf16 %v3042, %v3042
  %v3056 = vpack.c.bf16 %v3025, %v3025
  %v3057 = vpack.c.bf16 %v3039, %v3039
  %v3058 = vpack.c.bf16 %v3041, %v3041
  %v3059 = vpack.c.bf16 %v3043, %v3043
  %v3068 = vunpack.c.l.b16 %v3052
  %v3069 = vunpack.c.l.b16 %v3053
  %v3070 = vunpack.c.l.b16 %v3054
  %v3071 = vunpack.c.l.b16 %v3055
  %v3072 = vunpack.c.l.b16 %v3056
  %v3073 = vunpack.c.l.b16 %v3057
  %v3074 = vunpack.c.l.b16 %v3058
  %v3075 = vunpack.c.l.b16 %v3059
  %v3076 = vpack.c.b16 %v3068, %v3068
  %v3077 = vpack.c.b16 %v3069, %v3069
  %v3078 = vpack.c.b16 %v3070, %v3070
  %v3079 = vpack.c.b16 %v3071, %v3071
  %v3080 = vpack.c.b16 %v3072, %v3072
  %v3081 = vpack.c.b16 %v3073, %v3073
  %v3082 = vpack.c.b16 %v3074, %v3074
  %v3083 = vpack.c.b16 %v3075, %v3075
  %v3084 = vrot.slane %v3076, 5
  %v3085 = vrot.slane %v3077, 5
  %v3086 = vrot.slane %v3078, 5
  %v3087 = vrot.slane %v3079, 5
  %v3088 = vrot.slane %v3080, 5
  %v3089 = vrot.slane %v3081, 5
  %v3090 = vrot.slane %v3082, 5
  %v3091 = vrot.slane %v3083, 5
  %vm3100 = vcmask 1043459
  %vm3101 = vsmask.f32 3328
  %vm3102 = vmand %vm3100, %vm3101
  %v3103 = vld [vmem:[%s4] sm:$0x8]
  %v3104 = vsel %vm3102, %v3084, %v3103
  %3105 = vst [vmem:[%s4] sm:$0x8] %v3104
  %v3106 = vld [vmem:[%s4 + $0x4] sm:$0x8]
  %v3107 = vsel %vm3102, %v3085, %v3106
  %3108 = vst [vmem:[%s4 + $0x4] sm:$0x8] %v3107
  %v3109 = vld [vmem:[%s4 + $0x8] sm:$0x8]
  %v3110 = vsel %vm3102, %v3086, %v3109
  %3111 = vst [vmem:[%s4 + $0x8] sm:$0x8] %v3110
  %v3112 = vld [vmem:[%s4 + $0xc] sm:$0x8]
  %v3113 = vsel %vm3102, %v3087, %v3112
  %3114 = vst [vmem:[%s4 + $0xc] sm:$0x8] %v3113
  %v3115 = vld [vmem:[%s4 + $0x10] sm:$0x8]
  %v3116 = vsel %vm3102, %v3088, %v3115
  %3117 = vst [vmem:[%s4 + $0x10] sm:$0x8] %v3116
  %v3118 = vld [vmem:[%s4 + $0x14] sm:$0x8]
  %v3119 = vsel %vm3102, %v3089, %v3118
  %3120 = vst [vmem:[%s4 + $0x14] sm:$0x8] %v3119
  %v3121 = vld [vmem:[%s4 + $0x18] sm:$0x8]
  %v3122 = vsel %vm3102, %v3090, %v3121
  %3123 = vst [vmem:[%s4 + $0x18] sm:$0x8] %v3122
  %v3124 = vld [vmem:[%s4 + $0x1c] sm:$0x8]
  %v3125 = vsel %vm3102, %v3091, %v3124
  %3126 = vst [vmem:[%s4 + $0x1c] sm:$0x8] %v3125
  %s3127 = scalar_lea.vmem %s0, 224
  %v3128 = vld [vmem:[%s3127] sm:$0xff]
  %v3129 = vld [vmem:[%s3127 + $0x8] sm:$0xff]
  %v3130 = vld [vmem:[%s3127 + $0x10] sm:$0xff]
  %v3131 = vld [vmem:[%s3127 + $0x18] sm:$0xff]
  %v3132 = vpack.c.bf16 %v2993, %v2993
  %v3133 = vld [vmem:[%s3] sm:$0xff]
  %v3134 = vld [vmem:[%s3 + $0x8] sm:$0xff]
  %v3135 = vld [vmem:[%s3 + $0x10] sm:$0xff]
  %v3136 = vld [vmem:[%s3 + $0x18] sm:$0xff]
  %v3137 = vld [vmem:[%s3 + $0x20] sm:$0xff]
  %v3138 = vld [vmem:[%s3 + $0x28] sm:$0xff]
  %v3139 = vld [vmem:[%s3 + $0x30] sm:$0xff]
  %v3140 = vld [vmem:[%s3 + $0x38] sm:$0xff]
  %v3141 = vld [vmem:[%s3 + $0x40] sm:$0xff]
  %v3142 = vld [vmem:[%s3 + $0x48] sm:$0xff]
  %v3143 = vld [vmem:[%s3 + $0x50] sm:$0xff]
  %v3144 = vld [vmem:[%s3 + $0x58] sm:$0xff]
  %v3145 = vld [vmem:[%s3 + $0x60] sm:$0xff]
  %v3146 = vld [vmem:[%s3 + $0x68] sm:$0xff]
  %v3147 = vld [vmem:[%s3 + $0x70] sm:$0xff]
  %v3148 = vld [vmem:[%s3 + $0x78] sm:$0xff]
  %v3149 = vld [vmem:[%s3 + $0x80] sm:$0xff]
  %v3150 = vld [vmem:[%s3 + $0x88] sm:$0xff]
  %v3151 = vld [vmem:[%s3 + $0x90] sm:$0xff]
  %v3152 = vld [vmem:[%s3 + $0x98] sm:$0xff]
  %v3153 = vld [vmem:[%s3 + $0xa0] sm:$0xff]
  %v3154 = vld [vmem:[%s3 + $0xa8] sm:$0xff]
  %v3155 = vld [vmem:[%s3 + $0xb0] sm:$0xff]
  %v3156 = vld [vmem:[%s3 + $0xb8] sm:$0xff]
  %v3157 = vld [vmem:[%s3 + $0xc0] sm:$0xff]
  %v3158 = vld [vmem:[%s3 + $0xc8] sm:$0xff]
  %v3159 = vld [vmem:[%s3 + $0xd0] sm:$0xff]
  %v3160 = vld [vmem:[%s3 + $0xd8] sm:$0xff]
  %v3161 = vld [vmem:[%s3 + $0xe0] sm:$0xff]
  %v3162 = vld [vmem:[%s3 + $0xe8] sm:$0xff]
  %v3163 = vld [vmem:[%s3 + $0xf0] sm:$0xff]
  %v3164 = vld [vmem:[%s3 + $0xf8] sm:$0xff]
  %v3197 = vunpack.c.l.b16 %v3133
  %v3198 = vunpack.c.h.b16 %v3133
  %v3199 = vunpack.c.l.b16 %v3134
  %v3200 = vunpack.c.h.b16 %v3134
  %v3201 = vunpack.c.l.b16 %v3135
  %v3202 = vunpack.c.h.b16 %v3135
  %v3203 = vunpack.c.l.b16 %v3136
  %v3204 = vunpack.c.h.b16 %v3136
  %v3205 = vunpack.c.l.b16 %v3137
  %v3206 = vunpack.c.h.b16 %v3137
  %v3207 = vunpack.c.l.b16 %v3138
  %v3208 = vunpack.c.h.b16 %v3138
  %v3209 = vunpack.c.l.b16 %v3139
  %v3210 = vunpack.c.h.b16 %v3139
  %v3211 = vunpack.c.l.b16 %v3140
  %v3212 = vunpack.c.h.b16 %v3140
  %v3213 = vunpack.c.l.b16 %v3141
  %v3214 = vunpack.c.h.b16 %v3141
  %v3215 = vunpack.c.l.b16 %v3142
  %v3216 = vunpack.c.h.b16 %v3142
  %v3217 = vunpack.c.l.b16 %v3143
  %v3218 = vunpack.c.h.b16 %v3143
  %v3219 = vunpack.c.l.b16 %v3144
  %v3220 = vunpack.c.h.b16 %v3144
  %v3221 = vunpack.c.l.b16 %v3145
  %v3222 = vunpack.c.h.b16 %v3145
  %v3223 = vunpack.c.l.b16 %v3146
  %v3224 = vunpack.c.h.b16 %v3146
  %v3225 = vunpack.c.l.b16 %v3147
  %v3226 = vunpack.c.h.b16 %v3147
  %v3227 = vunpack.c.l.b16 %v3148
  %v3228 = vunpack.c.h.b16 %v3148
  %v3229 = vunpack.c.l.b16 %v3149
  %v3230 = vunpack.c.h.b16 %v3149
  %v3231 = vunpack.c.l.b16 %v3150
  %v3232 = vunpack.c.h.b16 %v3150
  %v3233 = vunpack.c.l.b16 %v3151
  %v3234 = vunpack.c.h.b16 %v3151
  %v3235 = vunpack.c.l.b16 %v3152
  %v3236 = vunpack.c.h.b16 %v3152
  %v3237 = vunpack.c.l.b16 %v3153
  %v3238 = vunpack.c.h.b16 %v3153
  %v3239 = vunpack.c.l.b16 %v3154
  %v3240 = vunpack.c.h.b16 %v3154
  %v3241 = vunpack.c.l.b16 %v3155
  %v3242 = vunpack.c.h.b16 %v3155
  %v3243 = vunpack.c.l.b16 %v3156
  %v3244 = vunpack.c.h.b16 %v3156
  %v3245 = vunpack.c.l.b16 %v3157
  %v3246 = vunpack.c.h.b16 %v3157
  %v3247 = vunpack.c.l.b16 %v3158
  %v3248 = vunpack.c.h.b16 %v3158
  %v3249 = vunpack.c.l.b16 %v3159
  %v3250 = vunpack.c.h.b16 %v3159
  %v3251 = vunpack.c.l.b16 %v3160
  %v3252 = vunpack.c.h.b16 %v3160
  %v3253 = vunpack.c.l.b16 %v3161
  %v3254 = vunpack.c.h.b16 %v3161
  %v3255 = vunpack.c.l.b16 %v3162
  %v3256 = vunpack.c.h.b16 %v3162
  %v3257 = vunpack.c.l.b16 %v3163
  %v3258 = vunpack.c.h.b16 %v3163
  %v3259 = vunpack.c.l.b16 %v3164
  %v3260 = vunpack.c.h.b16 %v3164
  %v3261 = vpack.c.b16 %v3201, %v3197
  %v3262 = vpack.c.b16 %v3202, %v3198
  %v3263 = vpack.c.b16 %v3203, %v3199
  %v3264 = vpack.c.b16 %v3204, %v3200
  %v3265 = vpack.c.b16 %v3209, %v3205
  %v3266 = vpack.c.b16 %v3210, %v3206
  %v3267 = vpack.c.b16 %v3211, %v3207
  %v3268 = vpack.c.b16 %v3212, %v3208
  %v3269 = vpack.c.b16 %v3217, %v3213
  %v3270 = vpack.c.b16 %v3218, %v3214
  %v3271 = vpack.c.b16 %v3219, %v3215
  %v3272 = vpack.c.b16 %v3220, %v3216
  %v3273 = vpack.c.b16 %v3225, %v3221
  %v3274 = vpack.c.b16 %v3226, %v3222
  %v3275 = vpack.c.b16 %v3227, %v3223
  %v3276 = vpack.c.b16 %v3228, %v3224
  %v3277 = vpack.c.b16 %v3233, %v3229
  %v3278 = vpack.c.b16 %v3234, %v3230
  %v3279 = vpack.c.b16 %v3235, %v3231
  %v3280 = vpack.c.b16 %v3236, %v3232
  %v3281 = vpack.c.b16 %v3241, %v3237
  %v3282 = vpack.c.b16 %v3242, %v3238
  %v3283 = vpack.c.b16 %v3243, %v3239
  %v3284 = vpack.c.b16 %v3244, %v3240
  %v3285 = vpack.c.b16 %v3249, %v3245
  %v3286 = vpack.c.b16 %v3250, %v3246
  %v3287 = vpack.c.b16 %v3251, %v3247
  %v3288 = vpack.c.b16 %v3252, %v3248
  %v3289 = vpack.c.b16 %v3257, %v3253
  %v3290 = vpack.c.b16 %v3258, %v3254
  %v3291 = vpack.c.b16 %v3259, %v3255
  %v3292 = vpack.c.b16 %v3260, %v3256
  %3325 = vmatprep.subr.bf16.mxu0 %v3290
  %3326 = vmatpush1.bf16.msra.mxu0 %v3289
  %3327 = vmatprep.subr.bf16.mxu0 %v3286
  %3328 = vmatpush1.bf16.msra.mxu0 %v3285
  %3329 = vmatprep.subr.bf16.mxu0 %v3282
  %3330 = vmatpush1.bf16.msra.mxu0 %v3281
  %3331 = vmatprep.subr.bf16.mxu0 %v3278
  %3332 = vmatpush1.bf16.msra.mxu0 %v3277
  %3333 = vmatprep.subr.bf16.mxu0 %v3274
  %3334 = vmatpush1.bf16.msra.mxu0 %v3273
  %3335 = vmatprep.subr.bf16.mxu0 %v3270
  %3336 = vmatpush1.bf16.msra.mxu0 %v3269
  %3337 = vmatprep.subr.bf16.mxu0 %v3266
  %3338 = vmatpush1.bf16.msra.mxu0 %v3265
  %3339 = vmatprep.subr.bf16.mxu0 %v3262
  %3340 = vmatpush1.bf16.msra.mxu0 %v3261
  %3341 = vmatprep.subr.bf16.mxu0 0
  %3342 = vmatpush2.bf16.msra.mxu0 0
  %3343 = vmatprep.subr.bf16.mxu0 0
  %3344 = vmatpush2.bf16.msra.mxu0 0
  %3345 = vmatprep.subr.bf16.mxu0 0
  %3346 = vmatpush2.bf16.msra.mxu0 0
  %3347 = vmatprep.subr.bf16.mxu0 0
  %3348 = vmatpush2.bf16.msra.mxu0 0
  %3349 = vmatprep.subr.bf16.mxu0 0
  %3350 = vmatpush2.bf16.msra.mxu0 0
  %3351 = vmatprep.subr.bf16.mxu0 0
  %3352 = vmatpush2.bf16.msra.mxu0 0
  %3353 = vmatprep.subr.bf16.mxu0 0
  %3354 = vmatpush2.bf16.msra.mxu0 0
  %3355 = vmatprep.subr.bf16.mxu0 0
  %3356 = vmatpush2.bf16.msra.mxu0 0
  %3357 = vmatprep.mubr.bf16.mxu0 0
  %3358 = vmatmul.mubr.bf16.gmra.mxu0 %v3132
  %v3359 = vpop.f32.mrf.mxu0
  %v3360 = vadd.f32 0.0, %v3359
  %v3361 = vpop.f32.mrf.mxu0
  %v3362 = vadd.f32 0.0, %v3361
  %v3363 = vpop.f32.mrf.mxu0
  %v3364 = vpop.f32.mrf.mxu0
  %3365 = vdwg.mxu0
  %3366 = vmatprep.subr.bf16.mxu0 %v3292
  %3367 = vmatpush1.bf16.msra.mxu0 %v3291
  %3368 = vmatprep.subr.bf16.mxu0 %v3288
  %3369 = vmatpush1.bf16.msra.mxu0 %v3287
  %3370 = vmatprep.subr.bf16.mxu0 %v3284
  %3371 = vmatpush1.bf16.msra.mxu0 %v3283
  %3372 = vmatprep.subr.bf16.mxu0 %v3280
  %3373 = vmatpush1.bf16.msra.mxu0 %v3279
  %3374 = vmatprep.subr.bf16.mxu0 %v3276
  %3375 = vmatpush1.bf16.msra.mxu0 %v3275
  %3376 = vmatprep.subr.bf16.mxu0 %v3272
  %3377 = vmatpush1.bf16.msra.mxu0 %v3271
  %3378 = vmatprep.subr.bf16.mxu0 %v3268
  %3379 = vmatpush1.bf16.msra.mxu0 %v3267
  %3380 = vmatprep.subr.bf16.mxu0 %v3264
  %3381 = vmatpush1.bf16.msra.mxu0 %v3263
  %3382 = vmatprep.subr.bf16.mxu0 0
  %3383 = vmatpush2.bf16.msra.mxu0 0
  %3384 = vmatprep.subr.bf16.mxu0 0
  %3385 = vmatpush2.bf16.msra.mxu0 0
  %3386 = vmatprep.subr.bf16.mxu0 0
  %3387 = vmatpush2.bf16.msra.mxu0 0
  %3388 = vmatprep.subr.bf16.mxu0 0
  %3389 = vmatpush2.bf16.msra.mxu0 0
  %3390 = vmatprep.subr.bf16.mxu0 0
  %3391 = vmatpush2.bf16.msra.mxu0 0
  %3392 = vmatprep.subr.bf16.mxu0 0
  %3393 = vmatpush2.bf16.msra.mxu0 0
  %3394 = vmatprep.subr.bf16.mxu0 0
  %3395 = vmatpush2.bf16.msra.mxu0 0
  %3396 = vmatprep.subr.bf16.mxu0 0
  %3397 = vmatpush2.bf16.msra.mxu0 0
  %3398 = vmatprep.mubr.bf16.mxu0 0
  %3399 = vmatmul.mubr.bf16.gmra.mxu0 %v3132
  %v3400 = vpop.f32.mrf.mxu0
  %v3401 = vadd.f32 0.0, %v3400
  %v3402 = vpop.f32.mrf.mxu0
  %v3403 = vadd.f32 0.0, %v3402
  %v3404 = vpop.f32.mrf.mxu0
  %v3405 = vpop.f32.mrf.mxu0
  %3406 = vdwg.mxu0
  %v3407 = vadd.f32 %v3128, %v3360
  %v3408 = vadd.f32 %v3129, %v3362
  %v3409 = vadd.f32 %v3130, %v3401
  %v3410 = vadd.f32 %v3131, %v3403
  %v3411 = vxor.u32 %v3407, 2147483648
  %v3412 = vmul.f32 %v3411, 1.442695
  %v3413 = vpow.pop %v3412
  %v3414 = vadd.f32 %v3413, 1.0
  %v3415 = vrcp.pop %v3414
  %v3416 = vmul.f32 1.0, %v3415
  %v3417 = vxor.u32 %v3408, 2147483648
  %v3418 = vmul.f32 %v3417, 1.442695
  %v3419 = vpow.pop %v3418
  %v3420 = vadd.f32 %v3419, 1.0
  %v3421 = vrcp.pop %v3420
  %v3422 = vmul.f32 1.0, %v3421
  %v3423 = vtanh.pop %v3409
  %v3424 = vxor.u32 %v3410, 2147483648
  %v3425 = vmul.f32 %v3424, 1.442695
  %v3426 = vpow.pop %v3425
  %v3427 = vadd.f32 %v3426, 1.0
  %v3428 = vrcp.pop %v3427
  %v3429 = vmul.f32 1.0, %v3428
  %v3430 = vmul.f32 %v3422, %v2991
  %v3431 = vmul.f32 %v3416, %v3423
  %v3432 = vadd.f32 %v3430, %v3431
  %v3433 = vtanh.pop %v3432
  %v3434 = vmul.f32 %v3429, %v3433
  %v3436 = vcombine.high %v3434, %v3434
  %v3438 = vunpack.c.l.s4 1966171168
  %v3439 = vunpack.c.0.s8 %v3438
  %v3440 = vlaneseq
  %v3441 = vshrl.u32 %v3440, 7
  %v3442 = vsub.s32 %v3439, %v3441
  %v3443 = vrot.slane %v3434, %v3442
  %v3445 = vunpack.c.l.s4 1966171168
  %v3446 = vunpack.c.0.s8 %v3445
  %v3447 = vlaneseq
  %v3448 = vshrl.u32 %v3447, 7
  %v3449 = vsub.s32 %v3446, %v3448
  %v3450 = vrot.slane %v3436, %v3449
  %v3451 = vcombine.high %v3443, %v3443
  %v3452 = vcombine.high %v3450, %v3450
  %v3454 = vunpack.c.l.s4 1966171168
  %v3455 = vunpack.c.0.s8 %v3454
  %v3456 = vlaneseq
  %v3457 = vshrl.u32 %v3456, 7
  %v3458 = vsub.s32 %v3455, %v3457
  %v3459 = vrot.slane %v3443, %v3458
  %v3461 = vunpack.c.l.s4 1966171168
  %v3462 = vunpack.c.0.s8 %v3461
  %v3463 = vlaneseq
  %v3464 = vshrl.u32 %v3463, 7
  %v3465 = vsub.s32 %v3462, %v3464
  %v3466 = vrot.slane %v3450, %v3465
  %v3468 = vunpack.c.l.s4 1966171168
  %v3469 = vunpack.c.0.s8 %v3468
  %v3470 = vlaneseq
  %v3471 = vshrl.u32 %v3470, 7
  %v3472 = vsub.s32 %v3469, %v3471
  %v3473 = vrot.slane %v3451, %v3472
  %v3475 = vunpack.c.l.s4 1966171168
  %v3476 = vunpack.c.0.s8 %v3475
  %v3477 = vlaneseq
  %v3478 = vshrl.u32 %v3477, 7
  %v3479 = vsub.s32 %v3476, %v3478
  %v3480 = vrot.slane %v3452, %v3479
  %v3481 = vcombine.high %v3459, %v3459
  %v3482 = vcombine.high %v3466, %v3466
  %v3483 = vcombine.high %v3473, %v3473
  %v3484 = vcombine.high %v3480, %v3480
  %v3493 = vpack.c.bf16 %v3459, %v3459
  %v3494 = vpack.c.bf16 %v3473, %v3473
  %v3495 = vpack.c.bf16 %v3481, %v3481
  %v3496 = vpack.c.bf16 %v3483, %v3483
  %v3497 = vpack.c.bf16 %v3466, %v3466
  %v3498 = vpack.c.bf16 %v3480, %v3480
  %v3499 = vpack.c.bf16 %v3482, %v3482
  %v3500 = vpack.c.bf16 %v3484, %v3484
  %v3509 = vunpack.c.l.b16 %v3493
  %v3510 = vunpack.c.l.b16 %v3494
  %v3511 = vunpack.c.l.b16 %v3495
  %v3512 = vunpack.c.l.b16 %v3496
  %v3513 = vunpack.c.l.b16 %v3497
  %v3514 = vunpack.c.l.b16 %v3498
  %v3515 = vunpack.c.l.b16 %v3499
  %v3516 = vunpack.c.l.b16 %v3500
  %v3517 = vpack.c.b16 %v3509, %v3509
  %v3518 = vpack.c.b16 %v3510, %v3510
  %v3519 = vpack.c.b16 %v3511, %v3511
  %v3520 = vpack.c.b16 %v3512, %v3512
  %v3521 = vpack.c.b16 %v3513, %v3513
  %v3522 = vpack.c.b16 %v3514, %v3514
  %v3523 = vpack.c.b16 %v3515, %v3515
  %v3524 = vpack.c.b16 %v3516, %v3516
  %v3526 = vshll.u32 %v3517, 16
  %v3528 = vrot.slane %v3526, 5
  %v3530 = vshll.u32 %v3518, 16
  %v3532 = vrot.slane %v3530, 5
  %v3534 = vshll.u32 %v3519, 16
  %v3536 = vrot.slane %v3534, 5
  %v3538 = vshll.u32 %v3520, 16
  %v3540 = vrot.slane %v3538, 5
  %v3542 = vshll.u32 %v3521, 16
  %v3544 = vrot.slane %v3542, 5
  %v3546 = vshll.u32 %v3522, 16
  %v3548 = vrot.slane %v3546, 5
  %v3550 = vshll.u32 %v3523, 16
  %v3552 = vrot.slane %v3550, 5
  %v3554 = vshll.u32 %v3524, 16
  %v3556 = vrot.slane %v3554, 5
  %vm3565 = vsmask.f32 7950
  %vm3566 = vmand %vm3100, %vm3565
  %v3567 = vld [vmem:[%s4] sm:$0x8]
  %v3568 = vsel %vm3566, %v3528, %v3567
  %3569 = vst [vmem:[%s4] sm:$0x8] %v3568
  %v3570 = vld [vmem:[%s4 + $0x4] sm:$0x8]
  %v3571 = vsel %vm3566, %v3532, %v3570
  %3572 = vst [vmem:[%s4 + $0x4] sm:$0x8] %v3571
  %v3573 = vld [vmem:[%s4 + $0x8] sm:$0x8]
  %v3574 = vsel %vm3566, %v3536, %v3573
  %3575 = vst [vmem:[%s4 + $0x8] sm:$0x8] %v3574
  %v3576 = vld [vmem:[%s4 + $0xc] sm:$0x8]
  %v3577 = vsel %vm3566, %v3540, %v3576
  %3578 = vst [vmem:[%s4 + $0xc] sm:$0x8] %v3577
  %v3579 = vld [vmem:[%s4 + $0x10] sm:$0x8]
  %v3580 = vsel %vm3566, %v3544, %v3579
  %3581 = vst [vmem:[%s4 + $0x10] sm:$0x8] %v3580
  %v3582 = vld [vmem:[%s4 + $0x14] sm:$0x8]
  %v3583 = vsel %vm3566, %v3548, %v3582
  %3584 = vst [vmem:[%s4 + $0x14] sm:$0x8] %v3583
  %v3585 = vld [vmem:[%s4 + $0x18] sm:$0x8]
  %v3586 = vsel %vm3566, %v3552, %v3585
  %3587 = vst [vmem:[%s4 + $0x18] sm:$0x8] %v3586
  %v3588 = vld [vmem:[%s4 + $0x1c] sm:$0x8]
  %v3589 = vsel %vm3566, %v3556, %v3588
  %3590 = vst [vmem:[%s4 + $0x1c] sm:$0x8] %v3589
  // Predicated region
  $region18: #{decoder_rnn_forward.4} parent=0 // pred_check
    _
  $region19: #{decoder_rnn_forward.4} parent=0 // pred_check_branch
    %3592 = sbr.rel (0) target = $region21
  $region20: #{decoder_rnn_forward.4} parent=0 // pred_region
    _
  $region21: #{decoder_rnn_forward.4} parent=0 // pred_fallthru
    _
  // Predicated region
  $region22: #{decoder_rnn_forward.4} parent=0 // pred_check
    _
  $region23: #{decoder_rnn_forward.4} parent=0 // pred_check_branch
    %3594 = sbr.rel (0) target = $region25
  $region24: #{decoder_rnn_forward.4} parent=0 // pred_region
    _
  $region25: #{decoder_rnn_forward.4} parent=0 // pred_fallthru
    _

</llo_original>
